<compile_context>
chip_gen: v7x
topology: tpu7x:2x2x1
jax: 0.10.0
libtpu: 0.0.40
codegen_flags: <defaults>
</compile_context>

<pallas_src>
import math
import functools

import numpy as np
import jax
import jax.numpy as jnp
from jax.experimental import pallas as pl
from jax.experimental.pallas import tpu as pltpu

EPS = 1e-5   # torch.nn.BatchNorm2d default eps
_SUB = 8     # f32 sublane multiple


def _round_up(v, m):
    return (v + m - 1) // m * m


# --------------------------------------------------------------------------- #
# Fused DenseBlock kernel (channel-major)                                      #
# --------------------------------------------------------------------------- #
def _dense_block_kernel(cfg, *refs):
    """Per layer: BN (batch stats) -> ReLU -> 3x3 'same' conv + bias.
    Feature rows on sublanes, flattened N*H*W spatial on lanes."""
    N, H, W, C0p, g, gp, L, cnt, use_bf16 = cfg
    HW = H * W
    inv_cnt = 1.0 / float(cnt)
    cdt = jnp.bfloat16 if use_bf16 else jnp.float32

    x_ref, masks_ref = refs[0], refs[1]
    p_refs = refs[2:2 + 4 * L]
    out_ref = refs[2 + 4 * L]
    feat_ref = refs[3 + 4 * L]          # (Cmp, cnt) f32 channel-major concat buffer

    # Zero once: guarantees the sublane pad rows are 0 (uninitialized VMEM could hold
    # NaNs; even 0-valued weight columns would then poison the MXU accumulation).
    feat_ref[...] = jnp.zeros(feat_ref.shape, feat_ref.dtype)
    feat_ref[0:C0p, :] = x_ref[...]     # raw input channels (pre-padded to C0p rows)

    for i in range(L):                  # static unroll over layers
        rows = C0p + i * gp             # stored rows feeding this layer (8-aligned)
        gamma = p_refs[4 * i + 0][...]  # (rows, 1) f32 (0 on pad rows)
        beta = p_refs[4 * i + 1][...]   # (rows, 1) f32 (0 on pad rows)
        w9_ref = p_refs[4 * i + 2]      # (9, g, rows) conv dtype (0 on pad rows)
        bias = p_refs[4 * i + 3][...]   # (g, 1) f32
        last = (i == L - 1)

        # ---- BatchNorm batch stats: one pass, lane-axis reductions ----
        feat = feat_ref[0:rows, :]                            # (rows, cnt) f32
        s1 = jnp.sum(feat, axis=1, keepdims=True)
        s2 = jnp.sum(feat * feat, axis=1, keepdims=True)
        mean = s1 * inv_cnt
        var = jnp.maximum(s2 * inv_cnt - mean * mean, 0.0)    # clamp (review concern)
        scale = gamma * jax.lax.rsqrt(var + EPS)              # (rows, 1)
        shift = beta - mean * scale

        # ---- affine + ReLU (lane-dense) ----
        a = jnp.maximum(feat * scale + shift, 0.0)            # (rows, cnt) f32

        # ---- 3x3 'same' conv: 9 accumulating (g, rows) x (rows, cnt) matmuls on
        #      lane-rolled activations; zero padding = per-tap lane mask applied to
        #      the (g, cnt) matmul result. ----
        acc = None
        for kh in range(3):
            for kw in range(3):
                t = kh * 3 + kw
                s = (kh - 1) * W + (kw - 1)                   # flattened spatial shift
                a_s = a if s == 0 else pltpu.roll(a, shift=(-s) % cnt, axis=1)
                yt = jax.lax.dot_general(
                    w9_ref[t], a_s.astype(cdt),
                    (((1,), (0,)), ((), ())),
                    preferred_element_type=jnp.float32)       # (g, cnt) f32
                if s != 0:
                    yt = yt * masks_ref[t:t + 1, :]           # boundary zero padding
                acc = yt if acc is None else acc + yt
        y = acc + bias                                        # (g, cnt) f32

        if not last:
            # Append growth channels: 8-aligned sublane rows, full 512-lane stores.
            feat_ref[rows:rows + g, :] = y
        else:
            # Block output (N, g, H*W): per-sample slices at 128-aligned lane offsets.
            for n in range(N):
                out_ref[n, :, :] = y[:, n * HW:(n + 1) * HW]


# --------------------------------------------------------------------------- #
# Wrapper: parameter repacking + pallas_call                                   #
# --------------------------------------------------------------------------- #
def _row_map(cin, C0, C0p, g, gp):
    """Map concat-order channel index -> sublane row in the padded feat layout."""
    rows = []
    for c in range(cin):
        if c < C0:
            rows.append(c)
        else:
            j, k = divmod(c - C0, g)
            rows.append(C0p + j * gp + k)
    return np.asarray(rows, dtype=np.int32)


def _make_layer_inputs(params, C0, C0p, g, gp, conv_dtype):
    flat = []
    for i, (gamma, beta, w, b) in enumerate(params):
        cin = C0 + i * g
        rows_in = C0p + i * gp
        rmap = _row_map(cin, C0, C0p, g, gp)
        gamma_f = jnp.zeros((rows_in,), jnp.float32).at[rmap].set(gamma.astype(jnp.float32))
        beta_f = jnp.zeros((rows_in,), jnp.float32).at[rmap].set(beta.astype(jnp.float32))
        taps = []
        for kh in range(3):
            for kw in range(3):
                wt = jnp.transpose(w[kh, kw]).astype(jnp.float32)         # (g, cin)
                taps.append(jnp.zeros((g, rows_in), jnp.float32).at[:, rmap].set(wt))
        w9 = jnp.stack(taps, axis=0).astype(conv_dtype)                   # (9, g, rows_in)
        flat += [gamma_f.reshape(rows_in, 1), beta_f.reshape(rows_in, 1),
                 w9, b.reshape(g, 1).astype(jnp.float32)]
    return flat


def _make_masks(N, H, W):
    """Per-tap lane masks implementing the conv's 'same' zero padding."""
    cnt = N * H * W
    idx = np.arange(cnt)
    h = (idx // W) % H
    w = idx % W
    masks = np.zeros((9, cnt), np.float32)
    for kh in range(3):
        for kw in range(3):
            dh, dw = kh - 1, kw - 1
            ok = (h + dh >= 0) & (h + dh < H) & (w + dw >= 0) & (w + dw < W)
            masks[kh * 3 + kw] = ok.astype(np.float32)
    return jnp.asarray(masks)


def dense_block_forward(x_nchw, params, *, use_bf16=True):
    """DenseBlock.forward. NCHW in / NCHW out (N, growth_rate, H, W)."""
    N, C0, H, W = x_nchw.shape
    L = len(params)
    g = params[0][3].shape[0]
    C0p = _round_up(C0, _SUB)
    gp = _round_up(g, _SUB)
    cnt = N * H * W
    Cmp = C0p + (L - 1) * gp                 # rows of the widest (last) layer input
    conv_dtype = jnp.bfloat16 if use_bf16 else jnp.float32
    cfg = (N, H, W, C0p, g, gp, L, cnt, use_bf16)

    # One tiny channel-major repack of the raw input outside the kernel; all per-layer
    # concatenation / layout handling happens in VMEM inside the kernel.
    x_cm = jnp.transpose(x_nchw, (1, 0, 2, 3)).astype(jnp.float32).reshape(C0, cnt)
    x_cm = jnp.pad(x_cm, ((0, C0p - C0), (0, 0)))

    flat_inputs = [x_cm, _make_masks(N, H, W)]
    flat_inputs += _make_layer_inputs(params, C0, C0p, g, gp, conv_dtype)

    vmem = pl.BlockSpec(memory_space=pltpu.MemorySpace.VMEM)
    out = pl.pallas_call(
        functools.partial(_dense_block_kernel, cfg),
        out_shape=jax.ShapeDtypeStruct((N, g, H * W), jnp.float32),
        in_specs=[vmem] * len(flat_inputs),
        out_specs=vmem,
        scratch_shapes=[
            pltpu.VMEM((Cmp, cnt), jnp.float32),   # channel-major VMEM concat buffer
        ],
        compiler_params=pltpu.CompilerParams(
            # Explicit scoped-VMEM budget; actual footprint here is well under 1 MiB
            # (feat scratch 48 KiB + inputs/outputs), far below v5e/v6e/v7x limits.
            vmem_limit_bytes=32 * 1024 * 1024,
        ),
    )(*flat_inputs)

    # (N, g, H*W) is already channel-major per sample -> NCHW needs only a reshape.
    return out.reshape(N, g, H, W)


# --------------------------------------------------------------------------- #
# Deterministic synthetic parameters                                           #
# --------------------------------------------------------------------------- #
def init_params(key, in_channels, growth_rate, num_layers):
    params = []
    c = in_channels
    for _ in range(num_layers):
        key, k1, k2, k3, k4 = jax.random.split(key, 5)
        gamma = 1.0 + 0.1 * jax.random.normal(k1, (c,), dtype=jnp.float32)
        beta = 0.1 * jax.random.normal(k2, (c,), dtype=jnp.float32)
        w = jax.random.normal(k3, (3, 3, c, growth_rate), dtype=jnp.float32)
        w = w * (1.0 / math.sqrt(9 * c))
        b = 0.01 * jax.random.normal(k4, (growth_rate,), dtype=jnp.float32)
        params.append((gamma, beta, w, b))
        c += growth_rate
    return params


# --------------------------------------------------------------------------- #
# Pure-JAX reference (f32 end-to-end)                                          #
# --------------------------------------------------------------------------- #
def _ref_layer(x, gamma, beta, w, b):
    mean = jnp.mean(x, axis=(0, 1, 2), keepdims=True)
    var = jnp.mean((x - mean) ** 2, axis=(0, 1, 2), keepdims=True)
    a = (x - mean) * jax.lax.rsqrt(var + EPS) * gamma + beta
    a = jnp.maximum(a, 0.0)
    y = jax.lax.conv_general_dilated(
        a, w, window_strides=(1, 1), padding="SAME",
        dimension_numbers=("NHWC", "HWIO", "NHWC"),
        precision=jax.lax.Precision.HIGHEST)
    return y + b


def _ref_forward(x_nchw, params):
    x = jnp.transpose(x_nchw, (0, 2, 3, 1)).astype(jnp.float32)
    out = x
    for i, (gamma, beta, w, b) in enumerate(params):
        y = _ref_layer(x, gamma, beta, w, b)
        if i == len(params) - 1:
            out = y
        else:
            x = jnp.concatenate([x, y], axis=-1)
    return jnp.transpose(out, (0, 3, 1, 2))


# --------------------------------------------------------------------------- #
if __name__ == "__main__":
    key = jax.random.PRNGKey(0)
    kx, kp = jax.random.split(key)

    # Small shapes consistent with the module's forward (NCHW input).
    N, C, H, W = 2, 4, 16, 16
    growth_rate, num_layers = 8, 3

    x = jax.random.normal(kx, (N, C, H, W), dtype=jnp.float32)
    params = init_params(kp, C, growth_rate, num_layers)

    ref = jax.block_until_ready(_ref_forward(x, params))

    # Production path: bf16 conv operands, f32 MXU accumulation.
    out = jax.block_until_ready(dense_block_forward(x, params, use_bf16=True))
    assert out.shape == (N, growth_rate, H, W), out.shape
    np.testing.assert_allclose(np.asarray(out), np.asarray(ref), atol=1e-1, rtol=1e-1)

    # f32 conv operands: tighter check so the loose bf16 tolerance cannot hide a real
    # indexing / normalization bug (review concern).
    out32 = jax.block_until_ready(dense_block_forward(x, params, use_bf16=False))
    np.testing.assert_allclose(np.asarray(out32), np.asarray(ref), atol=3e-2, rtol=3e-2)

    print("KERNEL_OK")
</pallas_src>

<mosaic_0001>
module attributes {stable_mosaic.version = 11 : i64} {
  func.func @_dense_block_kernel(%arg0: memref<8x512xf32, #tpu.memory_space<vmem>>, %arg1: memref<9x512xf32, #tpu.memory_space<vmem>>, %arg2: memref<8x1xf32, #tpu.memory_space<vmem>>, %arg3: memref<8x1xf32, #tpu.memory_space<vmem>>, %arg4: memref<9x8x8xbf16, #tpu.memory_space<vmem>>, %arg5: memref<8x1xf32, #tpu.memory_space<vmem>>, %arg6: memref<16x1xf32, #tpu.memory_space<vmem>>, %arg7: memref<16x1xf32, #tpu.memory_space<vmem>>, %arg8: memref<9x8x16xbf16, #tpu.memory_space<vmem>>, %arg9: memref<8x1xf32, #tpu.memory_space<vmem>>, %arg10: memref<24x1xf32, #tpu.memory_space<vmem>>, %arg11: memref<24x1xf32, #tpu.memory_space<vmem>>, %arg12: memref<9x8x24xbf16, #tpu.memory_space<vmem>>, %arg13: memref<8x1xf32, #tpu.memory_space<vmem>>, %arg14: memref<2x8x256xf32, #tpu.memory_space<vmem>>, %arg15: memref<24x512xf32, #tpu.memory_space<vmem>>) attributes {dimension_semantics = [], scalar_prefetch = 0 : i64, scratch_operands = 1 : i64, tpu.core_type = #tpu.core_type<tc>} {
    %cst = arith.constant 0.000000e+00 : f32
    %0 = vector.broadcast %cst : f32 to vector<24x512xf32>
    %c0 = arith.constant 0 : index
    %c0_0 = arith.constant 0 : index
    %1 = vector.load %arg15[%c0, %c0_0] : memref<24x512xf32, #tpu.memory_space<vmem>>, vector<24x512xf32>
    tpu.vector_store %arg15[%c0, %c0_0], %0 {strides = array<i32>} : memref<24x512xf32, #tpu.memory_space<vmem>>, vector<24x512xf32>,
    %c0_1 = arith.constant 0 : index
    %c0_2 = arith.constant 0 : index
    %2 = vector.load %arg0[%c0_1, %c0_2] : memref<8x512xf32, #tpu.memory_space<vmem>>, vector<8x512xf32>
    %c0_3 = arith.constant 0 : index
    %c0_4 = arith.constant 0 : index
    %3 = vector.load %arg15[%c0_3, %c0_4] : memref<24x512xf32, #tpu.memory_space<vmem>>, vector<8x512xf32>
    tpu.vector_store %arg15[%c0_3, %c0_4], %2 {strides = array<i32>} : memref<24x512xf32, #tpu.memory_space<vmem>>, vector<8x512xf32>,
    %c0_5 = arith.constant 0 : index
    %c0_6 = arith.constant 0 : index
    %4 = vector.load %arg2[%c0_5, %c0_6] : memref<8x1xf32, #tpu.memory_space<vmem>>, vector<8x1xf32>
    %c0_7 = arith.constant 0 : index
    %c0_8 = arith.constant 0 : index
    %5 = vector.load %arg3[%c0_7, %c0_8] : memref<8x1xf32, #tpu.memory_space<vmem>>, vector<8x1xf32>
    %c0_9 = arith.constant 0 : index
    %c0_10 = arith.constant 0 : index
    %6 = vector.load %arg5[%c0_9, %c0_10] : memref<8x1xf32, #tpu.memory_space<vmem>>, vector<8x1xf32>
    %c0_11 = arith.constant 0 : index
    %c0_12 = arith.constant 0 : index
    %7 = vector.load %arg15[%c0_11, %c0_12] : memref<24x512xf32, #tpu.memory_space<vmem>>, vector<8x512xf32>
    %cst_13 = arith.constant dense<0.000000e+00> : vector<8xf32>
    %8 = vector.multi_reduction <add>, %7, %cst_13 [1] : vector<8x512xf32> to vector<8xf32>
    %9 = vector.shape_cast %8 : vector<8xf32> to vector<8x1xf32>
    %10 = arith.mulf %7, %7 : vector<8x512xf32>
    %cst_14 = arith.constant dense<0.000000e+00> : vector<8xf32>
    %11 = vector.multi_reduction <add>, %10, %cst_14 [1] : vector<8x512xf32> to vector<8xf32>
    %12 = vector.shape_cast %11 : vector<8xf32> to vector<8x1xf32>
    %cst_15 = arith.constant 0.001953125 : f32
    %13 = vector.broadcast %cst_15 : f32 to vector<8x1xf32>
    %14 = arith.mulf %9, %13 : vector<8x1xf32>
    %cst_16 = arith.constant 0.001953125 : f32
    %15 = vector.broadcast %cst_16 : f32 to vector<8x1xf32>
    %16 = arith.mulf %12, %15 : vector<8x1xf32>
    %17 = arith.mulf %14, %14 : vector<8x1xf32>
    %18 = arith.subf %16, %17 : vector<8x1xf32>
    %cst_17 = arith.constant 0.000000e+00 : f32
    %19 = vector.broadcast %cst_17 : f32 to vector<8x1xf32>
    %20 = arith.maximumf %18, %19 : vector<8x1xf32>
    %cst_18 = arith.constant 9.99999974E-6 : f32
    %21 = vector.broadcast %cst_18 : f32 to vector<8x1xf32>
    %22 = arith.addf %20, %21 : vector<8x1xf32>
    %23 = math.rsqrt %22 : vector<8x1xf32>
    %24 = arith.mulf %4, %23 : vector<8x1xf32>
    %25 = arith.mulf %14, %24 : vector<8x1xf32>
    %26 = arith.subf %5, %25 : vector<8x1xf32>
    %27 = vector.broadcast %24 : vector<8x1xf32> to vector<8x512xf32>
    %28 = arith.mulf %7, %27 : vector<8x512xf32>
    %29 = vector.broadcast %26 : vector<8x1xf32> to vector<8x512xf32>
    %30 = arith.addf %28, %29 : vector<8x512xf32>
    %cst_19 = arith.constant 0.000000e+00 : f32
    %31 = vector.broadcast %cst_19 : f32 to vector<8x512xf32>
    %32 = arith.maximumf %30, %31 : vector<8x512xf32>
    %c17_i32 = arith.constant 17 : i32
    %33 = tpu.dynamic_rotate %32 by %c17_i32 dim 1 : vector<8x512xf32>, i32 -> vector<8x512xf32>
    %c0_20 = arith.constant 0 : index
    %c0_21 = arith.constant 0 : index
    %c0_22 = arith.constant 0 : index
    %34 = vector.load %arg4[%c0_20, %c0_21, %c0_22] : memref<9x8x8xbf16, #tpu.memory_space<vmem>>, vector<1x8x8xbf16>
    %35 = vector.shape_cast %34 : vector<1x8x8xbf16> to vector<8x8xbf16>
    %36 = arith.truncf %33 : vector<8x512xf32> to vector<8x512xbf16>
    %cst_23 = arith.constant dense<0.000000e+00> : vector<8x512xf32>
    %37 = tpu.matmul %35, %36, %cst_23 {dimension_numbers = #tpu.dot_dimension_numbers<[1], [0], [0], [1], [0, 0, 1, 1], [], []>} : vector<8x8xbf16>, vector<8x512xbf16>, vector<8x512xf32> -> vector<8x512xf32>
    %c0_24 = arith.constant 0 : index
    %c0_25 = arith.constant 0 : index
    %38 = vector.load %arg1[%c0_24, %c0_25] : memref<9x512xf32, #tpu.memory_space<vmem>>, vector<1x512xf32>
    %39 = vector.broadcast %38 : vector<1x512xf32> to vector<8x512xf32>
    %40 = arith.mulf %37, %39 : vector<8x512xf32>
    %c16_i32 = arith.constant 16 : i32
    %41 = tpu.dynamic_rotate %32 by %c16_i32 dim 1 : vector<8x512xf32>, i32 -> vector<8x512xf32>
    %c1 = arith.constant 1 : index
    %c0_26 = arith.constant 0 : index
    %c0_27 = arith.constant 0 : index
    %42 = vector.load %arg4[%c1, %c0_26, %c0_27] : memref<9x8x8xbf16, #tpu.memory_space<vmem>>, vector<1x8x8xbf16>
    %43 = vector.shape_cast %42 : vector<1x8x8xbf16> to vector<8x8xbf16>
    %44 = arith.truncf %41 : vector<8x512xf32> to vector<8x512xbf16>
    %cst_28 = arith.constant dense<0.000000e+00> : vector<8x512xf32>
    %45 = tpu.matmul %43, %44, %cst_28 {dimension_numbers = #tpu.dot_dimension_numbers<[1], [0], [0], [1], [0, 0, 1, 1], [], []>} : vector<8x8xbf16>, vector<8x512xbf16>, vector<8x512xf32> -> vector<8x512xf32>
    %c1_29 = arith.constant 1 : index
    %c0_30 = arith.constant 0 : index
    %46 = vector.load %arg1[%c1_29, %c0_30] : memref<9x512xf32, #tpu.memory_space<vmem>>, vector<1x512xf32>
    %47 = vector.broadcast %46 : vector<1x512xf32> to vector<8x512xf32>
    %48 = arith.mulf %45, %47 : vector<8x512xf32>
    %49 = arith.addf %40, %48 : vector<8x512xf32>
    %c15_i32 = arith.constant 15 : i32
    %50 = tpu.dynamic_rotate %32 by %c15_i32 dim 1 : vector<8x512xf32>, i32 -> vector<8x512xf32>
    %c2 = arith.constant 2 : index
    %c0_31 = arith.constant 0 : index
    %c0_32 = arith.constant 0 : index
    %51 = vector.load %arg4[%c2, %c0_31, %c0_32] : memref<9x8x8xbf16, #tpu.memory_space<vmem>>, vector<1x8x8xbf16>
    %52 = vector.shape_cast %51 : vector<1x8x8xbf16> to vector<8x8xbf16>
    %53 = arith.truncf %50 : vector<8x512xf32> to vector<8x512xbf16>
    %cst_33 = arith.constant dense<0.000000e+00> : vector<8x512xf32>
    %54 = tpu.matmul %52, %53, %cst_33 {dimension_numbers = #tpu.dot_dimension_numbers<[1], [0], [0], [1], [0, 0, 1, 1], [], []>} : vector<8x8xbf16>, vector<8x512xbf16>, vector<8x512xf32> -> vector<8x512xf32>
    %c2_34 = arith.constant 2 : index
    %c0_35 = arith.constant 0 : index
    %55 = vector.load %arg1[%c2_34, %c0_35] : memref<9x512xf32, #tpu.memory_space<vmem>>, vector<1x512xf32>
    %56 = vector.broadcast %55 : vector<1x512xf32> to vector<8x512xf32>
    %57 = arith.mulf %54, %56 : vector<8x512xf32>
    %58 = arith.addf %49, %57 : vector<8x512xf32>
    %c1_i32 = arith.constant 1 : i32
    %59 = tpu.dynamic_rotate %32 by %c1_i32 dim 1 : vector<8x512xf32>, i32 -> vector<8x512xf32>
    %c3 = arith.constant 3 : index
    %c0_36 = arith.constant 0 : index
    %c0_37 = arith.constant 0 : index
    %60 = vector.load %arg4[%c3, %c0_36, %c0_37] : memref<9x8x8xbf16, #tpu.memory_space<vmem>>, vector<1x8x8xbf16>
    %61 = vector.shape_cast %60 : vector<1x8x8xbf16> to vector<8x8xbf16>
    %62 = arith.truncf %59 : vector<8x512xf32> to vector<8x512xbf16>
    %cst_38 = arith.constant dense<0.000000e+00> : vector<8x512xf32>
    %63 = tpu.matmul %61, %62, %cst_38 {dimension_numbers = #tpu.dot_dimension_numbers<[1], [0], [0], [1], [0, 0, 1, 1], [], []>} : vector<8x8xbf16>, vector<8x512xbf16>, vector<8x512xf32> -> vector<8x512xf32>
    %c3_39 = arith.constant 3 : index
    %c0_40 = arith.constant 0 : index
    %64 = vector.load %arg1[%c3_39, %c0_40] : memref<9x512xf32, #tpu.memory_space<vmem>>, vector<1x512xf32>
    %65 = vector.broadcast %64 : vector<1x512xf32> to vector<8x512xf32>
    %66 = arith.mulf %63, %65 : vector<8x512xf32>
    %67 = arith.addf %58, %66 : vector<8x512xf32>
    %c4 = arith.constant 4 : index
    %c0_41 = arith.constant 0 : index
    %c0_42 = arith.constant 0 : index
    %68 = vector.load %arg4[%c4, %c0_41, %c0_42] : memref<9x8x8xbf16, #tpu.memory_space<vmem>>, vector<1x8x8xbf16>
    %69 = vector.shape_cast %68 : vector<1x8x8xbf16> to vector<8x8xbf16>
    %70 = arith.truncf %32 : vector<8x512xf32> to vector<8x512xbf16>
    %cst_43 = arith.constant dense<0.000000e+00> : vector<8x512xf32>
    %71 = tpu.matmul %69, %70, %cst_43 {dimension_numbers = #tpu.dot_dimension_numbers<[1], [0], [0], [1], [0, 0, 1, 1], [], []>} : vector<8x8xbf16>, vector<8x512xbf16>, vector<8x512xf32> -> vector<8x512xf32>
    %72 = arith.addf %67, %71 : vector<8x512xf32>
    %c511_i32 = arith.constant 511 : i32
    %73 = tpu.dynamic_rotate %32 by %c511_i32 dim 1 : vector<8x512xf32>, i32 -> vector<8x512xf32>
    %c5 = arith.constant 5 : index
    %c0_44 = arith.constant 0 : index
    %c0_45 = arith.constant 0 : index
    %74 = vector.load %arg4[%c5, %c0_44, %c0_45] : memref<9x8x8xbf16, #tpu.memory_space<vmem>>, vector<1x8x8xbf16>
    %75 = vector.shape_cast %74 : vector<1x8x8xbf16> to vector<8x8xbf16>
    %76 = arith.truncf %73 : vector<8x512xf32> to vector<8x512xbf16>
    %cst_46 = arith.constant dense<0.000000e+00> : vector<8x512xf32>
    %77 = tpu.matmul %75, %76, %cst_46 {dimension_numbers = #tpu.dot_dimension_numbers<[1], [0], [0], [1], [0, 0, 1, 1], [], []>} : vector<8x8xbf16>, vector<8x512xbf16>, vector<8x512xf32> -> vector<8x512xf32>
    %c5_47 = arith.constant 5 : index
    %c0_48 = arith.constant 0 : index
    %78 = vector.load %arg1[%c5_47, %c0_48] : memref<9x512xf32, #tpu.memory_space<vmem>>, vector<1x512xf32>
    %79 = vector.broadcast %78 : vector<1x512xf32> to vector<8x512xf32>
    %80 = arith.mulf %77, %79 : vector<8x512xf32>
    %81 = arith.addf %72, %80 : vector<8x512xf32>
    %c497_i32 = arith.constant 497 : i32
    %82 = tpu.dynamic_rotate %32 by %c497_i32 dim 1 : vector<8x512xf32>, i32 -> vector<8x512xf32>
    %c6 = arith.constant 6 : index
    %c0_49 = arith.constant 0 : index
    %c0_50 = arith.constant 0 : index
    %83 = vector.load %arg4[%c6, %c0_49, %c0_50] : memref<9x8x8xbf16, #tpu.memory_space<vmem>>, vector<1x8x8xbf16>
    %84 = vector.shape_cast %83 : vector<1x8x8xbf16> to vector<8x8xbf16>
    %85 = arith.truncf %82 : vector<8x512xf32> to vector<8x512xbf16>
    %cst_51 = arith.constant dense<0.000000e+00> : vector<8x512xf32>
    %86 = tpu.matmul %84, %85, %cst_51 {dimension_numbers = #tpu.dot_dimension_numbers<[1], [0], [0], [1], [0, 0, 1, 1], [], []>} : vector<8x8xbf16>, vector<8x512xbf16>, vector<8x512xf32> -> vector<8x512xf32>
    %c6_52 = arith.constant 6 : index
    %c0_53 = arith.constant 0 : index
    %87 = vector.load %arg1[%c6_52, %c0_53] : memref<9x512xf32, #tpu.memory_space<vmem>>, vector<1x512xf32>
    %88 = vector.broadcast %87 : vector<1x512xf32> to vector<8x512xf32>
    %89 = arith.mulf %86, %88 : vector<8x512xf32>
    %90 = arith.addf %81, %89 : vector<8x512xf32>
    %c496_i32 = arith.constant 496 : i32
    %91 = tpu.dynamic_rotate %32 by %c496_i32 dim 1 : vector<8x512xf32>, i32 -> vector<8x512xf32>
    %c7 = arith.constant 7 : index
    %c0_54 = arith.constant 0 : index
    %c0_55 = arith.constant 0 : index
    %92 = vector.load %arg4[%c7, %c0_54, %c0_55] : memref<9x8x8xbf16, #tpu.memory_space<vmem>>, vector<1x8x8xbf16>
    %93 = vector.shape_cast %92 : vector<1x8x8xbf16> to vector<8x8xbf16>
    %94 = arith.truncf %91 : vector<8x512xf32> to vector<8x512xbf16>
    %cst_56 = arith.constant dense<0.000000e+00> : vector<8x512xf32>
    %95 = tpu.matmul %93, %94, %cst_56 {dimension_numbers = #tpu.dot_dimension_numbers<[1], [0], [0], [1], [0, 0, 1, 1], [], []>} : vector<8x8xbf16>, vector<8x512xbf16>, vector<8x512xf32> -> vector<8x512xf32>
    %c7_57 = arith.constant 7 : index
    %c0_58 = arith.constant 0 : index
    %96 = vector.load %arg1[%c7_57, %c0_58] : memref<9x512xf32, #tpu.memory_space<vmem>>, vector<1x512xf32>
    %97 = vector.broadcast %96 : vector<1x512xf32> to vector<8x512xf32>
    %98 = arith.mulf %95, %97 : vector<8x512xf32>
    %99 = arith.addf %90, %98 : vector<8x512xf32>
    %c495_i32 = arith.constant 495 : i32
    %100 = tpu.dynamic_rotate %32 by %c495_i32 dim 1 : vector<8x512xf32>, i32 -> vector<8x512xf32>
    %c8 = arith.constant 8 : index
    %c0_59 = arith.constant 0 : index
    %c0_60 = arith.constant 0 : index
    %101 = vector.load %arg4[%c8, %c0_59, %c0_60] : memref<9x8x8xbf16, #tpu.memory_space<vmem>>, vector<1x8x8xbf16>
    %102 = vector.shape_cast %101 : vector<1x8x8xbf16> to vector<8x8xbf16>
    %103 = arith.truncf %100 : vector<8x512xf32> to vector<8x512xbf16>
    %cst_61 = arith.constant dense<0.000000e+00> : vector<8x512xf32>
    %104 = tpu.matmul %102, %103, %cst_61 {dimension_numbers = #tpu.dot_dimension_numbers<[1], [0], [0], [1], [0, 0, 1, 1], [], []>} : vector<8x8xbf16>, vector<8x512xbf16>, vector<8x512xf32> -> vector<8x512xf32>
    %c8_62 = arith.constant 8 : index
    %c0_63 = arith.constant 0 : index
    %105 = vector.load %arg1[%c8_62, %c0_63] : memref<9x512xf32, #tpu.memory_space<vmem>>, vector<1x512xf32>
    %106 = vector.broadcast %105 : vector<1x512xf32> to vector<8x512xf32>
    %107 = arith.mulf %104, %106 : vector<8x512xf32>
    %108 = arith.addf %99, %107 : vector<8x512xf32>
    %109 = vector.broadcast %6 : vector<8x1xf32> to vector<8x512xf32>
    %110 = arith.addf %108, %109 : vector<8x512xf32>
    %c8_64 = arith.constant 8 : index
    %c0_65 = arith.constant 0 : index
    %111 = vector.load %arg15[%c8_64, %c0_65] : memref<24x512xf32, #tpu.memory_space<vmem>>, vector<8x512xf32>
    tpu.vector_store %arg15[%c8_64, %c0_65], %110 {strides = array<i32>} : memref<24x512xf32, #tpu.memory_space<vmem>>, vector<8x512xf32>,
    %c0_66 = arith.constant 0 : index
    %c0_67 = arith.constant 0 : index
    %112 = vector.load %arg6[%c0_66, %c0_67] : memref<16x1xf32, #tpu.memory_space<vmem>>, vector<16x1xf32>
    %c0_68 = arith.constant 0 : index
    %c0_69 = arith.constant 0 : index
    %113 = vector.load %arg7[%c0_68, %c0_69] : memref<16x1xf32, #tpu.memory_space<vmem>>, vector<16x1xf32>
    %c0_70 = arith.constant 0 : index
    %c0_71 = arith.constant 0 : index
    %114 = vector.load %arg9[%c0_70, %c0_71] : memref<8x1xf32, #tpu.memory_space<vmem>>, vector<8x1xf32>
    %c0_72 = arith.constant 0 : index
    %c0_73 = arith.constant 0 : index
    %115 = vector.load %arg15[%c0_72, %c0_73] : memref<24x512xf32, #tpu.memory_space<vmem>>, vector<16x512xf32>
    %cst_74 = arith.constant dense<0.000000e+00> : vector<16xf32>
    %116 = vector.multi_reduction <add>, %115, %cst_74 [1] : vector<16x512xf32> to vector<16xf32>
    %117 = vector.shape_cast %116 : vector<16xf32> to vector<16x1xf32>
    %118 = arith.mulf %115, %115 : vector<16x512xf32>
    %cst_75 = arith.constant dense<0.000000e+00> : vector<16xf32>
    %119 = vector.multi_reduction <add>, %118, %cst_75 [1] : vector<16x512xf32> to vector<16xf32>
    %120 = vector.shape_cast %119 : vector<16xf32> to vector<16x1xf32>
    %cst_76 = arith.constant 0.001953125 : f32
    %121 = vector.broadcast %cst_76 : f32 to vector<16x1xf32>
    %122 = arith.mulf %117, %121 : vector<16x1xf32>
    %cst_77 = arith.constant 0.001953125 : f32
    %123 = vector.broadcast %cst_77 : f32 to vector<16x1xf32>
    %124 = arith.mulf %120, %123 : vector<16x1xf32>
    %125 = arith.mulf %122, %122 : vector<16x1xf32>
    %126 = arith.subf %124, %125 : vector<16x1xf32>
    %cst_78 = arith.constant 0.000000e+00 : f32
    %127 = vector.broadcast %cst_78 : f32 to vector<16x1xf32>
    %128 = arith.maximumf %126, %127 : vector<16x1xf32>
    %cst_79 = arith.constant 9.99999974E-6 : f32
    %129 = vector.broadcast %cst_79 : f32 to vector<16x1xf32>
    %130 = arith.addf %128, %129 : vector<16x1xf32>
    %131 = math.rsqrt %130 : vector<16x1xf32>
    %132 = arith.mulf %112, %131 : vector<16x1xf32>
    %133 = arith.mulf %122, %132 : vector<16x1xf32>
    %134 = arith.subf %113, %133 : vector<16x1xf32>
    %135 = vector.broadcast %132 : vector<16x1xf32> to vector<16x512xf32>
    %136 = arith.mulf %115, %135 : vector<16x512xf32>
    %137 = vector.broadcast %134 : vector<16x1xf32> to vector<16x512xf32>
    %138 = arith.addf %136, %137 : vector<16x512xf32>
    %cst_80 = arith.constant 0.000000e+00 : f32
    %139 = vector.broadcast %cst_80 : f32 to vector<16x512xf32>
    %140 = arith.maximumf %138, %139 : vector<16x512xf32>
    %c17_i32_81 = arith.constant 17 : i32
    %141 = tpu.dynamic_rotate %140 by %c17_i32_81 dim 1 : vector<16x512xf32>, i32 -> vector<16x512xf32>
    %c0_82 = arith.constant 0 : index
    %c0_83 = arith.constant 0 : index
    %c0_84 = arith.constant 0 : index
    %142 = vector.load %arg8[%c0_82, %c0_83, %c0_84] : memref<9x8x16xbf16, #tpu.memory_space<vmem>>, vector<1x8x16xbf16>
    %143 = vector.shape_cast %142 : vector<1x8x16xbf16> to vector<8x16xbf16>
    %144 = arith.truncf %141 : vector<16x512xf32> to vector<16x512xbf16>
    %cst_85 = arith.constant dense<0.000000e+00> : vector<8x512xf32>
    %145 = tpu.matmul %143, %144, %cst_85 {dimension_numbers = #tpu.dot_dimension_numbers<[1], [0], [0], [1], [0, 0, 1, 1], [], []>} : vector<8x16xbf16>, vector<16x512xbf16>, vector<8x512xf32> -> vector<8x512xf32>
    %c0_86 = arith.constant 0 : index
    %c0_87 = arith.constant 0 : index
    %146 = vector.load %arg1[%c0_86, %c0_87] : memref<9x512xf32, #tpu.memory_space<vmem>>, vector<1x512xf32>
    %147 = vector.broadcast %146 : vector<1x512xf32> to vector<8x512xf32>
    %148 = arith.mulf %145, %147 : vector<8x512xf32>
    %c16_i32_88 = arith.constant 16 : i32
    %149 = tpu.dynamic_rotate %140 by %c16_i32_88 dim 1 : vector<16x512xf32>, i32 -> vector<16x512xf32>
    %c1_89 = arith.constant 1 : index
    %c0_90 = arith.constant 0 : index
    %c0_91 = arith.constant 0 : index
    %150 = vector.load %arg8[%c1_89, %c0_90, %c0_91] : memref<9x8x16xbf16, #tpu.memory_space<vmem>>, vector<1x8x16xbf16>
    %151 = vector.shape_cast %150 : vector<1x8x16xbf16> to vector<8x16xbf16>
    %152 = arith.truncf %149 : vector<16x512xf32> to vector<16x512xbf16>
    %cst_92 = arith.constant dense<0.000000e+00> : vector<8x512xf32>
    %153 = tpu.matmul %151, %152, %cst_92 {dimension_numbers = #tpu.dot_dimension_numbers<[1], [0], [0], [1], [0, 0, 1, 1], [], []>} : vector<8x16xbf16>, vector<16x512xbf16>, vector<8x512xf32> -> vector<8x512xf32>
    %c1_93 = arith.constant 1 : index
    %c0_94 = arith.constant 0 : index
    %154 = vector.load %arg1[%c1_93, %c0_94] : memref<9x512xf32, #tpu.memory_space<vmem>>, vector<1x512xf32>
    %155 = vector.broadcast %154 : vector<1x512xf32> to vector<8x512xf32>
    %156 = arith.mulf %153, %155 : vector<8x512xf32>
    %157 = arith.addf %148, %156 : vector<8x512xf32>
    %c15_i32_95 = arith.constant 15 : i32
    %158 = tpu.dynamic_rotate %140 by %c15_i32_95 dim 1 : vector<16x512xf32>, i32 -> vector<16x512xf32>
    %c2_96 = arith.constant 2 : index
    %c0_97 = arith.constant 0 : index
    %c0_98 = arith.constant 0 : index
    %159 = vector.load %arg8[%c2_96, %c0_97, %c0_98] : memref<9x8x16xbf16, #tpu.memory_space<vmem>>, vector<1x8x16xbf16>
    %160 = vector.shape_cast %159 : vector<1x8x16xbf16> to vector<8x16xbf16>
    %161 = arith.truncf %158 : vector<16x512xf32> to vector<16x512xbf16>
    %cst_99 = arith.constant dense<0.000000e+00> : vector<8x512xf32>
    %162 = tpu.matmul %160, %161, %cst_99 {dimension_numbers = #tpu.dot_dimension_numbers<[1], [0], [0], [1], [0, 0, 1, 1], [], []>} : vector<8x16xbf16>, vector<16x512xbf16>, vector<8x512xf32> -> vector<8x512xf32>
    %c2_100 = arith.constant 2 : index
    %c0_101 = arith.constant 0 : index
    %163 = vector.load %arg1[%c2_100, %c0_101] : memref<9x512xf32, #tpu.memory_space<vmem>>, vector<1x512xf32>
    %164 = vector.broadcast %163 : vector<1x512xf32> to vector<8x512xf32>
    %165 = arith.mulf %162, %164 : vector<8x512xf32>
    %166 = arith.addf %157, %165 : vector<8x512xf32>
    %c1_i32_102 = arith.constant 1 : i32
    %167 = tpu.dynamic_rotate %140 by %c1_i32_102 dim 1 : vector<16x512xf32>, i32 -> vector<16x512xf32>
    %c3_103 = arith.constant 3 : index
    %c0_104 = arith.constant 0 : index
    %c0_105 = arith.constant 0 : index
    %168 = vector.load %arg8[%c3_103, %c0_104, %c0_105] : memref<9x8x16xbf16, #tpu.memory_space<vmem>>, vector<1x8x16xbf16>
    %169 = vector.shape_cast %168 : vector<1x8x16xbf16> to vector<8x16xbf16>
    %170 = arith.truncf %167 : vector<16x512xf32> to vector<16x512xbf16>
    %cst_106 = arith.constant dense<0.000000e+00> : vector<8x512xf32>
    %171 = tpu.matmul %169, %170, %cst_106 {dimension_numbers = #tpu.dot_dimension_numbers<[1], [0], [0], [1], [0, 0, 1, 1], [], []>} : vector<8x16xbf16>, vector<16x512xbf16>, vector<8x512xf32> -> vector<8x512xf32>
    %c3_107 = arith.constant 3 : index
    %c0_108 = arith.constant 0 : index
    %172 = vector.load %arg1[%c3_107, %c0_108] : memref<9x512xf32, #tpu.memory_space<vmem>>, vector<1x512xf32>
    %173 = vector.broadcast %172 : vector<1x512xf32> to vector<8x512xf32>
    %174 = arith.mulf %171, %173 : vector<8x512xf32>
    %175 = arith.addf %166, %174 : vector<8x512xf32>
    %c4_109 = arith.constant 4 : index
    %c0_110 = arith.constant 0 : index
    %c0_111 = arith.constant 0 : index
    %176 = vector.load %arg8[%c4_109, %c0_110, %c0_111] : memref<9x8x16xbf16, #tpu.memory_space<vmem>>, vector<1x8x16xbf16>
    %177 = vector.shape_cast %176 : vector<1x8x16xbf16> to vector<8x16xbf16>
    %178 = arith.truncf %140 : vector<16x512xf32> to vector<16x512xbf16>
    %cst_112 = arith.constant dense<0.000000e+00> : vector<8x512xf32>
    %179 = tpu.matmul %177, %178, %cst_112 {dimension_numbers = #tpu.dot_dimension_numbers<[1], [0], [0], [1], [0, 0, 1, 1], [], []>} : vector<8x16xbf16>, vector<16x512xbf16>, vector<8x512xf32> -> vector<8x512xf32>
    %180 = arith.addf %175, %179 : vector<8x512xf32>
    %c511_i32_113 = arith.constant 511 : i32
    %181 = tpu.dynamic_rotate %140 by %c511_i32_113 dim 1 : vector<16x512xf32>, i32 -> vector<16x512xf32>
    %c5_114 = arith.constant 5 : index
    %c0_115 = arith.constant 0 : index
    %c0_116 = arith.constant 0 : index
    %182 = vector.load %arg8[%c5_114, %c0_115, %c0_116] : memref<9x8x16xbf16, #tpu.memory_space<vmem>>, vector<1x8x16xbf16>
    %183 = vector.shape_cast %182 : vector<1x8x16xbf16> to vector<8x16xbf16>
    %184 = arith.truncf %181 : vector<16x512xf32> to vector<16x512xbf16>
    %cst_117 = arith.constant dense<0.000000e+00> : vector<8x512xf32>
    %185 = tpu.matmul %183, %184, %cst_117 {dimension_numbers = #tpu.dot_dimension_numbers<[1], [0], [0], [1], [0, 0, 1, 1], [], []>} : vector<8x16xbf16>, vector<16x512xbf16>, vector<8x512xf32> -> vector<8x512xf32>
    %c5_118 = arith.constant 5 : index
    %c0_119 = arith.constant 0 : index
    %186 = vector.load %arg1[%c5_118, %c0_119] : memref<9x512xf32, #tpu.memory_space<vmem>>, vector<1x512xf32>
    %187 = vector.broadcast %186 : vector<1x512xf32> to vector<8x512xf32>
    %188 = arith.mulf %185, %187 : vector<8x512xf32>
    %189 = arith.addf %180, %188 : vector<8x512xf32>
    %c497_i32_120 = arith.constant 497 : i32
    %190 = tpu.dynamic_rotate %140 by %c497_i32_120 dim 1 : vector<16x512xf32>, i32 -> vector<16x512xf32>
    %c6_121 = arith.constant 6 : index
    %c0_122 = arith.constant 0 : index
    %c0_123 = arith.constant 0 : index
    %191 = vector.load %arg8[%c6_121, %c0_122, %c0_123] : memref<9x8x16xbf16, #tpu.memory_space<vmem>>, vector<1x8x16xbf16>
    %192 = vector.shape_cast %191 : vector<1x8x16xbf16> to vector<8x16xbf16>
    %193 = arith.truncf %190 : vector<16x512xf32> to vector<16x512xbf16>
    %cst_124 = arith.constant dense<0.000000e+00> : vector<8x512xf32>
    %194 = tpu.matmul %192, %193, %cst_124 {dimension_numbers = #tpu.dot_dimension_numbers<[1], [0], [0], [1], [0, 0, 1, 1], [], []>} : vector<8x16xbf16>, vector<16x512xbf16>, vector<8x512xf32> -> vector<8x512xf32>
    %c6_125 = arith.constant 6 : index
    %c0_126 = arith.constant 0 : index
    %195 = vector.load %arg1[%c6_125, %c0_126] : memref<9x512xf32, #tpu.memory_space<vmem>>, vector<1x512xf32>
    %196 = vector.broadcast %195 : vector<1x512xf32> to vector<8x512xf32>
    %197 = arith.mulf %194, %196 : vector<8x512xf32>
    %198 = arith.addf %189, %197 : vector<8x512xf32>
    %c496_i32_127 = arith.constant 496 : i32
    %199 = tpu.dynamic_rotate %140 by %c496_i32_127 dim 1 : vector<16x512xf32>, i32 -> vector<16x512xf32>
    %c7_128 = arith.constant 7 : index
    %c0_129 = arith.constant 0 : index
    %c0_130 = arith.constant 0 : index
    %200 = vector.load %arg8[%c7_128, %c0_129, %c0_130] : memref<9x8x16xbf16, #tpu.memory_space<vmem>>, vector<1x8x16xbf16>
    %201 = vector.shape_cast %200 : vector<1x8x16xbf16> to vector<8x16xbf16>
    %202 = arith.truncf %199 : vector<16x512xf32> to vector<16x512xbf16>
    %cst_131 = arith.constant dense<0.000000e+00> : vector<8x512xf32>
    %203 = tpu.matmul %201, %202, %cst_131 {dimension_numbers = #tpu.dot_dimension_numbers<[1], [0], [0], [1], [0, 0, 1, 1], [], []>} : vector<8x16xbf16>, vector<16x512xbf16>, vector<8x512xf32> -> vector<8x512xf32>
    %c7_132 = arith.constant 7 : index
    %c0_133 = arith.constant 0 : index
    %204 = vector.load %arg1[%c7_132, %c0_133] : memref<9x512xf32, #tpu.memory_space<vmem>>, vector<1x512xf32>
    %205 = vector.broadcast %204 : vector<1x512xf32> to vector<8x512xf32>
    %206 = arith.mulf %203, %205 : vector<8x512xf32>
    %207 = arith.addf %198, %206 : vector<8x512xf32>
    %c495_i32_134 = arith.constant 495 : i32
    %208 = tpu.dynamic_rotate %140 by %c495_i32_134 dim 1 : vector<16x512xf32>, i32 -> vector<16x512xf32>
    %c8_135 = arith.constant 8 : index
    %c0_136 = arith.constant 0 : index
    %c0_137 = arith.constant 0 : index
    %209 = vector.load %arg8[%c8_135, %c0_136, %c0_137] : memref<9x8x16xbf16, #tpu.memory_space<vmem>>, vector<1x8x16xbf16>
    %210 = vector.shape_cast %209 : vector<1x8x16xbf16> to vector<8x16xbf16>
    %211 = arith.truncf %208 : vector<16x512xf32> to vector<16x512xbf16>
    %cst_138 = arith.constant dense<0.000000e+00> : vector<8x512xf32>
    %212 = tpu.matmul %210, %211, %cst_138 {dimension_numbers = #tpu.dot_dimension_numbers<[1], [0], [0], [1], [0, 0, 1, 1], [], []>} : vector<8x16xbf16>, vector<16x512xbf16>, vector<8x512xf32> -> vector<8x512xf32>
    %c8_139 = arith.constant 8 : index
    %c0_140 = arith.constant 0 : index
    %213 = vector.load %arg1[%c8_139, %c0_140] : memref<9x512xf32, #tpu.memory_space<vmem>>, vector<1x512xf32>
    %214 = vector.broadcast %213 : vector<1x512xf32> to vector<8x512xf32>
    %215 = arith.mulf %212, %214 : vector<8x512xf32>
    %216 = arith.addf %207, %215 : vector<8x512xf32>
    %217 = vector.broadcast %114 : vector<8x1xf32> to vector<8x512xf32>
    %218 = arith.addf %216, %217 : vector<8x512xf32>
    %c16 = arith.constant 16 : index
    %c0_141 = arith.constant 0 : index
    %219 = vector.load %arg15[%c16, %c0_141] : memref<24x512xf32, #tpu.memory_space<vmem>>, vector<8x512xf32>
    tpu.vector_store %arg15[%c16, %c0_141], %218 {strides = array<i32>} : memref<24x512xf32, #tpu.memory_space<vmem>>, vector<8x512xf32>,
    %c0_142 = arith.constant 0 : index
    %c0_143 = arith.constant 0 : index
    %220 = vector.load %arg10[%c0_142, %c0_143] : memref<24x1xf32, #tpu.memory_space<vmem>>, vector<24x1xf32>
    %c0_144 = arith.constant 0 : index
    %c0_145 = arith.constant 0 : index
    %221 = vector.load %arg11[%c0_144, %c0_145] : memref<24x1xf32, #tpu.memory_space<vmem>>, vector<24x1xf32>
    %c0_146 = arith.constant 0 : index
    %c0_147 = arith.constant 0 : index
    %222 = vector.load %arg13[%c0_146, %c0_147] : memref<8x1xf32, #tpu.memory_space<vmem>>, vector<8x1xf32>
    %c0_148 = arith.constant 0 : index
    %c0_149 = arith.constant 0 : index
    %223 = vector.load %arg15[%c0_148, %c0_149] : memref<24x512xf32, #tpu.memory_space<vmem>>, vector<24x512xf32>
    %cst_150 = arith.constant dense<0.000000e+00> : vector<24xf32>
    %224 = vector.multi_reduction <add>, %223, %cst_150 [1] : vector<24x512xf32> to vector<24xf32>
    %225 = vector.shape_cast %224 : vector<24xf32> to vector<24x1xf32>
    %226 = arith.mulf %223, %223 : vector<24x512xf32>
    %cst_151 = arith.constant dense<0.000000e+00> : vector<24xf32>
    %227 = vector.multi_reduction <add>, %226, %cst_151 [1] : vector<24x512xf32> to vector<24xf32>
    %228 = vector.shape_cast %227 : vector<24xf32> to vector<24x1xf32>
    %cst_152 = arith.constant 0.001953125 : f32
    %229 = vector.broadcast %cst_152 : f32 to vector<24x1xf32>
    %230 = arith.mulf %225, %229 : vector<24x1xf32>
    %cst_153 = arith.constant 0.001953125 : f32
    %231 = vector.broadcast %cst_153 : f32 to vector<24x1xf32>
    %232 = arith.mulf %228, %231 : vector<24x1xf32>
    %233 = arith.mulf %230, %230 : vector<24x1xf32>
    %234 = arith.subf %232, %233 : vector<24x1xf32>
    %cst_154 = arith.constant 0.000000e+00 : f32
    %235 = vector.broadcast %cst_154 : f32 to vector<24x1xf32>
    %236 = arith.maximumf %234, %235 : vector<24x1xf32>
    %cst_155 = arith.constant 9.99999974E-6 : f32
    %237 = vector.broadcast %cst_155 : f32 to vector<24x1xf32>
    %238 = arith.addf %236, %237 : vector<24x1xf32>
    %239 = math.rsqrt %238 : vector<24x1xf32>
    %240 = arith.mulf %220, %239 : vector<24x1xf32>
    %241 = arith.mulf %230, %240 : vector<24x1xf32>
    %242 = arith.subf %221, %241 : vector<24x1xf32>
    %243 = vector.broadcast %240 : vector<24x1xf32> to vector<24x512xf32>
    %244 = arith.mulf %223, %243 : vector<24x512xf32>
    %245 = vector.broadcast %242 : vector<24x1xf32> to vector<24x512xf32>
    %246 = arith.addf %244, %245 : vector<24x512xf32>
    %cst_156 = arith.constant 0.000000e+00 : f32
    %247 = vector.broadcast %cst_156 : f32 to vector<24x512xf32>
    %248 = arith.maximumf %246, %247 : vector<24x512xf32>
    %c17_i32_157 = arith.constant 17 : i32
    %249 = tpu.dynamic_rotate %248 by %c17_i32_157 dim 1 : vector<24x512xf32>, i32 -> vector<24x512xf32>
    %c0_158 = arith.constant 0 : index
    %c0_159 = arith.constant 0 : index
    %c0_160 = arith.constant 0 : index
    %250 = vector.load %arg12[%c0_158, %c0_159, %c0_160] : memref<9x8x24xbf16, #tpu.memory_space<vmem>>, vector<1x8x24xbf16>
    %251 = vector.shape_cast %250 : vector<1x8x24xbf16> to vector<8x24xbf16>
    %252 = arith.truncf %249 : vector<24x512xf32> to vector<24x512xbf16>
    %cst_161 = arith.constant dense<0.000000e+00> : vector<8x512xf32>
    %253 = tpu.matmul %251, %252, %cst_161 {dimension_numbers = #tpu.dot_dimension_numbers<[1], [0], [0], [1], [0, 0, 1, 1], [], []>} : vector<8x24xbf16>, vector<24x512xbf16>, vector<8x512xf32> -> vector<8x512xf32>
    %c0_162 = arith.constant 0 : index
    %c0_163 = arith.constant 0 : index
    %254 = vector.load %arg1[%c0_162, %c0_163] : memref<9x512xf32, #tpu.memory_space<vmem>>, vector<1x512xf32>
    %255 = vector.broadcast %254 : vector<1x512xf32> to vector<8x512xf32>
    %256 = arith.mulf %253, %255 : vector<8x512xf32>
    %c16_i32_164 = arith.constant 16 : i32
    %257 = tpu.dynamic_rotate %248 by %c16_i32_164 dim 1 : vector<24x512xf32>, i32 -> vector<24x512xf32>
    %c1_165 = arith.constant 1 : index
    %c0_166 = arith.constant 0 : index
    %c0_167 = arith.constant 0 : index
    %258 = vector.load %arg12[%c1_165, %c0_166, %c0_167] : memref<9x8x24xbf16, #tpu.memory_space<vmem>>, vector<1x8x24xbf16>
    %259 = vector.shape_cast %258 : vector<1x8x24xbf16> to vector<8x24xbf16>
    %260 = arith.truncf %257 : vector<24x512xf32> to vector<24x512xbf16>
    %cst_168 = arith.constant dense<0.000000e+00> : vector<8x512xf32>
    %261 = tpu.matmul %259, %260, %cst_168 {dimension_numbers = #tpu.dot_dimension_numbers<[1], [0], [0], [1], [0, 0, 1, 1], [], []>} : vector<8x24xbf16>, vector<24x512xbf16>, vector<8x512xf32> -> vector<8x512xf32>
    %c1_169 = arith.constant 1 : index
    %c0_170 = arith.constant 0 : index
    %262 = vector.load %arg1[%c1_169, %c0_170] : memref<9x512xf32, #tpu.memory_space<vmem>>, vector<1x512xf32>
    %263 = vector.broadcast %262 : vector<1x512xf32> to vector<8x512xf32>
    %264 = arith.mulf %261, %263 : vector<8x512xf32>
    %265 = arith.addf %256, %264 : vector<8x512xf32>
    %c15_i32_171 = arith.constant 15 : i32
    %266 = tpu.dynamic_rotate %248 by %c15_i32_171 dim 1 : vector<24x512xf32>, i32 -> vector<24x512xf32>
    %c2_172 = arith.constant 2 : index
    %c0_173 = arith.constant 0 : index
    %c0_174 = arith.constant 0 : index
    %267 = vector.load %arg12[%c2_172, %c0_173, %c0_174] : memref<9x8x24xbf16, #tpu.memory_space<vmem>>, vector<1x8x24xbf16>
    %268 = vector.shape_cast %267 : vector<1x8x24xbf16> to vector<8x24xbf16>
    %269 = arith.truncf %266 : vector<24x512xf32> to vector<24x512xbf16>
    %cst_175 = arith.constant dense<0.000000e+00> : vector<8x512xf32>
    %270 = tpu.matmul %268, %269, %cst_175 {dimension_numbers = #tpu.dot_dimension_numbers<[1], [0], [0], [1], [0, 0, 1, 1], [], []>} : vector<8x24xbf16>, vector<24x512xbf16>, vector<8x512xf32> -> vector<8x512xf32>
    %c2_176 = arith.constant 2 : index
    %c0_177 = arith.constant 0 : index
    %271 = vector.load %arg1[%c2_176, %c0_177] : memref<9x512xf32, #tpu.memory_space<vmem>>, vector<1x512xf32>
    %272 = vector.broadcast %271 : vector<1x512xf32> to vector<8x512xf32>
    %273 = arith.mulf %270, %272 : vector<8x512xf32>
    %274 = arith.addf %265, %273 : vector<8x512xf32>
    %c1_i32_178 = arith.constant 1 : i32
    %275 = tpu.dynamic_rotate %248 by %c1_i32_178 dim 1 : vector<24x512xf32>, i32 -> vector<24x512xf32>
    %c3_179 = arith.constant 3 : index
    %c0_180 = arith.constant 0 : index
    %c0_181 = arith.constant 0 : index
    %276 = vector.load %arg12[%c3_179, %c0_180, %c0_181] : memref<9x8x24xbf16, #tpu.memory_space<vmem>>, vector<1x8x24xbf16>
    %277 = vector.shape_cast %276 : vector<1x8x24xbf16> to vector<8x24xbf16>
    %278 = arith.truncf %275 : vector<24x512xf32> to vector<24x512xbf16>
    %cst_182 = arith.constant dense<0.000000e+00> : vector<8x512xf32>
    %279 = tpu.matmul %277, %278, %cst_182 {dimension_numbers = #tpu.dot_dimension_numbers<[1], [0], [0], [1], [0, 0, 1, 1], [], []>} : vector<8x24xbf16>, vector<24x512xbf16>, vector<8x512xf32> -> vector<8x512xf32>
    %c3_183 = arith.constant 3 : index
    %c0_184 = arith.constant 0 : index
    %280 = vector.load %arg1[%c3_183, %c0_184] : memref<9x512xf32, #tpu.memory_space<vmem>>, vector<1x512xf32>
    %281 = vector.broadcast %280 : vector<1x512xf32> to vector<8x512xf32>
    %282 = arith.mulf %279, %281 : vector<8x512xf32>
    %283 = arith.addf %274, %282 : vector<8x512xf32>
    %c4_185 = arith.constant 4 : index
    %c0_186 = arith.constant 0 : index
    %c0_187 = arith.constant 0 : index
    %284 = vector.load %arg12[%c4_185, %c0_186, %c0_187] : memref<9x8x24xbf16, #tpu.memory_space<vmem>>, vector<1x8x24xbf16>
    %285 = vector.shape_cast %284 : vector<1x8x24xbf16> to vector<8x24xbf16>
    %286 = arith.truncf %248 : vector<24x512xf32> to vector<24x512xbf16>
    %cst_188 = arith.constant dense<0.000000e+00> : vector<8x512xf32>
    %287 = tpu.matmul %285, %286, %cst_188 {dimension_numbers = #tpu.dot_dimension_numbers<[1], [0], [0], [1], [0, 0, 1, 1], [], []>} : vector<8x24xbf16>, vector<24x512xbf16>, vector<8x512xf32> -> vector<8x512xf32>
    %288 = arith.addf %283, %287 : vector<8x512xf32>
    %c511_i32_189 = arith.constant 511 : i32
    %289 = tpu.dynamic_rotate %248 by %c511_i32_189 dim 1 : vector<24x512xf32>, i32 -> vector<24x512xf32>
    %c5_190 = arith.constant 5 : index
    %c0_191 = arith.constant 0 : index
    %c0_192 = arith.constant 0 : index
    %290 = vector.load %arg12[%c5_190, %c0_191, %c0_192] : memref<9x8x24xbf16, #tpu.memory_space<vmem>>, vector<1x8x24xbf16>
    %291 = vector.shape_cast %290 : vector<1x8x24xbf16> to vector<8x24xbf16>
    %292 = arith.truncf %289 : vector<24x512xf32> to vector<24x512xbf16>
    %cst_193 = arith.constant dense<0.000000e+00> : vector<8x512xf32>
    %293 = tpu.matmul %291, %292, %cst_193 {dimension_numbers = #tpu.dot_dimension_numbers<[1], [0], [0], [1], [0, 0, 1, 1], [], []>} : vector<8x24xbf16>, vector<24x512xbf16>, vector<8x512xf32> -> vector<8x512xf32>
    %c5_194 = arith.constant 5 : index
    %c0_195 = arith.constant 0 : index
    %294 = vector.load %arg1[%c5_194, %c0_195] : memref<9x512xf32, #tpu.memory_space<vmem>>, vector<1x512xf32>
    %295 = vector.broadcast %294 : vector<1x512xf32> to vector<8x512xf32>
    %296 = arith.mulf %293, %295 : vector<8x512xf32>
    %297 = arith.addf %288, %296 : vector<8x512xf32>
    %c497_i32_196 = arith.constant 497 : i32
    %298 = tpu.dynamic_rotate %248 by %c497_i32_196 dim 1 : vector<24x512xf32>, i32 -> vector<24x512xf32>
    %c6_197 = arith.constant 6 : index
    %c0_198 = arith.constant 0 : index
    %c0_199 = arith.constant 0 : index
    %299 = vector.load %arg12[%c6_197, %c0_198, %c0_199] : memref<9x8x24xbf16, #tpu.memory_space<vmem>>, vector<1x8x24xbf16>
    %300 = vector.shape_cast %299 : vector<1x8x24xbf16> to vector<8x24xbf16>
    %301 = arith.truncf %298 : vector<24x512xf32> to vector<24x512xbf16>
    %cst_200 = arith.constant dense<0.000000e+00> : vector<8x512xf32>
    %302 = tpu.matmul %300, %301, %cst_200 {dimension_numbers = #tpu.dot_dimension_numbers<[1], [0], [0], [1], [0, 0, 1, 1], [], []>} : vector<8x24xbf16>, vector<24x512xbf16>, vector<8x512xf32> -> vector<8x512xf32>
    %c6_201 = arith.constant 6 : index
    %c0_202 = arith.constant 0 : index
    %303 = vector.load %arg1[%c6_201, %c0_202] : memref<9x512xf32, #tpu.memory_space<vmem>>, vector<1x512xf32>
    %304 = vector.broadcast %303 : vector<1x512xf32> to vector<8x512xf32>
    %305 = arith.mulf %302, %304 : vector<8x512xf32>
    %306 = arith.addf %297, %305 : vector<8x512xf32>
    %c496_i32_203 = arith.constant 496 : i32
    %307 = tpu.dynamic_rotate %248 by %c496_i32_203 dim 1 : vector<24x512xf32>, i32 -> vector<24x512xf32>
    %c7_204 = arith.constant 7 : index
    %c0_205 = arith.constant 0 : index
    %c0_206 = arith.constant 0 : index
    %308 = vector.load %arg12[%c7_204, %c0_205, %c0_206] : memref<9x8x24xbf16, #tpu.memory_space<vmem>>, vector<1x8x24xbf16>
    %309 = vector.shape_cast %308 : vector<1x8x24xbf16> to vector<8x24xbf16>
    %310 = arith.truncf %307 : vector<24x512xf32> to vector<24x512xbf16>
    %cst_207 = arith.constant dense<0.000000e+00> : vector<8x512xf32>
    %311 = tpu.matmul %309, %310, %cst_207 {dimension_numbers = #tpu.dot_dimension_numbers<[1], [0], [0], [1], [0, 0, 1, 1], [], []>} : vector<8x24xbf16>, vector<24x512xbf16>, vector<8x512xf32> -> vector<8x512xf32>
    %c7_208 = arith.constant 7 : index
    %c0_209 = arith.constant 0 : index
    %312 = vector.load %arg1[%c7_208, %c0_209] : memref<9x512xf32, #tpu.memory_space<vmem>>, vector<1x512xf32>
    %313 = vector.broadcast %312 : vector<1x512xf32> to vector<8x512xf32>
    %314 = arith.mulf %311, %313 : vector<8x512xf32>
    %315 = arith.addf %306, %314 : vector<8x512xf32>
    %c495_i32_210 = arith.constant 495 : i32
    %316 = tpu.dynamic_rotate %248 by %c495_i32_210 dim 1 : vector<24x512xf32>, i32 -> vector<24x512xf32>
    %c8_211 = arith.constant 8 : index
    %c0_212 = arith.constant 0 : index
    %c0_213 = arith.constant 0 : index
    %317 = vector.load %arg12[%c8_211, %c0_212, %c0_213] : memref<9x8x24xbf16, #tpu.memory_space<vmem>>, vector<1x8x24xbf16>
    %318 = vector.shape_cast %317 : vector<1x8x24xbf16> to vector<8x24xbf16>
    %319 = arith.truncf %316 : vector<24x512xf32> to vector<24x512xbf16>
    %cst_214 = arith.constant dense<0.000000e+00> : vector<8x512xf32>
    %320 = tpu.matmul %318, %319, %cst_214 {dimension_numbers = #tpu.dot_dimension_numbers<[1], [0], [0], [1], [0, 0, 1, 1], [], []>} : vector<8x24xbf16>, vector<24x512xbf16>, vector<8x512xf32> -> vector<8x512xf32>
    %c8_215 = arith.constant 8 : index
    %c0_216 = arith.constant 0 : index
    %321 = vector.load %arg1[%c8_215, %c0_216] : memref<9x512xf32, #tpu.memory_space<vmem>>, vector<1x512xf32>
    %322 = vector.broadcast %321 : vector<1x512xf32> to vector<8x512xf32>
    %323 = arith.mulf %320, %322 : vector<8x512xf32>
    %324 = arith.addf %315, %323 : vector<8x512xf32>
    %325 = vector.broadcast %222 : vector<8x1xf32> to vector<8x512xf32>
    %326 = arith.addf %324, %325 : vector<8x512xf32>
    %327 = vector.extract_strided_slice %326 {offsets = [0, 0], sizes = [8, 256], strides = [1, 1]} : vector<8x512xf32> to vector<8x256xf32>
    %c0_217 = arith.constant 0 : index
    %c0_218 = arith.constant 0 : index
    %c0_219 = arith.constant 0 : index
    %328 = vector.load %arg14[%c0_217, %c0_218, %c0_219] : memref<2x8x256xf32, #tpu.memory_space<vmem>>, vector<1x8x256xf32>
    %329 = vector.shape_cast %328 : vector<1x8x256xf32> to vector<8x256xf32>
    %330 = vector.shape_cast %327 : vector<8x256xf32> to vector<1x8x256xf32>
    tpu.vector_store %arg14[%c0_217, %c0_218, %c0_219], %330 {strides = array<i32>} : memref<2x8x256xf32, #tpu.memory_space<vmem>>, vector<1x8x256xf32>,
    %331 = vector.extract_strided_slice %326 {offsets = [0, 256], sizes = [8, 256], strides = [1, 1]} : vector<8x512xf32> to vector<8x256xf32>
    %c1_220 = arith.constant 1 : index
    %c0_221 = arith.constant 0 : index
    %c0_222 = arith.constant 0 : index
    %332 = vector.load %arg14[%c1_220, %c0_221, %c0_222] : memref<2x8x256xf32, #tpu.memory_space<vmem>>, vector<1x8x256xf32>
    %333 = vector.shape_cast %332 : vector<1x8x256xf32> to vector<8x256xf32>
    %334 = vector.shape_cast %331 : vector<8x256xf32> to vector<1x8x256xf32>
    tpu.vector_store %arg14[%c1_220, %c0_221, %c0_222], %334 {strides = array<i32>} : memref<2x8x256xf32, #tpu.memory_space<vmem>>, vector<1x8x256xf32>,
    return
  }
}

</mosaic_0001>

<llo_original>
// kernel: tpu_custom_call.1
$region0: #{tpu_custom_call.1}
  #allocation0 [shape = 'u32[]', space=smem, size = 0x4, offset = 0x4, fixed_abs, tag = 'smem constant byte address 0x4 - core index']
  #allocation1 [shape = 'u32[144,128]{1,0:T(1,128)}', space=vmem, size = 0x12000, scoped, tag = 'internal scratch']
  #allocation2 [shape = 'f32[24,512]{1,0:T(8,128)}', space=vmem, size = 0xc000, scoped, tag = 'scratch operand']
  %s0 = inlined_call_operand.vmem [shape: f32[8,512], index: 0, kind: input, shape index: {}]
  %s1 = inlined_call_operand.vmem [shape: f32[9,512], index: 1, kind: input, shape index: {}]
  %s2 = inlined_call_operand.vmem [shape: f32[8,1], index: 2, kind: input, shape index: {}]
  %s3 = inlined_call_operand.vmem [shape: f32[8,1], index: 3, kind: input, shape index: {}]
  %s4 = inlined_call_operand.vmem [shape: bf16[9,8,8], index: 4, kind: input, shape index: {}]
  %s5 = inlined_call_operand.vmem [shape: f32[8,1], index: 5, kind: input, shape index: {}]
  %s6 = inlined_call_operand.vmem [shape: f32[16,1], index: 6, kind: input, shape index: {}]
  %s7 = inlined_call_operand.vmem [shape: f32[16,1], index: 7, kind: input, shape index: {}]
  %s8 = inlined_call_operand.vmem [shape: bf16[9,8,16], index: 8, kind: input, shape index: {}]
  %s9 = inlined_call_operand.vmem [shape: f32[8,1], index: 9, kind: input, shape index: {}]
  %s10 = inlined_call_operand.vmem [shape: f32[24,1], index: 10, kind: input, shape index: {}]
  %s11 = inlined_call_operand.vmem [shape: f32[24,1], index: 11, kind: input, shape index: {}]
  %s12 = inlined_call_operand.vmem [shape: bf16[9,8,24], index: 12, kind: input, shape index: {}]
  %s13 = inlined_call_operand.vmem [shape: f32[8,1], index: 13, kind: input, shape index: {}]
  %s14 = inlined_call_operand.hbm [shape: f32[2,8,256], index: 14, kind: output, shape index: {}]
  %s15 = sld [smem:[#allocation0]]
  $region66: #{tpu_custom_call.1} parent=0
    _
  %s17 = ssub.s32 1, %s15
  %s18 = scalar_select 0, %s17, %s15
  $region1: #{tpu_custom_call.1} parent=0
    #allocation3 [shape = 'u8[16384]{0}', space=vmem, size = 0x4000, scoped, tag = 'output window, operand 0, single buffered']
    #allocation4 [shape = 's32[1]{0}', space=sflag, size = 0x4, scoped, tag = 'scoped memory for tpu_custom_call.1']
    %19 = vsyncpa [#allocation4], 0
    // Predicated region
    $region2: #{tpu_custom_call.1} parent=1 // pred_check
      _
    $region3: #{tpu_custom_call.1} parent=1 // pred_check_branch
      %21 = sbr.rel (0) target = $region5
    $region4: #{tpu_custom_call.1} parent=1 // pred_region
      _
    $region5: #{tpu_custom_call.1} parent=1 // pred_fallthru
      _
    // Predicated region
    $region6: #{tpu_custom_call.1} parent=1 // pred_check
      _
    $region7: #{tpu_custom_call.1} parent=1 // pred_check_branch
      %23 = sbr.rel (0) target = $region9
    $region8: #{tpu_custom_call.1} parent=1 // pred_region
      _
    $region9: #{tpu_custom_call.1} parent=1 // pred_fallthru
      _
    // Predicated region
    $region10: #{tpu_custom_call.1} parent=1 // pred_check
      _
    $region11: #{tpu_custom_call.1} parent=1 // pred_check_branch
      %25 = sbr.rel (0) target = $region13
    $region12: #{tpu_custom_call.1} parent=1 // pred_region
      _
    $region13: #{tpu_custom_call.1} parent=1 // pred_fallthru
      _
    // Predicated region
    $region14: #{tpu_custom_call.1} parent=1 // pred_check
      _
    $region15: #{tpu_custom_call.1} parent=1 // pred_check_branch
      %27 = sbr.rel (0) target = $region17
    $region16: #{tpu_custom_call.1} parent=1 // pred_region
      _
    $region17: #{tpu_custom_call.1} parent=1 // pred_fallthru
      _
    // Predicated region
    $region18: #{tpu_custom_call.1} parent=1 // pred_check
      _
    $region19: #{tpu_custom_call.1} parent=1 // pred_check_branch
      %29 = sbr.rel (0) target = $region21
    $region20: #{tpu_custom_call.1} parent=1 // pred_region
      _
    $region21: #{tpu_custom_call.1} parent=1 // pred_fallthru
      _
    // Predicated region
    $region22: #{tpu_custom_call.1} parent=1 // pred_check
      _
    $region23: #{tpu_custom_call.1} parent=1 // pred_check_branch
      %31 = sbr.rel (0) target = $region25
    $region24: #{tpu_custom_call.1} parent=1 // pred_region
      _
    $region25: #{tpu_custom_call.1} parent=1 // pred_fallthru
      _
    // Predicated region
    $region26: #{tpu_custom_call.1} parent=1 // pred_check
      _
    $region27: #{tpu_custom_call.1} parent=1 // pred_check_branch
      %33 = sbr.rel (0) target = $region29
    $region28: #{tpu_custom_call.1} parent=1 // pred_region
      _
    $region29: #{tpu_custom_call.1} parent=1 // pred_fallthru
      _
    // Predicated region
    $region30: #{tpu_custom_call.1} parent=1 // pred_check
      _
    $region31: #{tpu_custom_call.1} parent=1 // pred_check_branch
      %35 = sbr.rel (0) target = $region33
    $region32: #{tpu_custom_call.1} parent=1 // pred_region
      _
    $region33: #{tpu_custom_call.1} parent=1 // pred_fallthru
      _
    // Predicated region
    $region34: #{tpu_custom_call.1} parent=1 // pred_check
      _
    $region35: #{tpu_custom_call.1} parent=1 // pred_check_branch
      %37 = sbr.rel (0) target = $region37
    $region36: #{tpu_custom_call.1} parent=1 // pred_region
      _
    $region37: #{tpu_custom_call.1} parent=1 // pred_fallthru
      _
    // Predicated region
    $region38: #{tpu_custom_call.1} parent=1 // pred_check
      _
    $region39: #{tpu_custom_call.1} parent=1 // pred_check_branch
      %39 = sbr.rel (0) target = $region41
    $region40: #{tpu_custom_call.1} parent=1 // pred_region
      _
    $region41: #{tpu_custom_call.1} parent=1 // pred_fallthru
      _
    // Predicated region
    $region42: #{tpu_custom_call.1} parent=1 // pred_check
      _
    $region43: #{tpu_custom_call.1} parent=1 // pred_check_branch
      %41 = sbr.rel (0) target = $region45
    $region44: #{tpu_custom_call.1} parent=1 // pred_region
      _
    $region45: #{tpu_custom_call.1} parent=1 // pred_fallthru
      _
    // Predicated region
    $region46: #{tpu_custom_call.1} parent=1 // pred_check
      _
    $region47: #{tpu_custom_call.1} parent=1 // pred_check_branch
      %43 = sbr.rel (0) target = $region49
    $region48: #{tpu_custom_call.1} parent=1 // pred_region
      _
    $region49: #{tpu_custom_call.1} parent=1 // pred_fallthru
      _
    // Predicated region
    $region50: #{tpu_custom_call.1} parent=1 // pred_check
      _
    $region51: #{tpu_custom_call.1} parent=1 // pred_check_branch
      %45 = sbr.rel (0) target = $region53
    $region52: #{tpu_custom_call.1} parent=1 // pred_region
      _
    $region53: #{tpu_custom_call.1} parent=1 // pred_fallthru
      _
    // Predicated region
    $region54: #{tpu_custom_call.1} parent=1 // pred_check
      _
    $region55: #{tpu_custom_call.1} parent=1 // pred_check_branch
      %47 = sbr.rel (0) target = $region57
    $region56: #{tpu_custom_call.1} parent=1 // pred_region
      _
    $region57: #{tpu_custom_call.1} parent=1 // pred_fallthru
      _
    %49 = vst [vmem:[#allocation2] sm:$0xff] 0.0
    %50 = vst [vmem:[#allocation2 + $0x8] sm:$0xff] 0.0
    %51 = vst [vmem:[#allocation2 + $0x10] sm:$0xff] 0.0
    %52 = vst [vmem:[#allocation2 + $0x18] sm:$0xff] 0.0
    %53 = vst [vmem:[#allocation2 + $0x20] sm:$0xff] 0.0
    %54 = vst [vmem:[#allocation2 + $0x28] sm:$0xff] 0.0
    %55 = vst [vmem:[#allocation2 + $0x30] sm:$0xff] 0.0
    %56 = vst [vmem:[#allocation2 + $0x38] sm:$0xff] 0.0
    %57 = vst [vmem:[#allocation2 + $0x40] sm:$0xff] 0.0
    %58 = vst [vmem:[#allocation2 + $0x48] sm:$0xff] 0.0
    %59 = vst [vmem:[#allocation2 + $0x50] sm:$0xff] 0.0
    %60 = vst [vmem:[#allocation2 + $0x58] sm:$0xff] 0.0
    %v61 = vld [vmem:[%s0] sm:$0xff]
    %v62 = vld [vmem:[%s0 + $0x8] sm:$0xff]
    %v63 = vld [vmem:[%s0 + $0x10] sm:$0xff]
    %v64 = vld [vmem:[%s0 + $0x18] sm:$0xff]
    %65 = vst [vmem:[#allocation2] sm:$0xff] %v61
    %66 = vst [vmem:[#allocation2 + $0x8] sm:$0xff] %v62
    %67 = vst [vmem:[#allocation2 + $0x10] sm:$0xff] %v63
    %68 = vst [vmem:[#allocation2 + $0x18] sm:$0xff] %v64
    %v69 = vld [vmem:[%s2] sm:$0xff]
    %v70 = vld [vmem:[%s3] sm:$0xff]
    %v71 = vld [vmem:[%s5] sm:$0xff]
    %v72 = vld [vmem:[#allocation2] sm:$0xff]
    %v73 = vld [vmem:[#allocation2 + $0x8] sm:$0xff]
    %v74 = vld [vmem:[#allocation2 + $0x10] sm:$0xff]
    %v75 = vld [vmem:[#allocation2 + $0x18] sm:$0xff]
    %v76 = vadd.f32 %v72, %v73
    %v77 = vadd.f32 %v76, %v74
    %v78 = vadd.f32 %v77, %v75
    %79 = vadd.xlane.f32.xlu0 %v78
    %v80 = vpop.xlane.xlu0 %79
    %v81 = vmul.f32 %v72, %v72
    %v82 = vmul.f32 %v73, %v73
    %v83 = vmul.f32 %v74, %v74
    %v84 = vmul.f32 %v75, %v75
    %v85 = vadd.f32 %v81, %v82
    %v86 = vadd.f32 %v85, %v83
    %v87 = vadd.f32 %v86, %v84
    %88 = vadd.xlane.f32.xlu0 %v87
    %v89 = vpop.xlane.xlu0 %88
    %v90 = vmul.f32 %v80, 0.001953125
    %v91 = vmul.f32 %v89, 0.001953125
    %v92 = vmul.f32 %v90, %v90
    %v93 = vsub.f32 %v91, %v92
    %v94 = vmax.f32 %v93, 0.0
    %v95 = vadd.f32 %v94, 1e-05
    %v96 = vrsqrt.pop %v95
    %v97 = vmul.f32 %v69, %v96
    %v98 = vmul.f32 %v90, %v97
    %v99 = vsub.f32 %v70, %v98
    %101 = vset.pattern.permute.xlu0 0
    %102 = vperm.xlu0 %101, %v97
    %v103 = vpop.permute.xlu0 %102
    %v105 = vmul.f32 %v72, %v103
    %v106 = vmul.f32 %v73, %v103
    %v107 = vmul.f32 %v74, %v103
    %v108 = vmul.f32 %v75, %v103
    %110 = vset.pattern.permute.xlu0 0
    %111 = vperm.xlu0 %110, %v99
    %v112 = vpop.permute.xlu0 %111
    %v114 = vadd.f32 %v105, %v112
    %v115 = vadd.f32 %v106, %v112
    %v116 = vadd.f32 %v107, %v112
    %v117 = vadd.f32 %v108, %v112
    %v118 = vmax.f32 %v114, 0.0
    %v119 = vmax.f32 %v115, 0.0
    %v120 = vmax.f32 %v116, 0.0
    %v121 = vmax.f32 %v117, 0.0
    %122 = vrot.lane.b32.xlu0 %v118, 17
    %v123 = vpop.permute.xlu0 %122
    %124 = vrot.lane.b32.xlu0 %v119, 17
    %v125 = vpop.permute.xlu0 %124
    %126 = vrot.lane.b32.xlu0 %v120, 17
    %v127 = vpop.permute.xlu0 %126
    %128 = vrot.lane.b32.xlu0 %v121, 17
    %v129 = vpop.permute.xlu0 %128
    %v130 = vlaneseq
    %v131 = vand.u32 %v130, 127
    %vm132 = vcmp.lt.s32.totalorder %v131, 17
    %v133 = vsel %vm132, %v127, %v129
    %v134 = vsel %vm132, %v125, %v127
    %v135 = vsel %vm132, %v123, %v125
    %v136 = vsel %vm132, %v129, %v123
    %v137 = vld [vmem:[%s4] sm:$0xf]
    %v138 = vpack.c.bf16 %v136, %v136
    %v139 = vpack.c.bf16 %v135, %v135
    %v140 = vpack.c.bf16 %v134, %v134
    %v141 = vpack.c.bf16 %v133, %v133
    %vm142 = vcmask 64512
    %v144 = vsel %vm142, %v137, 0
    %vm146 = vcmask 1043456
    %v148 = vsel %vm146, %v138, 0
    %v151 = vsel %vm146, %v139, 0
    %v154 = vsel %vm146, %v140, 0
    %v157 = vsel %vm146, %v141, 0
    %159 = vmatprep.subr.bf16.mxu0 %v151
    %160 = vmatpush1.bf16.msra.mxu0 %v148
    %161 = vmatprep.subr.bf16.mxu0 0
    %162 = vmatpush1.bf16.msra.mxu0 0
    %163 = vmatprep.subr.bf16.mxu0 0
    %164 = vmatpush1.bf16.msra.mxu0 0
    %165 = vmatprep.subr.bf16.mxu0 0
    %166 = vmatpush1.bf16.msra.mxu0 0
    %167 = vmatprep.subr.bf16.mxu0 0
    %168 = vmatpush1.bf16.msra.mxu0 0
    %169 = vmatprep.subr.bf16.mxu0 0
    %170 = vmatpush1.bf16.msra.mxu0 0
    %171 = vmatprep.subr.bf16.mxu0 0
    %172 = vmatpush1.bf16.msra.mxu0 0
    %173 = vmatprep.subr.bf16.mxu0 0
    %174 = vmatpush1.bf16.msra.mxu0 0
    %175 = vmatprep.subr.bf16.mxu0 0
    %176 = vmatpush1.bf16.msra.mxu0 0
    %177 = vmatprep.subr.bf16.mxu0 0
    %178 = vmatpush1.bf16.msra.mxu0 0
    %179 = vmatprep.subr.bf16.mxu0 0
    %180 = vmatpush1.bf16.msra.mxu0 0
    %181 = vmatprep.subr.bf16.mxu0 0
    %182 = vmatpush1.bf16.msra.mxu0 0
    %183 = vmatprep.subr.bf16.mxu0 0
    %184 = vmatpush1.bf16.msra.mxu0 0
    %185 = vmatprep.subr.bf16.mxu0 0
    %186 = vmatpush1.bf16.msra.mxu0 0
    %187 = vmatprep.subr.bf16.mxu0 0
    %188 = vmatpush1.bf16.msra.mxu0 0
    %189 = vmatprep.subr.bf16.mxu0 0
    %190 = vmatpush1.bf16.msra.mxu0 0
    %191 = vmatprep.mubr.bf16.mxu0 0
    %192 = vmatmul.mubr.bf16.gmra.mrb[0].mxu0 %v144
    %v193 = vpop.f32.mrb[0].mxu0
    %v194 = vadd.f32 0.0, %v193
    %v195 = vpop.f32.mrb[0].mxu0
    %v196 = vadd.f32 0.0, %v195
    %v197 = vpop.f32.mrb[0].mxu0
    %v198 = vpop.f32.mrb[0].mxu0
    %199 = vdwg.mxu0
    %200 = vmatprep.subr.bf16.mxu0 %v157
    %201 = vmatpush1.bf16.msra.mxu0 %v154
    %202 = vmatprep.subr.bf16.mxu0 0
    %203 = vmatpush1.bf16.msra.mxu0 0
    %204 = vmatprep.subr.bf16.mxu0 0
    %205 = vmatpush1.bf16.msra.mxu0 0
    %206 = vmatprep.subr.bf16.mxu0 0
    %207 = vmatpush1.bf16.msra.mxu0 0
    %208 = vmatprep.subr.bf16.mxu0 0
    %209 = vmatpush1.bf16.msra.mxu0 0
    %210 = vmatprep.subr.bf16.mxu0 0
    %211 = vmatpush1.bf16.msra.mxu0 0
    %212 = vmatprep.subr.bf16.mxu0 0
    %213 = vmatpush1.bf16.msra.mxu0 0
    %214 = vmatprep.subr.bf16.mxu0 0
    %215 = vmatpush1.bf16.msra.mxu0 0
    %216 = vmatprep.subr.bf16.mxu0 0
    %217 = vmatpush1.bf16.msra.mxu0 0
    %218 = vmatprep.subr.bf16.mxu0 0
    %219 = vmatpush1.bf16.msra.mxu0 0
    %220 = vmatprep.subr.bf16.mxu0 0
    %221 = vmatpush1.bf16.msra.mxu0 0
    %222 = vmatprep.subr.bf16.mxu0 0
    %223 = vmatpush1.bf16.msra.mxu0 0
    %224 = vmatprep.subr.bf16.mxu0 0
    %225 = vmatpush1.bf16.msra.mxu0 0
    %226 = vmatprep.subr.bf16.mxu0 0
    %227 = vmatpush1.bf16.msra.mxu0 0
    %228 = vmatprep.subr.bf16.mxu0 0
    %229 = vmatpush1.bf16.msra.mxu0 0
    %230 = vmatprep.subr.bf16.mxu0 0
    %231 = vmatpush1.bf16.msra.mxu0 0
    %232 = vmatprep.mubr.bf16.mxu0 0
    %233 = vmatmul.mubr.bf16.gmra.mrb[0].mxu0 %v144
    %v234 = vpop.f32.mrb[0].mxu0
    %v235 = vadd.f32 0.0, %v234
    %v236 = vpop.f32.mrb[0].mxu0
    %v237 = vadd.f32 0.0, %v236
    %v238 = vpop.f32.mrb[0].mxu0
    %v239 = vpop.f32.mrb[0].mxu0
    %240 = vdwg.mxu0
    %v241 = vld [vmem:[%s1] ss:$8 sm:$0xf]
    %v243 = vlaneseq
    %v244 = vshrl.u32 %v243, 7
    %v245 = vsub.s32 0, %v244
    %v246 = vrot.slane %v241, %v245
    %v247 = vlaneseq
    %v248 = vshrl.u32 %v247, 7
    %v249 = vsub.s32 1, %v248
    %v250 = vrot.slane %v241, %v249
    %v251 = vlaneseq
    %v252 = vshrl.u32 %v251, 7
    %v253 = vsub.s32 2, %v252
    %v254 = vrot.slane %v241, %v253
    %v255 = vlaneseq
    %v256 = vshrl.u32 %v255, 7
    %v257 = vsub.s32 3, %v256
    %v258 = vrot.slane %v241, %v257
    %v263 = vmul.f32 %v194, %v246
    %v264 = vmul.f32 %v196, %v250
    %v265 = vmul.f32 %v235, %v254
    %v266 = vmul.f32 %v237, %v258
    %267 = vrot.lane.b32.xlu0 %v118, 16
    %v268 = vpop.permute.xlu0 %267
    %269 = vrot.lane.b32.xlu0 %v119, 16
    %v270 = vpop.permute.xlu0 %269
    %271 = vrot.lane.b32.xlu0 %v120, 16
    %v272 = vpop.permute.xlu0 %271
    %273 = vrot.lane.b32.xlu0 %v121, 16
    %v274 = vpop.permute.xlu0 %273
    %vm275 = vcmp.lt.s32.totalorder %v131, 16
    %v276 = vsel %vm275, %v272, %v274
    %v277 = vsel %vm275, %v270, %v272
    %v278 = vsel %vm275, %v268, %v270
    %v279 = vsel %vm275, %v274, %v268
    %s280 = scalar_lea.vmem %s4, 4
    %v281 = vld [vmem:[%s280] sm:$0xf]
    %v282 = vpack.c.bf16 %v279, %v279
    %v283 = vpack.c.bf16 %v278, %v278
    %v284 = vpack.c.bf16 %v277, %v277
    %v285 = vpack.c.bf16 %v276, %v276
    %v287 = vsel %vm142, %v281, 0
    %v290 = vsel %vm146, %v282, 0
    %v293 = vsel %vm146, %v283, 0
    %v296 = vsel %vm146, %v284, 0
    %v299 = vsel %vm146, %v285, 0
    %301 = vmatprep.subr.bf16.mxu0 %v293
    %302 = vmatpush1.bf16.msra.mxu0 %v290
    %303 = vmatprep.subr.bf16.mxu0 0
    %304 = vmatpush1.bf16.msra.mxu0 0
    %305 = vmatprep.subr.bf16.mxu0 0
    %306 = vmatpush1.bf16.msra.mxu0 0
    %307 = vmatprep.subr.bf16.mxu0 0
    %308 = vmatpush1.bf16.msra.mxu0 0
    %309 = vmatprep.subr.bf16.mxu0 0
    %310 = vmatpush1.bf16.msra.mxu0 0
    %311 = vmatprep.subr.bf16.mxu0 0
    %312 = vmatpush1.bf16.msra.mxu0 0
    %313 = vmatprep.subr.bf16.mxu0 0
    %314 = vmatpush1.bf16.msra.mxu0 0
    %315 = vmatprep.subr.bf16.mxu0 0
    %316 = vmatpush1.bf16.msra.mxu0 0
    %317 = vmatprep.subr.bf16.mxu0 0
    %318 = vmatpush1.bf16.msra.mxu0 0
    %319 = vmatprep.subr.bf16.mxu0 0
    %320 = vmatpush1.bf16.msra.mxu0 0
    %321 = vmatprep.subr.bf16.mxu0 0
    %322 = vmatpush1.bf16.msra.mxu0 0
    %323 = vmatprep.subr.bf16.mxu0 0
    %324 = vmatpush1.bf16.msra.mxu0 0
    %325 = vmatprep.subr.bf16.mxu0 0
    %326 = vmatpush1.bf16.msra.mxu0 0
    %327 = vmatprep.subr.bf16.mxu0 0
    %328 = vmatpush1.bf16.msra.mxu0 0
    %329 = vmatprep.subr.bf16.mxu0 0
    %330 = vmatpush1.bf16.msra.mxu0 0
    %331 = vmatprep.subr.bf16.mxu0 0
    %332 = vmatpush1.bf16.msra.mxu0 0
    %333 = vmatprep.mubr.bf16.mxu0 0
    %334 = vmatmul.mubr.bf16.gmra.mrb[0].mxu0 %v287
    %v335 = vpop.f32.mrb[0].mxu0
    %v336 = vadd.f32 0.0, %v335
    %v337 = vpop.f32.mrb[0].mxu0
    %v338 = vadd.f32 0.0, %v337
    %v339 = vpop.f32.mrb[0].mxu0
    %v340 = vpop.f32.mrb[0].mxu0
    %341 = vdwg.mxu0
    %342 = vmatprep.subr.bf16.mxu0 %v299
    %343 = vmatpush1.bf16.msra.mxu0 %v296
    %344 = vmatprep.subr.bf16.mxu0 0
    %345 = vmatpush1.bf16.msra.mxu0 0
    %346 = vmatprep.subr.bf16.mxu0 0
    %347 = vmatpush1.bf16.msra.mxu0 0
    %348 = vmatprep.subr.bf16.mxu0 0
    %349 = vmatpush1.bf16.msra.mxu0 0
    %350 = vmatprep.subr.bf16.mxu0 0
    %351 = vmatpush1.bf16.msra.mxu0 0
    %352 = vmatprep.subr.bf16.mxu0 0
    %353 = vmatpush1.bf16.msra.mxu0 0
    %354 = vmatprep.subr.bf16.mxu0 0
    %355 = vmatpush1.bf16.msra.mxu0 0
    %356 = vmatprep.subr.bf16.mxu0 0
    %357 = vmatpush1.bf16.msra.mxu0 0
    %358 = vmatprep.subr.bf16.mxu0 0
    %359 = vmatpush1.bf16.msra.mxu0 0
    %360 = vmatprep.subr.bf16.mxu0 0
    %361 = vmatpush1.bf16.msra.mxu0 0
    %362 = vmatprep.subr.bf16.mxu0 0
    %363 = vmatpush1.bf16.msra.mxu0 0
    %364 = vmatprep.subr.bf16.mxu0 0
    %365 = vmatpush1.bf16.msra.mxu0 0
    %366 = vmatprep.subr.bf16.mxu0 0
    %367 = vmatpush1.bf16.msra.mxu0 0
    %368 = vmatprep.subr.bf16.mxu0 0
    %369 = vmatpush1.bf16.msra.mxu0 0
    %370 = vmatprep.subr.bf16.mxu0 0
    %371 = vmatpush1.bf16.msra.mxu0 0
    %372 = vmatprep.subr.bf16.mxu0 0
    %373 = vmatpush1.bf16.msra.mxu0 0
    %374 = vmatprep.mubr.bf16.mxu0 0
    %375 = vmatmul.mubr.bf16.gmra.mrb[0].mxu0 %v287
    %v376 = vpop.f32.mrb[0].mxu0
    %v377 = vadd.f32 0.0, %v376
    %v378 = vpop.f32.mrb[0].mxu0
    %v379 = vadd.f32 0.0, %v378
    %v380 = vpop.f32.mrb[0].mxu0
    %v381 = vpop.f32.mrb[0].mxu0
    %382 = vdwg.mxu0
    %s383 = scalar_lea.vmem %s1, 1
    %v384 = vld [vmem:[%s383] ss:$8 sm:$0xf]
    %v386 = vlaneseq
    %v387 = vshrl.u32 %v386, 7
    %v388 = vsub.s32 0, %v387
    %v389 = vrot.slane %v384, %v388
    %v390 = vlaneseq
    %v391 = vshrl.u32 %v390, 7
    %v392 = vsub.s32 1, %v391
    %v393 = vrot.slane %v384, %v392
    %v394 = vlaneseq
    %v395 = vshrl.u32 %v394, 7
    %v396 = vsub.s32 2, %v395
    %v397 = vrot.slane %v384, %v396
    %v398 = vlaneseq
    %v399 = vshrl.u32 %v398, 7
    %v400 = vsub.s32 3, %v399
    %v401 = vrot.slane %v384, %v400
    %v406 = vmul.f32 %v336, %v389
    %v407 = vmul.f32 %v338, %v393
    %v408 = vmul.f32 %v377, %v397
    %v409 = vmul.f32 %v379, %v401
    %v410 = vadd.f32 %v263, %v406
    %v411 = vadd.f32 %v264, %v407
    %v412 = vadd.f32 %v265, %v408
    %v413 = vadd.f32 %v266, %v409
    %414 = vrot.lane.b32.xlu0 %v118, 15
    %v415 = vpop.permute.xlu0 %414
    %416 = vrot.lane.b32.xlu0 %v119, 15
    %v417 = vpop.permute.xlu0 %416
    %418 = vrot.lane.b32.xlu0 %v120, 15
    %v419 = vpop.permute.xlu0 %418
    %420 = vrot.lane.b32.xlu0 %v121, 15
    %v421 = vpop.permute.xlu0 %420
    %vm422 = vcmp.lt.s32.totalorder %v131, 15
    %v423 = vsel %vm422, %v419, %v421
    %v424 = vsel %vm422, %v417, %v419
    %v425 = vsel %vm422, %v415, %v417
    %v426 = vsel %vm422, %v421, %v415
    %s427 = scalar_lea.vmem %s4, 8
    %v428 = vld [vmem:[%s427] sm:$0xf]
    %v429 = vpack.c.bf16 %v426, %v426
    %v430 = vpack.c.bf16 %v425, %v425
    %v431 = vpack.c.bf16 %v424, %v424
    %v432 = vpack.c.bf16 %v423, %v423
    %v434 = vsel %vm142, %v428, 0
    %v437 = vsel %vm146, %v429, 0
    %v440 = vsel %vm146, %v430, 0
    %v443 = vsel %vm146, %v431, 0
    %v446 = vsel %vm146, %v432, 0
    %448 = vmatprep.subr.bf16.mxu0 %v440
    %449 = vmatpush1.bf16.msra.mxu0 %v437
    %450 = vmatprep.subr.bf16.mxu0 0
    %451 = vmatpush1.bf16.msra.mxu0 0
    %452 = vmatprep.subr.bf16.mxu0 0
    %453 = vmatpush1.bf16.msra.mxu0 0
    %454 = vmatprep.subr.bf16.mxu0 0
    %455 = vmatpush1.bf16.msra.mxu0 0
    %456 = vmatprep.subr.bf16.mxu0 0
    %457 = vmatpush1.bf16.msra.mxu0 0
    %458 = vmatprep.subr.bf16.mxu0 0
    %459 = vmatpush1.bf16.msra.mxu0 0
    %460 = vmatprep.subr.bf16.mxu0 0
    %461 = vmatpush1.bf16.msra.mxu0 0
    %462 = vmatprep.subr.bf16.mxu0 0
    %463 = vmatpush1.bf16.msra.mxu0 0
    %464 = vmatprep.subr.bf16.mxu0 0
    %465 = vmatpush1.bf16.msra.mxu0 0
    %466 = vmatprep.subr.bf16.mxu0 0
    %467 = vmatpush1.bf16.msra.mxu0 0
    %468 = vmatprep.subr.bf16.mxu0 0
    %469 = vmatpush1.bf16.msra.mxu0 0
    %470 = vmatprep.subr.bf16.mxu0 0
    %471 = vmatpush1.bf16.msra.mxu0 0
    %472 = vmatprep.subr.bf16.mxu0 0
    %473 = vmatpush1.bf16.msra.mxu0 0
    %474 = vmatprep.subr.bf16.mxu0 0
    %475 = vmatpush1.bf16.msra.mxu0 0
    %476 = vmatprep.subr.bf16.mxu0 0
    %477 = vmatpush1.bf16.msra.mxu0 0
    %478 = vmatprep.subr.bf16.mxu0 0
    %479 = vmatpush1.bf16.msra.mxu0 0
    %480 = vmatprep.mubr.bf16.mxu0 0
    %481 = vmatmul.mubr.bf16.gmra.mrb[0].mxu0 %v434
    %v482 = vpop.f32.mrb[0].mxu0
    %v483 = vadd.f32 0.0, %v482
    %v484 = vpop.f32.mrb[0].mxu0
    %v485 = vadd.f32 0.0, %v484
    %v486 = vpop.f32.mrb[0].mxu0
    %v487 = vpop.f32.mrb[0].mxu0
    %488 = vdwg.mxu0
    %489 = vmatprep.subr.bf16.mxu0 %v446
    %490 = vmatpush1.bf16.msra.mxu0 %v443
    %491 = vmatprep.subr.bf16.mxu0 0
    %492 = vmatpush1.bf16.msra.mxu0 0
    %493 = vmatprep.subr.bf16.mxu0 0
    %494 = vmatpush1.bf16.msra.mxu0 0
    %495 = vmatprep.subr.bf16.mxu0 0
    %496 = vmatpush1.bf16.msra.mxu0 0
    %497 = vmatprep.subr.bf16.mxu0 0
    %498 = vmatpush1.bf16.msra.mxu0 0
    %499 = vmatprep.subr.bf16.mxu0 0
    %500 = vmatpush1.bf16.msra.mxu0 0
    %501 = vmatprep.subr.bf16.mxu0 0
    %502 = vmatpush1.bf16.msra.mxu0 0
    %503 = vmatprep.subr.bf16.mxu0 0
    %504 = vmatpush1.bf16.msra.mxu0 0
    %505 = vmatprep.subr.bf16.mxu0 0
    %506 = vmatpush1.bf16.msra.mxu0 0
    %507 = vmatprep.subr.bf16.mxu0 0
    %508 = vmatpush1.bf16.msra.mxu0 0
    %509 = vmatprep.subr.bf16.mxu0 0
    %510 = vmatpush1.bf16.msra.mxu0 0
    %511 = vmatprep.subr.bf16.mxu0 0
    %512 = vmatpush1.bf16.msra.mxu0 0
    %513 = vmatprep.subr.bf16.mxu0 0
    %514 = vmatpush1.bf16.msra.mxu0 0
    %515 = vmatprep.subr.bf16.mxu0 0
    %516 = vmatpush1.bf16.msra.mxu0 0
    %517 = vmatprep.subr.bf16.mxu0 0
    %518 = vmatpush1.bf16.msra.mxu0 0
    %519 = vmatprep.subr.bf16.mxu0 0
    %520 = vmatpush1.bf16.msra.mxu0 0
    %521 = vmatprep.mubr.bf16.mxu0 0
    %522 = vmatmul.mubr.bf16.gmra.mrb[0].mxu0 %v434
    %v523 = vpop.f32.mrb[0].mxu0
    %v524 = vadd.f32 0.0, %v523
    %v525 = vpop.f32.mrb[0].mxu0
    %v526 = vadd.f32 0.0, %v525
    %v527 = vpop.f32.mrb[0].mxu0
    %v528 = vpop.f32.mrb[0].mxu0
    %529 = vdwg.mxu0
    %s530 = scalar_lea.vmem %s1, 2
    %v531 = vld [vmem:[%s530] ss:$8 sm:$0xf]
    %v533 = vlaneseq
    %v534 = vshrl.u32 %v533, 7
    %v535 = vsub.s32 0, %v534
    %v536 = vrot.slane %v531, %v535
    %v537 = vlaneseq
    %v538 = vshrl.u32 %v537, 7
    %v539 = vsub.s32 1, %v538
    %v540 = vrot.slane %v531, %v539
    %v541 = vlaneseq
    %v542 = vshrl.u32 %v541, 7
    %v543 = vsub.s32 2, %v542
    %v544 = vrot.slane %v531, %v543
    %v545 = vlaneseq
    %v546 = vshrl.u32 %v545, 7
    %v547 = vsub.s32 3, %v546
    %v548 = vrot.slane %v531, %v547
    %v553 = vmul.f32 %v483, %v536
    %v554 = vmul.f32 %v485, %v540
    %v555 = vmul.f32 %v524, %v544
    %v556 = vmul.f32 %v526, %v548
    %v557 = vadd.f32 %v410, %v553
    %v558 = vadd.f32 %v411, %v554
    %v559 = vadd.f32 %v412, %v555
    %v560 = vadd.f32 %v413, %v556
    %561 = vrot.lane.b32.xlu0 %v118, 1
    %v562 = vpop.permute.xlu0 %561
    %563 = vrot.lane.b32.xlu0 %v119, 1
    %v564 = vpop.permute.xlu0 %563
    %565 = vrot.lane.b32.xlu0 %v120, 1
    %v566 = vpop.permute.xlu0 %565
    %567 = vrot.lane.b32.xlu0 %v121, 1
    %v568 = vpop.permute.xlu0 %567
    %vm569 = vcmp.lt.s32.totalorder %v131, 1
    %v570 = vsel %vm569, %v566, %v568
    %v571 = vsel %vm569, %v564, %v566
    %v572 = vsel %vm569, %v562, %v564
    %v573 = vsel %vm569, %v568, %v562
    %s574 = scalar_lea.vmem %s4, 12
    %v575 = vld [vmem:[%s574] sm:$0xf]
    %v576 = vpack.c.bf16 %v573, %v573
    %v577 = vpack.c.bf16 %v572, %v572
    %v578 = vpack.c.bf16 %v571, %v571
    %v579 = vpack.c.bf16 %v570, %v570
    %v581 = vsel %vm142, %v575, 0
    %v584 = vsel %vm146, %v576, 0
    %v587 = vsel %vm146, %v577, 0
    %v590 = vsel %vm146, %v578, 0
    %v593 = vsel %vm146, %v579, 0
    %595 = vmatprep.subr.bf16.mxu0 %v587
    %596 = vmatpush1.bf16.msra.mxu0 %v584
    %597 = vmatprep.subr.bf16.mxu0 0
    %598 = vmatpush1.bf16.msra.mxu0 0
    %599 = vmatprep.subr.bf16.mxu0 0
    %600 = vmatpush1.bf16.msra.mxu0 0
    %601 = vmatprep.subr.bf16.mxu0 0
    %602 = vmatpush1.bf16.msra.mxu0 0
    %603 = vmatprep.subr.bf16.mxu0 0
    %604 = vmatpush1.bf16.msra.mxu0 0
    %605 = vmatprep.subr.bf16.mxu0 0
    %606 = vmatpush1.bf16.msra.mxu0 0
    %607 = vmatprep.subr.bf16.mxu0 0
    %608 = vmatpush1.bf16.msra.mxu0 0
    %609 = vmatprep.subr.bf16.mxu0 0
    %610 = vmatpush1.bf16.msra.mxu0 0
    %611 = vmatprep.subr.bf16.mxu0 0
    %612 = vmatpush1.bf16.msra.mxu0 0
    %613 = vmatprep.subr.bf16.mxu0 0
    %614 = vmatpush1.bf16.msra.mxu0 0
    %615 = vmatprep.subr.bf16.mxu0 0
    %616 = vmatpush1.bf16.msra.mxu0 0
    %617 = vmatprep.subr.bf16.mxu0 0
    %618 = vmatpush1.bf16.msra.mxu0 0
    %619 = vmatprep.subr.bf16.mxu0 0
    %620 = vmatpush1.bf16.msra.mxu0 0
    %621 = vmatprep.subr.bf16.mxu0 0
    %622 = vmatpush1.bf16.msra.mxu0 0
    %623 = vmatprep.subr.bf16.mxu0 0
    %624 = vmatpush1.bf16.msra.mxu0 0
    %625 = vmatprep.subr.bf16.mxu0 0
    %626 = vmatpush1.bf16.msra.mxu0 0
    %627 = vmatprep.mubr.bf16.mxu0 0
    %628 = vmatmul.mubr.bf16.gmra.mrb[0].mxu0 %v581
    %v629 = vpop.f32.mrb[0].mxu0
    %v630 = vadd.f32 0.0, %v629
    %v631 = vpop.f32.mrb[0].mxu0
    %v632 = vadd.f32 0.0, %v631
    %v633 = vpop.f32.mrb[0].mxu0
    %v634 = vpop.f32.mrb[0].mxu0
    %635 = vdwg.mxu0
    %636 = vmatprep.subr.bf16.mxu0 %v593
    %637 = vmatpush1.bf16.msra.mxu0 %v590
    %638 = vmatprep.subr.bf16.mxu0 0
    %639 = vmatpush1.bf16.msra.mxu0 0
    %640 = vmatprep.subr.bf16.mxu0 0
    %641 = vmatpush1.bf16.msra.mxu0 0
    %642 = vmatprep.subr.bf16.mxu0 0
    %643 = vmatpush1.bf16.msra.mxu0 0
    %644 = vmatprep.subr.bf16.mxu0 0
    %645 = vmatpush1.bf16.msra.mxu0 0
    %646 = vmatprep.subr.bf16.mxu0 0
    %647 = vmatpush1.bf16.msra.mxu0 0
    %648 = vmatprep.subr.bf16.mxu0 0
    %649 = vmatpush1.bf16.msra.mxu0 0
    %650 = vmatprep.subr.bf16.mxu0 0
    %651 = vmatpush1.bf16.msra.mxu0 0
    %652 = vmatprep.subr.bf16.mxu0 0
    %653 = vmatpush1.bf16.msra.mxu0 0
    %654 = vmatprep.subr.bf16.mxu0 0
    %655 = vmatpush1.bf16.msra.mxu0 0
    %656 = vmatprep.subr.bf16.mxu0 0
    %657 = vmatpush1.bf16.msra.mxu0 0
    %658 = vmatprep.subr.bf16.mxu0 0
    %659 = vmatpush1.bf16.msra.mxu0 0
    %660 = vmatprep.subr.bf16.mxu0 0
    %661 = vmatpush1.bf16.msra.mxu0 0
    %662 = vmatprep.subr.bf16.mxu0 0
    %663 = vmatpush1.bf16.msra.mxu0 0
    %664 = vmatprep.subr.bf16.mxu0 0
    %665 = vmatpush1.bf16.msra.mxu0 0
    %666 = vmatprep.subr.bf16.mxu0 0
    %667 = vmatpush1.bf16.msra.mxu0 0
    %668 = vmatprep.mubr.bf16.mxu0 0
    %669 = vmatmul.mubr.bf16.gmra.mrb[0].mxu0 %v581
    %v670 = vpop.f32.mrb[0].mxu0
    %v671 = vadd.f32 0.0, %v670
    %v672 = vpop.f32.mrb[0].mxu0
    %v673 = vadd.f32 0.0, %v672
    %v674 = vpop.f32.mrb[0].mxu0
    %v675 = vpop.f32.mrb[0].mxu0
    %676 = vdwg.mxu0
    %s677 = scalar_lea.vmem %s1, 3
    %v678 = vld [vmem:[%s677] ss:$8 sm:$0xf]
    %v680 = vlaneseq
    %v681 = vshrl.u32 %v680, 7
    %v682 = vsub.s32 0, %v681
    %v683 = vrot.slane %v678, %v682
    %v684 = vlaneseq
    %v685 = vshrl.u32 %v684, 7
    %v686 = vsub.s32 1, %v685
    %v687 = vrot.slane %v678, %v686
    %v688 = vlaneseq
    %v689 = vshrl.u32 %v688, 7
    %v690 = vsub.s32 2, %v689
    %v691 = vrot.slane %v678, %v690
    %v692 = vlaneseq
    %v693 = vshrl.u32 %v692, 7
    %v694 = vsub.s32 3, %v693
    %v695 = vrot.slane %v678, %v694
    %v700 = vmul.f32 %v630, %v683
    %v701 = vmul.f32 %v632, %v687
    %v702 = vmul.f32 %v671, %v691
    %v703 = vmul.f32 %v673, %v695
    %v704 = vadd.f32 %v557, %v700
    %v705 = vadd.f32 %v558, %v701
    %v706 = vadd.f32 %v559, %v702
    %v707 = vadd.f32 %v560, %v703
    %s708 = scalar_lea.vmem %s4, 16
    %v709 = vld [vmem:[%s708] sm:$0xf]
    %v710 = vpack.c.bf16 %v118, %v118
    %v711 = vpack.c.bf16 %v119, %v119
    %v712 = vpack.c.bf16 %v120, %v120
    %v713 = vpack.c.bf16 %v121, %v121
    %v715 = vsel %vm142, %v709, 0
    %v718 = vsel %vm146, %v710, 0
    %v721 = vsel %vm146, %v711, 0
    %v724 = vsel %vm146, %v712, 0
    %v727 = vsel %vm146, %v713, 0
    %729 = vmatprep.subr.bf16.mxu0 %v721
    %730 = vmatpush1.bf16.msra.mxu0 %v718
    %731 = vmatprep.subr.bf16.mxu0 0
    %732 = vmatpush1.bf16.msra.mxu0 0
    %733 = vmatprep.subr.bf16.mxu0 0
    %734 = vmatpush1.bf16.msra.mxu0 0
    %735 = vmatprep.subr.bf16.mxu0 0
    %736 = vmatpush1.bf16.msra.mxu0 0
    %737 = vmatprep.subr.bf16.mxu0 0
    %738 = vmatpush1.bf16.msra.mxu0 0
    %739 = vmatprep.subr.bf16.mxu0 0
    %740 = vmatpush1.bf16.msra.mxu0 0
    %741 = vmatprep.subr.bf16.mxu0 0
    %742 = vmatpush1.bf16.msra.mxu0 0
    %743 = vmatprep.subr.bf16.mxu0 0
    %744 = vmatpush1.bf16.msra.mxu0 0
    %745 = vmatprep.subr.bf16.mxu0 0
    %746 = vmatpush1.bf16.msra.mxu0 0
    %747 = vmatprep.subr.bf16.mxu0 0
    %748 = vmatpush1.bf16.msra.mxu0 0
    %749 = vmatprep.subr.bf16.mxu0 0
    %750 = vmatpush1.bf16.msra.mxu0 0
    %751 = vmatprep.subr.bf16.mxu0 0
    %752 = vmatpush1.bf16.msra.mxu0 0
    %753 = vmatprep.subr.bf16.mxu0 0
    %754 = vmatpush1.bf16.msra.mxu0 0
    %755 = vmatprep.subr.bf16.mxu0 0
    %756 = vmatpush1.bf16.msra.mxu0 0
    %757 = vmatprep.subr.bf16.mxu0 0
    %758 = vmatpush1.bf16.msra.mxu0 0
    %759 = vmatprep.subr.bf16.mxu0 0
    %760 = vmatpush1.bf16.msra.mxu0 0
    %761 = vmatprep.mubr.bf16.mxu0 0
    %762 = vmatmul.mubr.bf16.gmra.mrb[0].mxu0 %v715
    %v763 = vpop.f32.mrb[0].mxu0
    %v764 = vadd.f32 0.0, %v763
    %v765 = vpop.f32.mrb[0].mxu0
    %v766 = vadd.f32 0.0, %v765
    %v767 = vpop.f32.mrb[0].mxu0
    %v768 = vpop.f32.mrb[0].mxu0
    %769 = vdwg.mxu0
    %770 = vmatprep.subr.bf16.mxu0 %v727
    %771 = vmatpush1.bf16.msra.mxu0 %v724
    %772 = vmatprep.subr.bf16.mxu0 0
    %773 = vmatpush1.bf16.msra.mxu0 0
    %774 = vmatprep.subr.bf16.mxu0 0
    %775 = vmatpush1.bf16.msra.mxu0 0
    %776 = vmatprep.subr.bf16.mxu0 0
    %777 = vmatpush1.bf16.msra.mxu0 0
    %778 = vmatprep.subr.bf16.mxu0 0
    %779 = vmatpush1.bf16.msra.mxu0 0
    %780 = vmatprep.subr.bf16.mxu0 0
    %781 = vmatpush1.bf16.msra.mxu0 0
    %782 = vmatprep.subr.bf16.mxu0 0
    %783 = vmatpush1.bf16.msra.mxu0 0
    %784 = vmatprep.subr.bf16.mxu0 0
    %785 = vmatpush1.bf16.msra.mxu0 0
    %786 = vmatprep.subr.bf16.mxu0 0
    %787 = vmatpush1.bf16.msra.mxu0 0
    %788 = vmatprep.subr.bf16.mxu0 0
    %789 = vmatpush1.bf16.msra.mxu0 0
    %790 = vmatprep.subr.bf16.mxu0 0
    %791 = vmatpush1.bf16.msra.mxu0 0
    %792 = vmatprep.subr.bf16.mxu0 0
    %793 = vmatpush1.bf16.msra.mxu0 0
    %794 = vmatprep.subr.bf16.mxu0 0
    %795 = vmatpush1.bf16.msra.mxu0 0
    %796 = vmatprep.subr.bf16.mxu0 0
    %797 = vmatpush1.bf16.msra.mxu0 0
    %798 = vmatprep.subr.bf16.mxu0 0
    %799 = vmatpush1.bf16.msra.mxu0 0
    %800 = vmatprep.subr.bf16.mxu0 0
    %801 = vmatpush1.bf16.msra.mxu0 0
    %802 = vmatprep.mubr.bf16.mxu0 0
    %803 = vmatmul.mubr.bf16.gmra.mrb[0].mxu0 %v715
    %v804 = vpop.f32.mrb[0].mxu0
    %v805 = vadd.f32 0.0, %v804
    %v806 = vpop.f32.mrb[0].mxu0
    %v807 = vadd.f32 0.0, %v806
    %v808 = vpop.f32.mrb[0].mxu0
    %v809 = vpop.f32.mrb[0].mxu0
    %810 = vdwg.mxu0
    %v811 = vadd.f32 %v704, %v764
    %v812 = vadd.f32 %v705, %v766
    %v813 = vadd.f32 %v706, %v805
    %v814 = vadd.f32 %v707, %v807
    %815 = vrot.lane.b32.xlu0 %v118, 127
    %v816 = vpop.permute.xlu0 %815
    %817 = vrot.lane.b32.xlu0 %v119, 127
    %v818 = vpop.permute.xlu0 %817
    %819 = vrot.lane.b32.xlu0 %v120, 127
    %v820 = vpop.permute.xlu0 %819
    %821 = vrot.lane.b32.xlu0 %v121, 127
    %v822 = vpop.permute.xlu0 %821
    %vm823 = vcmp.lt.s32.totalorder %v131, 127
    %v824 = vsel %vm823, %v820, %v822
    %v825 = vsel %vm823, %v818, %v820
    %v826 = vsel %vm823, %v816, %v818
    %v827 = vsel %vm823, %v822, %v816
    %s828 = scalar_lea.vmem %s4, 20
    %v829 = vld [vmem:[%s828] sm:$0xf]
    %v830 = vpack.c.bf16 %v826, %v826
    %v831 = vpack.c.bf16 %v825, %v825
    %v832 = vpack.c.bf16 %v824, %v824
    %v833 = vpack.c.bf16 %v827, %v827
    %v835 = vsel %vm142, %v829, 0
    %v838 = vsel %vm146, %v830, 0
    %v841 = vsel %vm146, %v831, 0
    %v844 = vsel %vm146, %v832, 0
    %v847 = vsel %vm146, %v833, 0
    %849 = vmatprep.subr.bf16.mxu0 %v841
    %850 = vmatpush1.bf16.msra.mxu0 %v838
    %851 = vmatprep.subr.bf16.mxu0 0
    %852 = vmatpush1.bf16.msra.mxu0 0
    %853 = vmatprep.subr.bf16.mxu0 0
    %854 = vmatpush1.bf16.msra.mxu0 0
    %855 = vmatprep.subr.bf16.mxu0 0
    %856 = vmatpush1.bf16.msra.mxu0 0
    %857 = vmatprep.subr.bf16.mxu0 0
    %858 = vmatpush1.bf16.msra.mxu0 0
    %859 = vmatprep.subr.bf16.mxu0 0
    %860 = vmatpush1.bf16.msra.mxu0 0
    %861 = vmatprep.subr.bf16.mxu0 0
    %862 = vmatpush1.bf16.msra.mxu0 0
    %863 = vmatprep.subr.bf16.mxu0 0
    %864 = vmatpush1.bf16.msra.mxu0 0
    %865 = vmatprep.subr.bf16.mxu0 0
    %866 = vmatpush1.bf16.msra.mxu0 0
    %867 = vmatprep.subr.bf16.mxu0 0
    %868 = vmatpush1.bf16.msra.mxu0 0
    %869 = vmatprep.subr.bf16.mxu0 0
    %870 = vmatpush1.bf16.msra.mxu0 0
    %871 = vmatprep.subr.bf16.mxu0 0
    %872 = vmatpush1.bf16.msra.mxu0 0
    %873 = vmatprep.subr.bf16.mxu0 0
    %874 = vmatpush1.bf16.msra.mxu0 0
    %875 = vmatprep.subr.bf16.mxu0 0
    %876 = vmatpush1.bf16.msra.mxu0 0
    %877 = vmatprep.subr.bf16.mxu0 0
    %878 = vmatpush1.bf16.msra.mxu0 0
    %879 = vmatprep.subr.bf16.mxu0 0
    %880 = vmatpush1.bf16.msra.mxu0 0
    %881 = vmatprep.mubr.bf16.mxu0 0
    %882 = vmatmul.mubr.bf16.gmra.mrb[0].mxu0 %v835
    %v883 = vpop.f32.mrb[0].mxu0
    %v884 = vadd.f32 0.0, %v883
    %v885 = vpop.f32.mrb[0].mxu0
    %v886 = vadd.f32 0.0, %v885
    %v887 = vpop.f32.mrb[0].mxu0
    %v888 = vpop.f32.mrb[0].mxu0
    %889 = vdwg.mxu0
    %890 = vmatprep.subr.bf16.mxu0 %v847
    %891 = vmatpush1.bf16.msra.mxu0 %v844
    %892 = vmatprep.subr.bf16.mxu0 0
    %893 = vmatpush1.bf16.msra.mxu0 0
    %894 = vmatprep.subr.bf16.mxu0 0
    %895 = vmatpush1.bf16.msra.mxu0 0
    %896 = vmatprep.subr.bf16.mxu0 0
    %897 = vmatpush1.bf16.msra.mxu0 0
    %898 = vmatprep.subr.bf16.mxu0 0
    %899 = vmatpush1.bf16.msra.mxu0 0
    %900 = vmatprep.subr.bf16.mxu0 0
    %901 = vmatpush1.bf16.msra.mxu0 0
    %902 = vmatprep.subr.bf16.mxu0 0
    %903 = vmatpush1.bf16.msra.mxu0 0
    %904 = vmatprep.subr.bf16.mxu0 0
    %905 = vmatpush1.bf16.msra.mxu0 0
    %906 = vmatprep.subr.bf16.mxu0 0
    %907 = vmatpush1.bf16.msra.mxu0 0
    %908 = vmatprep.subr.bf16.mxu0 0
    %909 = vmatpush1.bf16.msra.mxu0 0
    %910 = vmatprep.subr.bf16.mxu0 0
    %911 = vmatpush1.bf16.msra.mxu0 0
    %912 = vmatprep.subr.bf16.mxu0 0
    %913 = vmatpush1.bf16.msra.mxu0 0
    %914 = vmatprep.subr.bf16.mxu0 0
    %915 = vmatpush1.bf16.msra.mxu0 0
    %916 = vmatprep.subr.bf16.mxu0 0
    %917 = vmatpush1.bf16.msra.mxu0 0
    %918 = vmatprep.subr.bf16.mxu0 0
    %919 = vmatpush1.bf16.msra.mxu0 0
    %920 = vmatprep.subr.bf16.mxu0 0
    %921 = vmatpush1.bf16.msra.mxu0 0
    %922 = vmatprep.mubr.bf16.mxu0 0
    %923 = vmatmul.mubr.bf16.gmra.mrb[0].mxu0 %v835
    %v924 = vpop.f32.mrb[0].mxu0
    %v925 = vadd.f32 0.0, %v924
    %v926 = vpop.f32.mrb[0].mxu0
    %v927 = vadd.f32 0.0, %v926
    %v928 = vpop.f32.mrb[0].mxu0
    %v929 = vpop.f32.mrb[0].mxu0
    %930 = vdwg.mxu0
    %s931 = scalar_lea.vmem %s1, 5
    %v932 = vld [vmem:[%s931] ss:$8 sm:$0xf]
    %v934 = vlaneseq
    %v935 = vshrl.u32 %v934, 7
    %v936 = vsub.s32 0, %v935
    %v937 = vrot.slane %v932, %v936
    %v938 = vlaneseq
    %v939 = vshrl.u32 %v938, 7
    %v940 = vsub.s32 1, %v939
    %v941 = vrot.slane %v932, %v940
    %v942 = vlaneseq
    %v943 = vshrl.u32 %v942, 7
    %v944 = vsub.s32 2, %v943
    %v945 = vrot.slane %v932, %v944
    %v946 = vlaneseq
    %v947 = vshrl.u32 %v946, 7
    %v948 = vsub.s32 3, %v947
    %v949 = vrot.slane %v932, %v948
    %v954 = vmul.f32 %v884, %v937
    %v955 = vmul.f32 %v886, %v941
    %v956 = vmul.f32 %v925, %v945
    %v957 = vmul.f32 %v927, %v949
    %v958 = vadd.f32 %v811, %v954
    %v959 = vadd.f32 %v812, %v955
    %v960 = vadd.f32 %v813, %v956
    %v961 = vadd.f32 %v814, %v957
    %962 = vrot.lane.b32.xlu0 %v118, 113
    %v963 = vpop.permute.xlu0 %962
    %964 = vrot.lane.b32.xlu0 %v119, 113
    %v965 = vpop.permute.xlu0 %964
    %966 = vrot.lane.b32.xlu0 %v120, 113
    %v967 = vpop.permute.xlu0 %966
    %968 = vrot.lane.b32.xlu0 %v121, 113
    %v969 = vpop.permute.xlu0 %968
    %vm970 = vcmp.lt.s32.totalorder %v131, 113
    %v971 = vsel %vm970, %v967, %v969
    %v972 = vsel %vm970, %v965, %v967
    %v973 = vsel %vm970, %v963, %v965
    %v974 = vsel %vm970, %v969, %v963
    %s975 = scalar_lea.vmem %s4, 24
    %v976 = vld [vmem:[%s975] sm:$0xf]
    %v977 = vpack.c.bf16 %v973, %v973
    %v978 = vpack.c.bf16 %v972, %v972
    %v979 = vpack.c.bf16 %v971, %v971
    %v980 = vpack.c.bf16 %v974, %v974
    %v982 = vsel %vm142, %v976, 0
    %v985 = vsel %vm146, %v977, 0
    %v988 = vsel %vm146, %v978, 0
    %v991 = vsel %vm146, %v979, 0
    %v994 = vsel %vm146, %v980, 0
    %996 = vmatprep.subr.bf16.mxu0 %v988
    %997 = vmatpush1.bf16.msra.mxu0 %v985
    %998 = vmatprep.subr.bf16.mxu0 0
    %999 = vmatpush1.bf16.msra.mxu0 0
    %1000 = vmatprep.subr.bf16.mxu0 0
    %1001 = vmatpush1.bf16.msra.mxu0 0
    %1002 = vmatprep.subr.bf16.mxu0 0
    %1003 = vmatpush1.bf16.msra.mxu0 0
    %1004 = vmatprep.subr.bf16.mxu0 0
    %1005 = vmatpush1.bf16.msra.mxu0 0
    %1006 = vmatprep.subr.bf16.mxu0 0
    %1007 = vmatpush1.bf16.msra.mxu0 0
    %1008 = vmatprep.subr.bf16.mxu0 0
    %1009 = vmatpush1.bf16.msra.mxu0 0
    %1010 = vmatprep.subr.bf16.mxu0 0
    %1011 = vmatpush1.bf16.msra.mxu0 0
    %1012 = vmatprep.subr.bf16.mxu0 0
    %1013 = vmatpush1.bf16.msra.mxu0 0
    %1014 = vmatprep.subr.bf16.mxu0 0
    %1015 = vmatpush1.bf16.msra.mxu0 0
    %1016 = vmatprep.subr.bf16.mxu0 0
    %1017 = vmatpush1.bf16.msra.mxu0 0
    %1018 = vmatprep.subr.bf16.mxu0 0
    %1019 = vmatpush1.bf16.msra.mxu0 0
    %1020 = vmatprep.subr.bf16.mxu0 0
    %1021 = vmatpush1.bf16.msra.mxu0 0
    %1022 = vmatprep.subr.bf16.mxu0 0
    %1023 = vmatpush1.bf16.msra.mxu0 0
    %1024 = vmatprep.subr.bf16.mxu0 0
    %1025 = vmatpush1.bf16.msra.mxu0 0
    %1026 = vmatprep.subr.bf16.mxu0 0
    %1027 = vmatpush1.bf16.msra.mxu0 0
    %1028 = vmatprep.mubr.bf16.mxu0 0
    %1029 = vmatmul.mubr.bf16.gmra.mrb[0].mxu0 %v982
    %v1030 = vpop.f32.mrb[0].mxu0
    %v1031 = vadd.f32 0.0, %v1030
    %v1032 = vpop.f32.mrb[0].mxu0
    %v1033 = vadd.f32 0.0, %v1032
    %v1034 = vpop.f32.mrb[0].mxu0
    %v1035 = vpop.f32.mrb[0].mxu0
    %1036 = vdwg.mxu0
    %1037 = vmatprep.subr.bf16.mxu0 %v994
    %1038 = vmatpush1.bf16.msra.mxu0 %v991
    %1039 = vmatprep.subr.bf16.mxu0 0
    %1040 = vmatpush1.bf16.msra.mxu0 0
    %1041 = vmatprep.subr.bf16.mxu0 0
    %1042 = vmatpush1.bf16.msra.mxu0 0
    %1043 = vmatprep.subr.bf16.mxu0 0
    %1044 = vmatpush1.bf16.msra.mxu0 0
    %1045 = vmatprep.subr.bf16.mxu0 0
    %1046 = vmatpush1.bf16.msra.mxu0 0
    %1047 = vmatprep.subr.bf16.mxu0 0
    %1048 = vmatpush1.bf16.msra.mxu0 0
    %1049 = vmatprep.subr.bf16.mxu0 0
    %1050 = vmatpush1.bf16.msra.mxu0 0
    %1051 = vmatprep.subr.bf16.mxu0 0
    %1052 = vmatpush1.bf16.msra.mxu0 0
    %1053 = vmatprep.subr.bf16.mxu0 0
    %1054 = vmatpush1.bf16.msra.mxu0 0
    %1055 = vmatprep.subr.bf16.mxu0 0
    %1056 = vmatpush1.bf16.msra.mxu0 0
    %1057 = vmatprep.subr.bf16.mxu0 0
    %1058 = vmatpush1.bf16.msra.mxu0 0
    %1059 = vmatprep.subr.bf16.mxu0 0
    %1060 = vmatpush1.bf16.msra.mxu0 0
    %1061 = vmatprep.subr.bf16.mxu0 0
    %1062 = vmatpush1.bf16.msra.mxu0 0
    %1063 = vmatprep.subr.bf16.mxu0 0
    %1064 = vmatpush1.bf16.msra.mxu0 0
    %1065 = vmatprep.subr.bf16.mxu0 0
    %1066 = vmatpush1.bf16.msra.mxu0 0
    %1067 = vmatprep.subr.bf16.mxu0 0
    %1068 = vmatpush1.bf16.msra.mxu0 0
    %1069 = vmatprep.mubr.bf16.mxu0 0
    %1070 = vmatmul.mubr.bf16.gmra.mrb[0].mxu0 %v982
    %v1071 = vpop.f32.mrb[0].mxu0
    %v1072 = vadd.f32 0.0, %v1071
    %v1073 = vpop.f32.mrb[0].mxu0
    %v1074 = vadd.f32 0.0, %v1073
    %v1075 = vpop.f32.mrb[0].mxu0
    %v1076 = vpop.f32.mrb[0].mxu0
    %1077 = vdwg.mxu0
    %s1078 = scalar_lea.vmem %s1, 6
    %v1079 = vld [vmem:[%s1078] ss:$8 sm:$0xf]
    %v1081 = vlaneseq
    %v1082 = vshrl.u32 %v1081, 7
    %v1083 = vsub.s32 0, %v1082
    %v1084 = vrot.slane %v1079, %v1083
    %v1085 = vlaneseq
    %v1086 = vshrl.u32 %v1085, 7
    %v1087 = vsub.s32 1, %v1086
    %v1088 = vrot.slane %v1079, %v1087
    %v1089 = vlaneseq
    %v1090 = vshrl.u32 %v1089, 7
    %v1091 = vsub.s32 2, %v1090
    %v1092 = vrot.slane %v1079, %v1091
    %v1093 = vlaneseq
    %v1094 = vshrl.u32 %v1093, 7
    %v1095 = vsub.s32 3, %v1094
    %v1096 = vrot.slane %v1079, %v1095
    %v1101 = vmul.f32 %v1031, %v1084
    %v1102 = vmul.f32 %v1033, %v1088
    %v1103 = vmul.f32 %v1072, %v1092
    %v1104 = vmul.f32 %v1074, %v1096
    %v1105 = vadd.f32 %v958, %v1101
    %v1106 = vadd.f32 %v959, %v1102
    %v1107 = vadd.f32 %v960, %v1103
    %v1108 = vadd.f32 %v961, %v1104
    %1109 = vrot.lane.b32.xlu0 %v118, 112
    %v1110 = vpop.permute.xlu0 %1109
    %1111 = vrot.lane.b32.xlu0 %v119, 112
    %v1112 = vpop.permute.xlu0 %1111
    %1113 = vrot.lane.b32.xlu0 %v120, 112
    %v1114 = vpop.permute.xlu0 %1113
    %1115 = vrot.lane.b32.xlu0 %v121, 112
    %v1116 = vpop.permute.xlu0 %1115
    %vm1117 = vcmp.lt.s32.totalorder %v131, 112
    %v1118 = vsel %vm1117, %v1114, %v1116
    %v1119 = vsel %vm1117, %v1112, %v1114
    %v1120 = vsel %vm1117, %v1110, %v1112
    %v1121 = vsel %vm1117, %v1116, %v1110
    %s1122 = scalar_lea.vmem %s4, 28
    %v1123 = vld [vmem:[%s1122] sm:$0xf]
    %v1124 = vpack.c.bf16 %v1120, %v1120
    %v1125 = vpack.c.bf16 %v1119, %v1119
    %v1126 = vpack.c.bf16 %v1118, %v1118
    %v1127 = vpack.c.bf16 %v1121, %v1121
    %v1129 = vsel %vm142, %v1123, 0
    %v1132 = vsel %vm146, %v1124, 0
    %v1135 = vsel %vm146, %v1125, 0
    %v1138 = vsel %vm146, %v1126, 0
    %v1141 = vsel %vm146, %v1127, 0
    %1143 = vmatprep.subr.bf16.mxu0 %v1135
    %1144 = vmatpush1.bf16.msra.mxu0 %v1132
    %1145 = vmatprep.subr.bf16.mxu0 0
    %1146 = vmatpush1.bf16.msra.mxu0 0
    %1147 = vmatprep.subr.bf16.mxu0 0
    %1148 = vmatpush1.bf16.msra.mxu0 0
    %1149 = vmatprep.subr.bf16.mxu0 0
    %1150 = vmatpush1.bf16.msra.mxu0 0
    %1151 = vmatprep.subr.bf16.mxu0 0
    %1152 = vmatpush1.bf16.msra.mxu0 0
    %1153 = vmatprep.subr.bf16.mxu0 0
    %1154 = vmatpush1.bf16.msra.mxu0 0
    %1155 = vmatprep.subr.bf16.mxu0 0
    %1156 = vmatpush1.bf16.msra.mxu0 0
    %1157 = vmatprep.subr.bf16.mxu0 0
    %1158 = vmatpush1.bf16.msra.mxu0 0
    %1159 = vmatprep.subr.bf16.mxu0 0
    %1160 = vmatpush1.bf16.msra.mxu0 0
    %1161 = vmatprep.subr.bf16.mxu0 0
    %1162 = vmatpush1.bf16.msra.mxu0 0
    %1163 = vmatprep.subr.bf16.mxu0 0
    %1164 = vmatpush1.bf16.msra.mxu0 0
    %1165 = vmatprep.subr.bf16.mxu0 0
    %1166 = vmatpush1.bf16.msra.mxu0 0
    %1167 = vmatprep.subr.bf16.mxu0 0
    %1168 = vmatpush1.bf16.msra.mxu0 0
    %1169 = vmatprep.subr.bf16.mxu0 0
    %1170 = vmatpush1.bf16.msra.mxu0 0
    %1171 = vmatprep.subr.bf16.mxu0 0
    %1172 = vmatpush1.bf16.msra.mxu0 0
    %1173 = vmatprep.subr.bf16.mxu0 0
    %1174 = vmatpush1.bf16.msra.mxu0 0
    %1175 = vmatprep.mubr.bf16.mxu0 0
    %1176 = vmatmul.mubr.bf16.gmra.mrb[0].mxu0 %v1129
    %v1177 = vpop.f32.mrb[0].mxu0
    %v1178 = vadd.f32 0.0, %v1177
    %v1179 = vpop.f32.mrb[0].mxu0
    %v1180 = vadd.f32 0.0, %v1179
    %v1181 = vpop.f32.mrb[0].mxu0
    %v1182 = vpop.f32.mrb[0].mxu0
    %1183 = vdwg.mxu0
    %1184 = vmatprep.subr.bf16.mxu0 %v1141
    %1185 = vmatpush1.bf16.msra.mxu0 %v1138
    %1186 = vmatprep.subr.bf16.mxu0 0
    %1187 = vmatpush1.bf16.msra.mxu0 0
    %1188 = vmatprep.subr.bf16.mxu0 0
    %1189 = vmatpush1.bf16.msra.mxu0 0
    %1190 = vmatprep.subr.bf16.mxu0 0
    %1191 = vmatpush1.bf16.msra.mxu0 0
    %1192 = vmatprep.subr.bf16.mxu0 0
    %1193 = vmatpush1.bf16.msra.mxu0 0
    %1194 = vmatprep.subr.bf16.mxu0 0
    %1195 = vmatpush1.bf16.msra.mxu0 0
    %1196 = vmatprep.subr.bf16.mxu0 0
    %1197 = vmatpush1.bf16.msra.mxu0 0
    %1198 = vmatprep.subr.bf16.mxu0 0
    %1199 = vmatpush1.bf16.msra.mxu0 0
    %1200 = vmatprep.subr.bf16.mxu0 0
    %1201 = vmatpush1.bf16.msra.mxu0 0
    %1202 = vmatprep.subr.bf16.mxu0 0
    %1203 = vmatpush1.bf16.msra.mxu0 0
    %1204 = vmatprep.subr.bf16.mxu0 0
    %1205 = vmatpush1.bf16.msra.mxu0 0
    %1206 = vmatprep.subr.bf16.mxu0 0
    %1207 = vmatpush1.bf16.msra.mxu0 0
    %1208 = vmatprep.subr.bf16.mxu0 0
    %1209 = vmatpush1.bf16.msra.mxu0 0
    %1210 = vmatprep.subr.bf16.mxu0 0
    %1211 = vmatpush1.bf16.msra.mxu0 0
    %1212 = vmatprep.subr.bf16.mxu0 0
    %1213 = vmatpush1.bf16.msra.mxu0 0
    %1214 = vmatprep.subr.bf16.mxu0 0
    %1215 = vmatpush1.bf16.msra.mxu0 0
    %1216 = vmatprep.mubr.bf16.mxu0 0
    %1217 = vmatmul.mubr.bf16.gmra.mrb[0].mxu0 %v1129
    %v1218 = vpop.f32.mrb[0].mxu0
    %v1219 = vadd.f32 0.0, %v1218
    %v1220 = vpop.f32.mrb[0].mxu0
    %v1221 = vadd.f32 0.0, %v1220
    %v1222 = vpop.f32.mrb[0].mxu0
    %v1223 = vpop.f32.mrb[0].mxu0
    %1224 = vdwg.mxu0
    %s1225 = scalar_lea.vmem %s1, 7
    %v1226 = vld [vmem:[%s1225] ss:$8 sm:$0xf]
    %v1228 = vlaneseq
    %v1229 = vshrl.u32 %v1228, 7
    %v1230 = vsub.s32 0, %v1229
    %v1231 = vrot.slane %v1226, %v1230
    %v1232 = vlaneseq
    %v1233 = vshrl.u32 %v1232, 7
    %v1234 = vsub.s32 1, %v1233
    %v1235 = vrot.slane %v1226, %v1234
    %v1236 = vlaneseq
    %v1237 = vshrl.u32 %v1236, 7
    %v1238 = vsub.s32 2, %v1237
    %v1239 = vrot.slane %v1226, %v1238
    %v1240 = vlaneseq
    %v1241 = vshrl.u32 %v1240, 7
    %v1242 = vsub.s32 3, %v1241
    %v1243 = vrot.slane %v1226, %v1242
    %v1248 = vmul.f32 %v1178, %v1231
    %v1249 = vmul.f32 %v1180, %v1235
    %v1250 = vmul.f32 %v1219, %v1239
    %v1251 = vmul.f32 %v1221, %v1243
    %v1252 = vadd.f32 %v1105, %v1248
    %v1253 = vadd.f32 %v1106, %v1249
    %v1254 = vadd.f32 %v1107, %v1250
    %v1255 = vadd.f32 %v1108, %v1251
    %1256 = vrot.lane.b32.xlu0 %v118, 111
    %v1257 = vpop.permute.xlu0 %1256
    %1258 = vrot.lane.b32.xlu0 %v119, 111
    %v1259 = vpop.permute.xlu0 %1258
    %1260 = vrot.lane.b32.xlu0 %v120, 111
    %v1261 = vpop.permute.xlu0 %1260
    %1262 = vrot.lane.b32.xlu0 %v121, 111
    %v1263 = vpop.permute.xlu0 %1262
    %vm1264 = vcmp.lt.s32.totalorder %v131, 111
    %v1265 = vsel %vm1264, %v1261, %v1263
    %v1266 = vsel %vm1264, %v1259, %v1261
    %v1267 = vsel %vm1264, %v1257, %v1259
    %v1268 = vsel %vm1264, %v1263, %v1257
    %s1269 = scalar_lea.vmem %s4, 32
    %v1270 = vld [vmem:[%s1269] sm:$0xf]
    %v1271 = vpack.c.bf16 %v1267, %v1267
    %v1272 = vpack.c.bf16 %v1266, %v1266
    %v1273 = vpack.c.bf16 %v1265, %v1265
    %v1274 = vpack.c.bf16 %v1268, %v1268
    %v1276 = vsel %vm142, %v1270, 0
    %v1279 = vsel %vm146, %v1271, 0
    %v1282 = vsel %vm146, %v1272, 0
    %v1285 = vsel %vm146, %v1273, 0
    %v1288 = vsel %vm146, %v1274, 0
    %1290 = vmatprep.subr.bf16.mxu0 %v1282
    %1291 = vmatpush1.bf16.msra.mxu0 %v1279
    %1292 = vmatprep.subr.bf16.mxu0 0
    %1293 = vmatpush1.bf16.msra.mxu0 0
    %1294 = vmatprep.subr.bf16.mxu0 0
    %1295 = vmatpush1.bf16.msra.mxu0 0
    %1296 = vmatprep.subr.bf16.mxu0 0
    %1297 = vmatpush1.bf16.msra.mxu0 0
    %1298 = vmatprep.subr.bf16.mxu0 0
    %1299 = vmatpush1.bf16.msra.mxu0 0
    %1300 = vmatprep.subr.bf16.mxu0 0
    %1301 = vmatpush1.bf16.msra.mxu0 0
    %1302 = vmatprep.subr.bf16.mxu0 0
    %1303 = vmatpush1.bf16.msra.mxu0 0
    %1304 = vmatprep.subr.bf16.mxu0 0
    %1305 = vmatpush1.bf16.msra.mxu0 0
    %1306 = vmatprep.subr.bf16.mxu0 0
    %1307 = vmatpush1.bf16.msra.mxu0 0
    %1308 = vmatprep.subr.bf16.mxu0 0
    %1309 = vmatpush1.bf16.msra.mxu0 0
    %1310 = vmatprep.subr.bf16.mxu0 0
    %1311 = vmatpush1.bf16.msra.mxu0 0
    %1312 = vmatprep.subr.bf16.mxu0 0
    %1313 = vmatpush1.bf16.msra.mxu0 0
    %1314 = vmatprep.subr.bf16.mxu0 0
    %1315 = vmatpush1.bf16.msra.mxu0 0
    %1316 = vmatprep.subr.bf16.mxu0 0
    %1317 = vmatpush1.bf16.msra.mxu0 0
    %1318 = vmatprep.subr.bf16.mxu0 0
    %1319 = vmatpush1.bf16.msra.mxu0 0
    %1320 = vmatprep.subr.bf16.mxu0 0
    %1321 = vmatpush1.bf16.msra.mxu0 0
    %1322 = vmatprep.mubr.bf16.mxu0 0
    %1323 = vmatmul.mubr.bf16.gmra.mrb[0].mxu0 %v1276
    %v1324 = vpop.f32.mrb[0].mxu0
    %v1325 = vadd.f32 0.0, %v1324
    %v1326 = vpop.f32.mrb[0].mxu0
    %v1327 = vadd.f32 0.0, %v1326
    %v1328 = vpop.f32.mrb[0].mxu0
    %v1329 = vpop.f32.mrb[0].mxu0
    %1330 = vdwg.mxu0
    %1331 = vmatprep.subr.bf16.mxu0 %v1288
    %1332 = vmatpush1.bf16.msra.mxu0 %v1285
    %1333 = vmatprep.subr.bf16.mxu0 0
    %1334 = vmatpush1.bf16.msra.mxu0 0
    %1335 = vmatprep.subr.bf16.mxu0 0
    %1336 = vmatpush1.bf16.msra.mxu0 0
    %1337 = vmatprep.subr.bf16.mxu0 0
    %1338 = vmatpush1.bf16.msra.mxu0 0
    %1339 = vmatprep.subr.bf16.mxu0 0
    %1340 = vmatpush1.bf16.msra.mxu0 0
    %1341 = vmatprep.subr.bf16.mxu0 0
    %1342 = vmatpush1.bf16.msra.mxu0 0
    %1343 = vmatprep.subr.bf16.mxu0 0
    %1344 = vmatpush1.bf16.msra.mxu0 0
    %1345 = vmatprep.subr.bf16.mxu0 0
    %1346 = vmatpush1.bf16.msra.mxu0 0
    %1347 = vmatprep.subr.bf16.mxu0 0
    %1348 = vmatpush1.bf16.msra.mxu0 0
    %1349 = vmatprep.subr.bf16.mxu0 0
    %1350 = vmatpush1.bf16.msra.mxu0 0
    %1351 = vmatprep.subr.bf16.mxu0 0
    %1352 = vmatpush1.bf16.msra.mxu0 0
    %1353 = vmatprep.subr.bf16.mxu0 0
    %1354 = vmatpush1.bf16.msra.mxu0 0
    %1355 = vmatprep.subr.bf16.mxu0 0
    %1356 = vmatpush1.bf16.msra.mxu0 0
    %1357 = vmatprep.subr.bf16.mxu0 0
    %1358 = vmatpush1.bf16.msra.mxu0 0
    %1359 = vmatprep.subr.bf16.mxu0 0
    %1360 = vmatpush1.bf16.msra.mxu0 0
    %1361 = vmatprep.subr.bf16.mxu0 0
    %1362 = vmatpush1.bf16.msra.mxu0 0
    %1363 = vmatprep.mubr.bf16.mxu0 0
    %1364 = vmatmul.mubr.bf16.gmra.mrb[0].mxu0 %v1276
    %v1365 = vpop.f32.mrb[0].mxu0
    %v1366 = vadd.f32 0.0, %v1365
    %v1367 = vpop.f32.mrb[0].mxu0
    %v1368 = vadd.f32 0.0, %v1367
    %v1369 = vpop.f32.mrb[0].mxu0
    %v1370 = vpop.f32.mrb[0].mxu0
    %1371 = vdwg.mxu0
    %s1372 = scalar_lea.vmem %s1, 32
    %v1373 = vld [vmem:[%s1372] ss:$8 sm:$0xf]
    %v1375 = vlaneseq
    %v1376 = vshrl.u32 %v1375, 7
    %v1377 = vsub.s32 0, %v1376
    %v1378 = vrot.slane %v1373, %v1377
    %v1379 = vlaneseq
    %v1380 = vshrl.u32 %v1379, 7
    %v1381 = vsub.s32 1, %v1380
    %v1382 = vrot.slane %v1373, %v1381
    %v1383 = vlaneseq
    %v1384 = vshrl.u32 %v1383, 7
    %v1385 = vsub.s32 2, %v1384
    %v1386 = vrot.slane %v1373, %v1385
    %v1387 = vlaneseq
    %v1388 = vshrl.u32 %v1387, 7
    %v1389 = vsub.s32 3, %v1388
    %v1390 = vrot.slane %v1373, %v1389
    %v1395 = vmul.f32 %v1325, %v1378
    %v1396 = vmul.f32 %v1327, %v1382
    %v1397 = vmul.f32 %v1366, %v1386
    %v1398 = vmul.f32 %v1368, %v1390
    %v1399 = vadd.f32 %v1252, %v1395
    %v1400 = vadd.f32 %v1253, %v1396
    %v1401 = vadd.f32 %v1254, %v1397
    %v1402 = vadd.f32 %v1255, %v1398
    %1404 = vset.pattern.permute.xlu0 0
    %1405 = vperm.xlu0 %1404, %v71
    %v1406 = vpop.permute.xlu0 %1405
    %v1408 = vadd.f32 %v1399, %v1406
    %v1409 = vadd.f32 %v1400, %v1406
    %v1410 = vadd.f32 %v1401, %v1406
    %v1411 = vadd.f32 %v1402, %v1406
    %1412 = vst [vmem:[#allocation2 + $0x20] sm:$0xff] %v1408
    %1413 = vst [vmem:[#allocation2 + $0x28] sm:$0xff] %v1409
    %1414 = vst [vmem:[#allocation2 + $0x30] sm:$0xff] %v1410
    %1415 = vst [vmem:[#allocation2 + $0x38] sm:$0xff] %v1411
    %v1416 = vld [vmem:[%s6] sm:$0xff]
    %v1417 = vld [vmem:[%s6 + $0x8] sm:$0xff]
    %v1418 = vld [vmem:[%s7] sm:$0xff]
    %v1419 = vld [vmem:[%s7 + $0x8] sm:$0xff]
    %v1420 = vld [vmem:[%s9] sm:$0xff]
    %v1421 = vld [vmem:[#allocation2] sm:$0xff]
    %v1422 = vld [vmem:[#allocation2 + $0x8] sm:$0xff]
    %v1423 = vld [vmem:[#allocation2 + $0x10] sm:$0xff]
    %v1424 = vld [vmem:[#allocation2 + $0x18] sm:$0xff]
    %v1425 = vld [vmem:[#allocation2 + $0x20] sm:$0xff]
    %v1426 = vld [vmem:[#allocation2 + $0x28] sm:$0xff]
    %v1427 = vld [vmem:[#allocation2 + $0x30] sm:$0xff]
    %v1428 = vld [vmem:[#allocation2 + $0x38] sm:$0xff]
    %v1429 = vadd.f32 %v1421, %v1422
    %v1430 = vadd.f32 %v1429, %v1423
    %v1431 = vadd.f32 %v1430, %v1424
    %1432 = vadd.xlane.f32.xlu0 %v1431
    %v1433 = vpop.xlane.xlu0 %1432
    %v1434 = vadd.f32 %v1425, %v1426
    %v1435 = vadd.f32 %v1434, %v1427
    %v1436 = vadd.f32 %v1435, %v1428
    %1437 = vadd.xlane.f32.xlu0 %v1436
    %v1438 = vpop.xlane.xlu0 %1437
    %v1439 = vmul.f32 %v1421, %v1421
    %v1440 = vmul.f32 %v1422, %v1422
    %v1441 = vmul.f32 %v1423, %v1423
    %v1442 = vmul.f32 %v1424, %v1424
    %v1443 = vmul.f32 %v1425, %v1425
    %v1444 = vmul.f32 %v1426, %v1426
    %v1445 = vmul.f32 %v1427, %v1427
    %v1446 = vmul.f32 %v1428, %v1428
    %v1447 = vadd.f32 %v1439, %v1440
    %v1448 = vadd.f32 %v1447, %v1441
    %v1449 = vadd.f32 %v1448, %v1442
    %1450 = vadd.xlane.f32.xlu0 %v1449
    %v1451 = vpop.xlane.xlu0 %1450
    %v1452 = vadd.f32 %v1443, %v1444
    %v1453 = vadd.f32 %v1452, %v1445
    %v1454 = vadd.f32 %v1453, %v1446
    %1455 = vadd.xlane.f32.xlu0 %v1454
    %v1456 = vpop.xlane.xlu0 %1455
    %v1457 = vmul.f32 %v1433, 0.001953125
    %v1458 = vmul.f32 %v1438, 0.001953125
    %v1459 = vmul.f32 %v1451, 0.001953125
    %v1460 = vmul.f32 %v1456, 0.001953125
    %v1461 = vmul.f32 %v1457, %v1457
    %v1462 = vmul.f32 %v1458, %v1458
    %v1463 = vsub.f32 %v1459, %v1461
    %v1464 = vsub.f32 %v1460, %v1462
    %v1465 = vmax.f32 %v1463, 0.0
    %v1466 = vmax.f32 %v1464, 0.0
    %v1467 = vadd.f32 %v1465, 1e-05
    %v1468 = vadd.f32 %v1466, 1e-05
    %v1469 = vrsqrt.pop %v1467
    %v1470 = vrsqrt.pop %v1468
    %v1471 = vmul.f32 %v1416, %v1469
    %v1472 = vmul.f32 %v1417, %v1470
    %v1473 = vmul.f32 %v1457, %v1471
    %v1474 = vmul.f32 %v1458, %v1472
    %v1475 = vsub.f32 %v1418, %v1473
    %v1476 = vsub.f32 %v1419, %v1474
    %1478 = vset.pattern.permute.xlu0 0
    %1479 = vperm.xlu0 %1478, %v1471
    %v1480 = vpop.permute.xlu0 %1479
    %1483 = vset.pattern.permute.xlu0 0
    %1484 = vperm.xlu0 %1483, %v1472
    %v1485 = vpop.permute.xlu0 %1484
    %v1487 = vmul.f32 %v1421, %v1480
    %v1488 = vmul.f32 %v1422, %v1480
    %v1489 = vmul.f32 %v1423, %v1480
    %v1490 = vmul.f32 %v1424, %v1480
    %v1491 = vmul.f32 %v1425, %v1485
    %v1492 = vmul.f32 %v1426, %v1485
    %v1493 = vmul.f32 %v1427, %v1485
    %v1494 = vmul.f32 %v1428, %v1485
    %1496 = vset.pattern.permute.xlu0 0
    %1497 = vperm.xlu0 %1496, %v1475
    %v1498 = vpop.permute.xlu0 %1497
    %1501 = vset.pattern.permute.xlu0 0
    %1502 = vperm.xlu0 %1501, %v1476
    %v1503 = vpop.permute.xlu0 %1502
    %v1505 = vadd.f32 %v1487, %v1498
    %v1506 = vadd.f32 %v1488, %v1498
    %v1507 = vadd.f32 %v1489, %v1498
    %v1508 = vadd.f32 %v1490, %v1498
    %v1509 = vadd.f32 %v1491, %v1503
    %v1510 = vadd.f32 %v1492, %v1503
    %v1511 = vadd.f32 %v1493, %v1503
    %v1512 = vadd.f32 %v1494, %v1503
    %v1513 = vmax.f32 %v1505, 0.0
    %v1514 = vmax.f32 %v1506, 0.0
    %v1515 = vmax.f32 %v1507, 0.0
    %v1516 = vmax.f32 %v1508, 0.0
    %v1517 = vmax.f32 %v1509, 0.0
    %v1518 = vmax.f32 %v1510, 0.0
    %v1519 = vmax.f32 %v1511, 0.0
    %v1520 = vmax.f32 %v1512, 0.0
    %1521 = vrot.lane.b32.xlu0 %v1513, 17
    %v1522 = vpop.permute.xlu0 %1521
    %1523 = vrot.lane.b32.xlu0 %v1517, 17
    %v1524 = vpop.permute.xlu0 %1523
    %1525 = vrot.lane.b32.xlu0 %v1514, 17
    %v1526 = vpop.permute.xlu0 %1525
    %1527 = vrot.lane.b32.xlu0 %v1518, 17
    %v1528 = vpop.permute.xlu0 %1527
    %1529 = vrot.lane.b32.xlu0 %v1515, 17
    %v1530 = vpop.permute.xlu0 %1529
    %1531 = vrot.lane.b32.xlu0 %v1519, 17
    %v1532 = vpop.permute.xlu0 %1531
    %1533 = vrot.lane.b32.xlu0 %v1516, 17
    %v1534 = vpop.permute.xlu0 %1533
    %1535 = vrot.lane.b32.xlu0 %v1520, 17
    %v1536 = vpop.permute.xlu0 %1535
    %v1537 = vsel %vm132, %v1530, %v1534
    %v1538 = vsel %vm132, %v1532, %v1536
    %v1539 = vsel %vm132, %v1526, %v1530
    %v1540 = vsel %vm132, %v1528, %v1532
    %v1541 = vsel %vm132, %v1522, %v1526
    %v1542 = vsel %vm132, %v1524, %v1528
    %v1543 = vsel %vm132, %v1534, %v1522
    %v1544 = vsel %vm132, %v1536, %v1524
    %v1545 = vld [vmem:[%s8] sm:$0xf]
    %v1546 = vpack.c.bf16 %v1544, %v1543
    %v1547 = vpack.c.bf16 %v1542, %v1541
    %v1548 = vpack.c.bf16 %v1540, %v1539
    %v1549 = vpack.c.bf16 %v1538, %v1537
    %vm1550 = vcmask 130048
    %v1552 = vsel %vm1550, %v1545, 0
    %1554 = vmatprep.subr.bf16.mxu0 %v1547
    %1555 = vmatpush1.bf16.msra.mxu0 %v1546
    %1556 = vmatprep.subr.bf16.mxu0 0
    %1557 = vmatpush1.bf16.msra.mxu0 0
    %1558 = vmatprep.subr.bf16.mxu0 0
    %1559 = vmatpush1.bf16.msra.mxu0 0
    %1560 = vmatprep.subr.bf16.mxu0 0
    %1561 = vmatpush1.bf16.msra.mxu0 0
    %1562 = vmatprep.subr.bf16.mxu0 0
    %1563 = vmatpush1.bf16.msra.mxu0 0
    %1564 = vmatprep.subr.bf16.mxu0 0
    %1565 = vmatpush1.bf16.msra.mxu0 0
    %1566 = vmatprep.subr.bf16.mxu0 0
    %1567 = vmatpush1.bf16.msra.mxu0 0
    %1568 = vmatprep.subr.bf16.mxu0 0
    %1569 = vmatpush1.bf16.msra.mxu0 0
    %1570 = vmatprep.subr.bf16.mxu0 0
    %1571 = vmatpush1.bf16.msra.mxu0 0
    %1572 = vmatprep.subr.bf16.mxu0 0
    %1573 = vmatpush1.bf16.msra.mxu0 0
    %1574 = vmatprep.subr.bf16.mxu0 0
    %1575 = vmatpush1.bf16.msra.mxu0 0
    %1576 = vmatprep.subr.bf16.mxu0 0
    %1577 = vmatpush1.bf16.msra.mxu0 0
    %1578 = vmatprep.subr.bf16.mxu0 0
    %1579 = vmatpush1.bf16.msra.mxu0 0
    %1580 = vmatprep.subr.bf16.mxu0 0
    %1581 = vmatpush1.bf16.msra.mxu0 0
    %1582 = vmatprep.subr.bf16.mxu0 0
    %1583 = vmatpush1.bf16.msra.mxu0 0
    %1584 = vmatprep.subr.bf16.mxu0 0
    %1585 = vmatpush1.bf16.msra.mxu0 0
    %1586 = vmatprep.mubr.bf16.mxu0 0
    %1587 = vmatmul.mubr.bf16.gmra.mrb[0].mxu0 %v1552
    %v1588 = vpop.f32.mrb[0].mxu0
    %v1589 = vadd.f32 0.0, %v1588
    %v1590 = vpop.f32.mrb[0].mxu0
    %v1591 = vadd.f32 0.0, %v1590
    %v1592 = vpop.f32.mrb[0].mxu0
    %v1593 = vpop.f32.mrb[0].mxu0
    %1594 = vdwg.mxu0
    %1595 = vmatprep.subr.bf16.mxu0 %v1549
    %1596 = vmatpush1.bf16.msra.mxu0 %v1548
    %1597 = vmatprep.subr.bf16.mxu0 0
    %1598 = vmatpush1.bf16.msra.mxu0 0
    %1599 = vmatprep.subr.bf16.mxu0 0
    %1600 = vmatpush1.bf16.msra.mxu0 0
    %1601 = vmatprep.subr.bf16.mxu0 0
    %1602 = vmatpush1.bf16.msra.mxu0 0
    %1603 = vmatprep.subr.bf16.mxu0 0
    %1604 = vmatpush1.bf16.msra.mxu0 0
    %1605 = vmatprep.subr.bf16.mxu0 0
    %1606 = vmatpush1.bf16.msra.mxu0 0
    %1607 = vmatprep.subr.bf16.mxu0 0
    %1608 = vmatpush1.bf16.msra.mxu0 0
    %1609 = vmatprep.subr.bf16.mxu0 0
    %1610 = vmatpush1.bf16.msra.mxu0 0
    %1611 = vmatprep.subr.bf16.mxu0 0
    %1612 = vmatpush1.bf16.msra.mxu0 0
    %1613 = vmatprep.subr.bf16.mxu0 0
    %1614 = vmatpush1.bf16.msra.mxu0 0
    %1615 = vmatprep.subr.bf16.mxu0 0
    %1616 = vmatpush1.bf16.msra.mxu0 0
    %1617 = vmatprep.subr.bf16.mxu0 0
    %1618 = vmatpush1.bf16.msra.mxu0 0
    %1619 = vmatprep.subr.bf16.mxu0 0
    %1620 = vmatpush1.bf16.msra.mxu0 0
    %1621 = vmatprep.subr.bf16.mxu0 0
    %1622 = vmatpush1.bf16.msra.mxu0 0
    %1623 = vmatprep.subr.bf16.mxu0 0
    %1624 = vmatpush1.bf16.msra.mxu0 0
    %1625 = vmatprep.subr.bf16.mxu0 0
    %1626 = vmatpush1.bf16.msra.mxu0 0
    %1627 = vmatprep.mubr.bf16.mxu0 0
    %1628 = vmatmul.mubr.bf16.gmra.mrb[0].mxu0 %v1552
    %v1629 = vpop.f32.mrb[0].mxu0
    %v1630 = vadd.f32 0.0, %v1629
    %v1631 = vpop.f32.mrb[0].mxu0
    %v1632 = vadd.f32 0.0, %v1631
    %v1633 = vpop.f32.mrb[0].mxu0
    %v1634 = vpop.f32.mrb[0].mxu0
    %1635 = vdwg.mxu0
    %v1636 = vld [vmem:[%s1] ss:$8 sm:$0xf]
    %v1638 = vlaneseq
    %v1639 = vshrl.u32 %v1638, 7
    %v1640 = vsub.s32 0, %v1639
    %v1641 = vrot.slane %v1636, %v1640
    %v1642 = vlaneseq
    %v1643 = vshrl.u32 %v1642, 7
    %v1644 = vsub.s32 1, %v1643
    %v1645 = vrot.slane %v1636, %v1644
    %v1646 = vlaneseq
    %v1647 = vshrl.u32 %v1646, 7
    %v1648 = vsub.s32 2, %v1647
    %v1649 = vrot.slane %v1636, %v1648
    %v1650 = vlaneseq
    %v1651 = vshrl.u32 %v1650, 7
    %v1652 = vsub.s32 3, %v1651
    %v1653 = vrot.slane %v1636, %v1652
    %v1658 = vmul.f32 %v1589, %v1641
    %v1659 = vmul.f32 %v1591, %v1645
    %v1660 = vmul.f32 %v1630, %v1649
    %v1661 = vmul.f32 %v1632, %v1653
    %1662 = vrot.lane.b32.xlu0 %v1513, 16
    %v1663 = vpop.permute.xlu0 %1662
    %1664 = vrot.lane.b32.xlu0 %v1517, 16
    %v1665 = vpop.permute.xlu0 %1664
    %1666 = vrot.lane.b32.xlu0 %v1514, 16
    %v1667 = vpop.permute.xlu0 %1666
    %1668 = vrot.lane.b32.xlu0 %v1518, 16
    %v1669 = vpop.permute.xlu0 %1668
    %1670 = vrot.lane.b32.xlu0 %v1515, 16
    %v1671 = vpop.permute.xlu0 %1670
    %1672 = vrot.lane.b32.xlu0 %v1519, 16
    %v1673 = vpop.permute.xlu0 %1672
    %1674 = vrot.lane.b32.xlu0 %v1516, 16
    %v1675 = vpop.permute.xlu0 %1674
    %1676 = vrot.lane.b32.xlu0 %v1520, 16
    %v1677 = vpop.permute.xlu0 %1676
    %v1678 = vsel %vm275, %v1671, %v1675
    %v1679 = vsel %vm275, %v1673, %v1677
    %v1680 = vsel %vm275, %v1667, %v1671
    %v1681 = vsel %vm275, %v1669, %v1673
    %v1682 = vsel %vm275, %v1663, %v1667
    %v1683 = vsel %vm275, %v1665, %v1669
    %v1684 = vsel %vm275, %v1675, %v1663
    %v1685 = vsel %vm275, %v1677, %v1665
    %s1686 = scalar_lea.vmem %s8, 4
    %v1687 = vld [vmem:[%s1686] sm:$0xf]
    %v1688 = vpack.c.bf16 %v1685, %v1684
    %v1689 = vpack.c.bf16 %v1683, %v1682
    %v1690 = vpack.c.bf16 %v1681, %v1680
    %v1691 = vpack.c.bf16 %v1679, %v1678
    %v1693 = vsel %vm1550, %v1687, 0
    %1695 = vmatprep.subr.bf16.mxu0 %v1689
    %1696 = vmatpush1.bf16.msra.mxu0 %v1688
    %1697 = vmatprep.subr.bf16.mxu0 0
    %1698 = vmatpush1.bf16.msra.mxu0 0
    %1699 = vmatprep.subr.bf16.mxu0 0
    %1700 = vmatpush1.bf16.msra.mxu0 0
    %1701 = vmatprep.subr.bf16.mxu0 0
    %1702 = vmatpush1.bf16.msra.mxu0 0
    %1703 = vmatprep.subr.bf16.mxu0 0
    %1704 = vmatpush1.bf16.msra.mxu0 0
    %1705 = vmatprep.subr.bf16.mxu0 0
    %1706 = vmatpush1.bf16.msra.mxu0 0
    %1707 = vmatprep.subr.bf16.mxu0 0
    %1708 = vmatpush1.bf16.msra.mxu0 0
    %1709 = vmatprep.subr.bf16.mxu0 0
    %1710 = vmatpush1.bf16.msra.mxu0 0
    %1711 = vmatprep.subr.bf16.mxu0 0
    %1712 = vmatpush1.bf16.msra.mxu0 0
    %1713 = vmatprep.subr.bf16.mxu0 0
    %1714 = vmatpush1.bf16.msra.mxu0 0
    %1715 = vmatprep.subr.bf16.mxu0 0
    %1716 = vmatpush1.bf16.msra.mxu0 0
    %1717 = vmatprep.subr.bf16.mxu0 0
    %1718 = vmatpush1.bf16.msra.mxu0 0
    %1719 = vmatprep.subr.bf16.mxu0 0
    %1720 = vmatpush1.bf16.msra.mxu0 0
    %1721 = vmatprep.subr.bf16.mxu0 0
    %1722 = vmatpush1.bf16.msra.mxu0 0
    %1723 = vmatprep.subr.bf16.mxu0 0
    %1724 = vmatpush1.bf16.msra.mxu0 0
    %1725 = vmatprep.subr.bf16.mxu0 0
    %1726 = vmatpush1.bf16.msra.mxu0 0
    %1727 = vmatprep.mubr.bf16.mxu0 0
    %1728 = vmatmul.mubr.bf16.gmra.mrb[0].mxu0 %v1693
    %v1729 = vpop.f32.mrb[0].mxu0
    %v1730 = vadd.f32 0.0, %v1729
    %v1731 = vpop.f32.mrb[0].mxu0
    %v1732 = vadd.f32 0.0, %v1731
    %v1733 = vpop.f32.mrb[0].mxu0
    %v1734 = vpop.f32.mrb[0].mxu0
    %1735 = vdwg.mxu0
    %1736 = vmatprep.subr.bf16.mxu0 %v1691
    %1737 = vmatpush1.bf16.msra.mxu0 %v1690
    %1738 = vmatprep.subr.bf16.mxu0 0
    %1739 = vmatpush1.bf16.msra.mxu0 0
    %1740 = vmatprep.subr.bf16.mxu0 0
    %1741 = vmatpush1.bf16.msra.mxu0 0
    %1742 = vmatprep.subr.bf16.mxu0 0
    %1743 = vmatpush1.bf16.msra.mxu0 0
    %1744 = vmatprep.subr.bf16.mxu0 0
    %1745 = vmatpush1.bf16.msra.mxu0 0
    %1746 = vmatprep.subr.bf16.mxu0 0
    %1747 = vmatpush1.bf16.msra.mxu0 0
    %1748 = vmatprep.subr.bf16.mxu0 0
    %1749 = vmatpush1.bf16.msra.mxu0 0
    %1750 = vmatprep.subr.bf16.mxu0 0
    %1751 = vmatpush1.bf16.msra.mxu0 0
    %1752 = vmatprep.subr.bf16.mxu0 0
    %1753 = vmatpush1.bf16.msra.mxu0 0
    %1754 = vmatprep.subr.bf16.mxu0 0
    %1755 = vmatpush1.bf16.msra.mxu0 0
    %1756 = vmatprep.subr.bf16.mxu0 0
    %1757 = vmatpush1.bf16.msra.mxu0 0
    %1758 = vmatprep.subr.bf16.mxu0 0
    %1759 = vmatpush1.bf16.msra.mxu0 0
    %1760 = vmatprep.subr.bf16.mxu0 0
    %1761 = vmatpush1.bf16.msra.mxu0 0
    %1762 = vmatprep.subr.bf16.mxu0 0
    %1763 = vmatpush1.bf16.msra.mxu0 0
    %1764 = vmatprep.subr.bf16.mxu0 0
    %1765 = vmatpush1.bf16.msra.mxu0 0
    %1766 = vmatprep.subr.bf16.mxu0 0
    %1767 = vmatpush1.bf16.msra.mxu0 0
    %1768 = vmatprep.mubr.bf16.mxu0 0
    %1769 = vmatmul.mubr.bf16.gmra.mrb[0].mxu0 %v1693
    %v1770 = vpop.f32.mrb[0].mxu0
    %v1771 = vadd.f32 0.0, %v1770
    %v1772 = vpop.f32.mrb[0].mxu0
    %v1773 = vadd.f32 0.0, %v1772
    %v1774 = vpop.f32.mrb[0].mxu0
    %v1775 = vpop.f32.mrb[0].mxu0
    %1776 = vdwg.mxu0
    %v1777 = vld [vmem:[%s383] ss:$8 sm:$0xf]
    %v1779 = vlaneseq
    %v1780 = vshrl.u32 %v1779, 7
    %v1781 = vsub.s32 0, %v1780
    %v1782 = vrot.slane %v1777, %v1781
    %v1783 = vlaneseq
    %v1784 = vshrl.u32 %v1783, 7
    %v1785 = vsub.s32 1, %v1784
    %v1786 = vrot.slane %v1777, %v1785
    %v1787 = vlaneseq
    %v1788 = vshrl.u32 %v1787, 7
    %v1789 = vsub.s32 2, %v1788
    %v1790 = vrot.slane %v1777, %v1789
    %v1791 = vlaneseq
    %v1792 = vshrl.u32 %v1791, 7
    %v1793 = vsub.s32 3, %v1792
    %v1794 = vrot.slane %v1777, %v1793
    %v1799 = vmul.f32 %v1730, %v1782
    %v1800 = vmul.f32 %v1732, %v1786
    %v1801 = vmul.f32 %v1771, %v1790
    %v1802 = vmul.f32 %v1773, %v1794
    %v1803 = vadd.f32 %v1658, %v1799
    %v1804 = vadd.f32 %v1659, %v1800
    %v1805 = vadd.f32 %v1660, %v1801
    %v1806 = vadd.f32 %v1661, %v1802
    %1807 = vrot.lane.b32.xlu0 %v1513, 15
    %v1808 = vpop.permute.xlu0 %1807
    %1809 = vrot.lane.b32.xlu0 %v1517, 15
    %v1810 = vpop.permute.xlu0 %1809
    %1811 = vrot.lane.b32.xlu0 %v1514, 15
    %v1812 = vpop.permute.xlu0 %1811
    %1813 = vrot.lane.b32.xlu0 %v1518, 15
    %v1814 = vpop.permute.xlu0 %1813
    %1815 = vrot.lane.b32.xlu0 %v1515, 15
    %v1816 = vpop.permute.xlu0 %1815
    %1817 = vrot.lane.b32.xlu0 %v1519, 15
    %v1818 = vpop.permute.xlu0 %1817
    %1819 = vrot.lane.b32.xlu0 %v1516, 15
    %v1820 = vpop.permute.xlu0 %1819
    %1821 = vrot.lane.b32.xlu0 %v1520, 15
    %v1822 = vpop.permute.xlu0 %1821
    %v1823 = vsel %vm422, %v1816, %v1820
    %v1824 = vsel %vm422, %v1818, %v1822
    %v1825 = vsel %vm422, %v1812, %v1816
    %v1826 = vsel %vm422, %v1814, %v1818
    %v1827 = vsel %vm422, %v1808, %v1812
    %v1828 = vsel %vm422, %v1810, %v1814
    %v1829 = vsel %vm422, %v1820, %v1808
    %v1830 = vsel %vm422, %v1822, %v1810
    %s1831 = scalar_lea.vmem %s8, 8
    %v1832 = vld [vmem:[%s1831] sm:$0xf]
    %v1833 = vpack.c.bf16 %v1830, %v1829
    %v1834 = vpack.c.bf16 %v1828, %v1827
    %v1835 = vpack.c.bf16 %v1826, %v1825
    %v1836 = vpack.c.bf16 %v1824, %v1823
    %v1838 = vsel %vm1550, %v1832, 0
    %1840 = vmatprep.subr.bf16.mxu0 %v1834
    %1841 = vmatpush1.bf16.msra.mxu0 %v1833
    %1842 = vmatprep.subr.bf16.mxu0 0
    %1843 = vmatpush1.bf16.msra.mxu0 0
    %1844 = vmatprep.subr.bf16.mxu0 0
    %1845 = vmatpush1.bf16.msra.mxu0 0
    %1846 = vmatprep.subr.bf16.mxu0 0
    %1847 = vmatpush1.bf16.msra.mxu0 0
    %1848 = vmatprep.subr.bf16.mxu0 0
    %1849 = vmatpush1.bf16.msra.mxu0 0
    %1850 = vmatprep.subr.bf16.mxu0 0
    %1851 = vmatpush1.bf16.msra.mxu0 0
    %1852 = vmatprep.subr.bf16.mxu0 0
    %1853 = vmatpush1.bf16.msra.mxu0 0
    %1854 = vmatprep.subr.bf16.mxu0 0
    %1855 = vmatpush1.bf16.msra.mxu0 0
    %1856 = vmatprep.subr.bf16.mxu0 0
    %1857 = vmatpush1.bf16.msra.mxu0 0
    %1858 = vmatprep.subr.bf16.mxu0 0
    %1859 = vmatpush1.bf16.msra.mxu0 0
    %1860 = vmatprep.subr.bf16.mxu0 0
    %1861 = vmatpush1.bf16.msra.mxu0 0
    %1862 = vmatprep.subr.bf16.mxu0 0
    %1863 = vmatpush1.bf16.msra.mxu0 0
    %1864 = vmatprep.subr.bf16.mxu0 0
    %1865 = vmatpush1.bf16.msra.mxu0 0
    %1866 = vmatprep.subr.bf16.mxu0 0
    %1867 = vmatpush1.bf16.msra.mxu0 0
    %1868 = vmatprep.subr.bf16.mxu0 0
    %1869 = vmatpush1.bf16.msra.mxu0 0
    %1870 = vmatprep.subr.bf16.mxu0 0
    %1871 = vmatpush1.bf16.msra.mxu0 0
    %1872 = vmatprep.mubr.bf16.mxu0 0
    %1873 = vmatmul.mubr.bf16.gmra.mrb[0].mxu0 %v1838
    %v1874 = vpop.f32.mrb[0].mxu0
    %v1875 = vadd.f32 0.0, %v1874
    %v1876 = vpop.f32.mrb[0].mxu0
    %v1877 = vadd.f32 0.0, %v1876
    %v1878 = vpop.f32.mrb[0].mxu0
    %v1879 = vpop.f32.mrb[0].mxu0
    %1880 = vdwg.mxu0
    %1881 = vmatprep.subr.bf16.mxu0 %v1836
    %1882 = vmatpush1.bf16.msra.mxu0 %v1835
    %1883 = vmatprep.subr.bf16.mxu0 0
    %1884 = vmatpush1.bf16.msra.mxu0 0
    %1885 = vmatprep.subr.bf16.mxu0 0
    %1886 = vmatpush1.bf16.msra.mxu0 0
    %1887 = vmatprep.subr.bf16.mxu0 0
    %1888 = vmatpush1.bf16.msra.mxu0 0
    %1889 = vmatprep.subr.bf16.mxu0 0
    %1890 = vmatpush1.bf16.msra.mxu0 0
    %1891 = vmatprep.subr.bf16.mxu0 0
    %1892 = vmatpush1.bf16.msra.mxu0 0
    %1893 = vmatprep.subr.bf16.mxu0 0
    %1894 = vmatpush1.bf16.msra.mxu0 0
    %1895 = vmatprep.subr.bf16.mxu0 0
    %1896 = vmatpush1.bf16.msra.mxu0 0
    %1897 = vmatprep.subr.bf16.mxu0 0
    %1898 = vmatpush1.bf16.msra.mxu0 0
    %1899 = vmatprep.subr.bf16.mxu0 0
    %1900 = vmatpush1.bf16.msra.mxu0 0
    %1901 = vmatprep.subr.bf16.mxu0 0
    %1902 = vmatpush1.bf16.msra.mxu0 0
    %1903 = vmatprep.subr.bf16.mxu0 0
    %1904 = vmatpush1.bf16.msra.mxu0 0
    %1905 = vmatprep.subr.bf16.mxu0 0
    %1906 = vmatpush1.bf16.msra.mxu0 0
    %1907 = vmatprep.subr.bf16.mxu0 0
    %1908 = vmatpush1.bf16.msra.mxu0 0
    %1909 = vmatprep.subr.bf16.mxu0 0
    %1910 = vmatpush1.bf16.msra.mxu0 0
    %1911 = vmatprep.subr.bf16.mxu0 0
    %1912 = vmatpush1.bf16.msra.mxu0 0
    %1913 = vmatprep.mubr.bf16.mxu0 0
    %1914 = vmatmul.mubr.bf16.gmra.mrb[0].mxu0 %v1838
    %v1915 = vpop.f32.mrb[0].mxu0
    %v1916 = vadd.f32 0.0, %v1915
    %v1917 = vpop.f32.mrb[0].mxu0
    %v1918 = vadd.f32 0.0, %v1917
    %v1919 = vpop.f32.mrb[0].mxu0
    %v1920 = vpop.f32.mrb[0].mxu0
    %1921 = vdwg.mxu0
    %v1922 = vld [vmem:[%s530] ss:$8 sm:$0xf]
    %v1924 = vlaneseq
    %v1925 = vshrl.u32 %v1924, 7
    %v1926 = vsub.s32 0, %v1925
    %v1927 = vrot.slane %v1922, %v1926
    %v1928 = vlaneseq
    %v1929 = vshrl.u32 %v1928, 7
    %v1930 = vsub.s32 1, %v1929
    %v1931 = vrot.slane %v1922, %v1930
    %v1932 = vlaneseq
    %v1933 = vshrl.u32 %v1932, 7
    %v1934 = vsub.s32 2, %v1933
    %v1935 = vrot.slane %v1922, %v1934
    %v1936 = vlaneseq
    %v1937 = vshrl.u32 %v1936, 7
    %v1938 = vsub.s32 3, %v1937
    %v1939 = vrot.slane %v1922, %v1938
    %v1944 = vmul.f32 %v1875, %v1927
    %v1945 = vmul.f32 %v1877, %v1931
    %v1946 = vmul.f32 %v1916, %v1935
    %v1947 = vmul.f32 %v1918, %v1939
    %v1948 = vadd.f32 %v1803, %v1944
    %v1949 = vadd.f32 %v1804, %v1945
    %v1950 = vadd.f32 %v1805, %v1946
    %v1951 = vadd.f32 %v1806, %v1947
    %1952 = vrot.lane.b32.xlu0 %v1513, 1
    %v1953 = vpop.permute.xlu0 %1952
    %1954 = vrot.lane.b32.xlu0 %v1517, 1
    %v1955 = vpop.permute.xlu0 %1954
    %1956 = vrot.lane.b32.xlu0 %v1514, 1
    %v1957 = vpop.permute.xlu0 %1956
    %1958 = vrot.lane.b32.xlu0 %v1518, 1
    %v1959 = vpop.permute.xlu0 %1958
    %1960 = vrot.lane.b32.xlu0 %v1515, 1
    %v1961 = vpop.permute.xlu0 %1960
    %1962 = vrot.lane.b32.xlu0 %v1519, 1
    %v1963 = vpop.permute.xlu0 %1962
    %1964 = vrot.lane.b32.xlu0 %v1516, 1
    %v1965 = vpop.permute.xlu0 %1964
    %1966 = vrot.lane.b32.xlu0 %v1520, 1
    %v1967 = vpop.permute.xlu0 %1966
    %v1968 = vsel %vm569, %v1961, %v1965
    %v1969 = vsel %vm569, %v1963, %v1967
    %v1970 = vsel %vm569, %v1957, %v1961
    %v1971 = vsel %vm569, %v1959, %v1963
    %v1972 = vsel %vm569, %v1953, %v1957
    %v1973 = vsel %vm569, %v1955, %v1959
    %v1974 = vsel %vm569, %v1965, %v1953
    %v1975 = vsel %vm569, %v1967, %v1955
    %s1976 = scalar_lea.vmem %s8, 12
    %v1977 = vld [vmem:[%s1976] sm:$0xf]
    %v1978 = vpack.c.bf16 %v1975, %v1974
    %v1979 = vpack.c.bf16 %v1973, %v1972
    %v1980 = vpack.c.bf16 %v1971, %v1970
    %v1981 = vpack.c.bf16 %v1969, %v1968
    %v1983 = vsel %vm1550, %v1977, 0
    %1985 = vmatprep.subr.bf16.mxu0 %v1979
    %1986 = vmatpush1.bf16.msra.mxu0 %v1978
    %1987 = vmatprep.subr.bf16.mxu0 0
    %1988 = vmatpush1.bf16.msra.mxu0 0
    %1989 = vmatprep.subr.bf16.mxu0 0
    %1990 = vmatpush1.bf16.msra.mxu0 0
    %1991 = vmatprep.subr.bf16.mxu0 0
    %1992 = vmatpush1.bf16.msra.mxu0 0
    %1993 = vmatprep.subr.bf16.mxu0 0
    %1994 = vmatpush1.bf16.msra.mxu0 0
    %1995 = vmatprep.subr.bf16.mxu0 0
    %1996 = vmatpush1.bf16.msra.mxu0 0
    %1997 = vmatprep.subr.bf16.mxu0 0
    %1998 = vmatpush1.bf16.msra.mxu0 0
    %1999 = vmatprep.subr.bf16.mxu0 0
    %2000 = vmatpush1.bf16.msra.mxu0 0
    %2001 = vmatprep.subr.bf16.mxu0 0
    %2002 = vmatpush1.bf16.msra.mxu0 0
    %2003 = vmatprep.subr.bf16.mxu0 0
    %2004 = vmatpush1.bf16.msra.mxu0 0
    %2005 = vmatprep.subr.bf16.mxu0 0
    %2006 = vmatpush1.bf16.msra.mxu0 0
    %2007 = vmatprep.subr.bf16.mxu0 0
    %2008 = vmatpush1.bf16.msra.mxu0 0
    %2009 = vmatprep.subr.bf16.mxu0 0
    %2010 = vmatpush1.bf16.msra.mxu0 0
    %2011 = vmatprep.subr.bf16.mxu0 0
    %2012 = vmatpush1.bf16.msra.mxu0 0
    %2013 = vmatprep.subr.bf16.mxu0 0
    %2014 = vmatpush1.bf16.msra.mxu0 0
    %2015 = vmatprep.subr.bf16.mxu0 0
    %2016 = vmatpush1.bf16.msra.mxu0 0
    %2017 = vmatprep.mubr.bf16.mxu0 0
    %2018 = vmatmul.mubr.bf16.gmra.mrb[0].mxu0 %v1983
    %v2019 = vpop.f32.mrb[0].mxu0
    %v2020 = vadd.f32 0.0, %v2019
    %v2021 = vpop.f32.mrb[0].mxu0
    %v2022 = vadd.f32 0.0, %v2021
    %v2023 = vpop.f32.mrb[0].mxu0
    %v2024 = vpop.f32.mrb[0].mxu0
    %2025 = vdwg.mxu0
    %2026 = vmatprep.subr.bf16.mxu0 %v1981
    %2027 = vmatpush1.bf16.msra.mxu0 %v1980
    %2028 = vmatprep.subr.bf16.mxu0 0
    %2029 = vmatpush1.bf16.msra.mxu0 0
    %2030 = vmatprep.subr.bf16.mxu0 0
    %2031 = vmatpush1.bf16.msra.mxu0 0
    %2032 = vmatprep.subr.bf16.mxu0 0
    %2033 = vmatpush1.bf16.msra.mxu0 0
    %2034 = vmatprep.subr.bf16.mxu0 0
    %2035 = vmatpush1.bf16.msra.mxu0 0
    %2036 = vmatprep.subr.bf16.mxu0 0
    %2037 = vmatpush1.bf16.msra.mxu0 0
    %2038 = vmatprep.subr.bf16.mxu0 0
    %2039 = vmatpush1.bf16.msra.mxu0 0
    %2040 = vmatprep.subr.bf16.mxu0 0
    %2041 = vmatpush1.bf16.msra.mxu0 0
    %2042 = vmatprep.subr.bf16.mxu0 0
    %2043 = vmatpush1.bf16.msra.mxu0 0
    %2044 = vmatprep.subr.bf16.mxu0 0
    %2045 = vmatpush1.bf16.msra.mxu0 0
    %2046 = vmatprep.subr.bf16.mxu0 0
    %2047 = vmatpush1.bf16.msra.mxu0 0
    %2048 = vmatprep.subr.bf16.mxu0 0
    %2049 = vmatpush1.bf16.msra.mxu0 0
    %2050 = vmatprep.subr.bf16.mxu0 0
    %2051 = vmatpush1.bf16.msra.mxu0 0
    %2052 = vmatprep.subr.bf16.mxu0 0
    %2053 = vmatpush1.bf16.msra.mxu0 0
    %2054 = vmatprep.subr.bf16.mxu0 0
    %2055 = vmatpush1.bf16.msra.mxu0 0
    %2056 = vmatprep.subr.bf16.mxu0 0
    %2057 = vmatpush1.bf16.msra.mxu0 0
    %2058 = vmatprep.mubr.bf16.mxu0 0
    %2059 = vmatmul.mubr.bf16.gmra.mrb[0].mxu0 %v1983
    %v2060 = vpop.f32.mrb[0].mxu0
    %v2061 = vadd.f32 0.0, %v2060
    %v2062 = vpop.f32.mrb[0].mxu0
    %v2063 = vadd.f32 0.0, %v2062
    %v2064 = vpop.f32.mrb[0].mxu0
    %v2065 = vpop.f32.mrb[0].mxu0
    %2066 = vdwg.mxu0
    %v2067 = vld [vmem:[%s677] ss:$8 sm:$0xf]
    %v2069 = vlaneseq
    %v2070 = vshrl.u32 %v2069, 7
    %v2071 = vsub.s32 0, %v2070
    %v2072 = vrot.slane %v2067, %v2071
    %v2073 = vlaneseq
    %v2074 = vshrl.u32 %v2073, 7
    %v2075 = vsub.s32 1, %v2074
    %v2076 = vrot.slane %v2067, %v2075
    %v2077 = vlaneseq
    %v2078 = vshrl.u32 %v2077, 7
    %v2079 = vsub.s32 2, %v2078
    %v2080 = vrot.slane %v2067, %v2079
    %v2081 = vlaneseq
    %v2082 = vshrl.u32 %v2081, 7
    %v2083 = vsub.s32 3, %v2082
    %v2084 = vrot.slane %v2067, %v2083
    %v2089 = vmul.f32 %v2020, %v2072
    %v2090 = vmul.f32 %v2022, %v2076
    %v2091 = vmul.f32 %v2061, %v2080
    %v2092 = vmul.f32 %v2063, %v2084
    %v2093 = vadd.f32 %v1948, %v2089
    %v2094 = vadd.f32 %v1949, %v2090
    %v2095 = vadd.f32 %v1950, %v2091
    %v2096 = vadd.f32 %v1951, %v2092
    %s2097 = scalar_lea.vmem %s8, 16
    %v2098 = vld [vmem:[%s2097] sm:$0xf]
    %v2099 = vpack.c.bf16 %v1517, %v1513
    %v2100 = vpack.c.bf16 %v1518, %v1514
    %v2101 = vpack.c.bf16 %v1519, %v1515
    %v2102 = vpack.c.bf16 %v1520, %v1516
    %v2104 = vsel %vm1550, %v2098, 0
    %2106 = vmatprep.subr.bf16.mxu0 %v2100
    %2107 = vmatpush1.bf16.msra.mxu0 %v2099
    %2108 = vmatprep.subr.bf16.mxu0 0
    %2109 = vmatpush1.bf16.msra.mxu0 0
    %2110 = vmatprep.subr.bf16.mxu0 0
    %2111 = vmatpush1.bf16.msra.mxu0 0
    %2112 = vmatprep.subr.bf16.mxu0 0
    %2113 = vmatpush1.bf16.msra.mxu0 0
    %2114 = vmatprep.subr.bf16.mxu0 0
    %2115 = vmatpush1.bf16.msra.mxu0 0
    %2116 = vmatprep.subr.bf16.mxu0 0
    %2117 = vmatpush1.bf16.msra.mxu0 0
    %2118 = vmatprep.subr.bf16.mxu0 0
    %2119 = vmatpush1.bf16.msra.mxu0 0
    %2120 = vmatprep.subr.bf16.mxu0 0
    %2121 = vmatpush1.bf16.msra.mxu0 0
    %2122 = vmatprep.subr.bf16.mxu0 0
    %2123 = vmatpush1.bf16.msra.mxu0 0
    %2124 = vmatprep.subr.bf16.mxu0 0
    %2125 = vmatpush1.bf16.msra.mxu0 0
    %2126 = vmatprep.subr.bf16.mxu0 0
    %2127 = vmatpush1.bf16.msra.mxu0 0
    %2128 = vmatprep.subr.bf16.mxu0 0
    %2129 = vmatpush1.bf16.msra.mxu0 0
    %2130 = vmatprep.subr.bf16.mxu0 0
    %2131 = vmatpush1.bf16.msra.mxu0 0
    %2132 = vmatprep.subr.bf16.mxu0 0
    %2133 = vmatpush1.bf16.msra.mxu0 0
    %2134 = vmatprep.subr.bf16.mxu0 0
    %2135 = vmatpush1.bf16.msra.mxu0 0
    %2136 = vmatprep.subr.bf16.mxu0 0
    %2137 = vmatpush1.bf16.msra.mxu0 0
    %2138 = vmatprep.mubr.bf16.mxu0 0
    %2139 = vmatmul.mubr.bf16.gmra.mrb[0].mxu0 %v2104
    %v2140 = vpop.f32.mrb[0].mxu0
    %v2141 = vadd.f32 0.0, %v2140
    %v2142 = vpop.f32.mrb[0].mxu0
    %v2143 = vadd.f32 0.0, %v2142
    %v2144 = vpop.f32.mrb[0].mxu0
    %v2145 = vpop.f32.mrb[0].mxu0
    %2146 = vdwg.mxu0
    %2147 = vmatprep.subr.bf16.mxu0 %v2102
    %2148 = vmatpush1.bf16.msra.mxu0 %v2101
    %2149 = vmatprep.subr.bf16.mxu0 0
    %2150 = vmatpush1.bf16.msra.mxu0 0
    %2151 = vmatprep.subr.bf16.mxu0 0
    %2152 = vmatpush1.bf16.msra.mxu0 0
    %2153 = vmatprep.subr.bf16.mxu0 0
    %2154 = vmatpush1.bf16.msra.mxu0 0
    %2155 = vmatprep.subr.bf16.mxu0 0
    %2156 = vmatpush1.bf16.msra.mxu0 0
    %2157 = vmatprep.subr.bf16.mxu0 0
    %2158 = vmatpush1.bf16.msra.mxu0 0
    %2159 = vmatprep.subr.bf16.mxu0 0
    %2160 = vmatpush1.bf16.msra.mxu0 0
    %2161 = vmatprep.subr.bf16.mxu0 0
    %2162 = vmatpush1.bf16.msra.mxu0 0
    %2163 = vmatprep.subr.bf16.mxu0 0
    %2164 = vmatpush1.bf16.msra.mxu0 0
    %2165 = vmatprep.subr.bf16.mxu0 0
    %2166 = vmatpush1.bf16.msra.mxu0 0
    %2167 = vmatprep.subr.bf16.mxu0 0
    %2168 = vmatpush1.bf16.msra.mxu0 0
    %2169 = vmatprep.subr.bf16.mxu0 0
    %2170 = vmatpush1.bf16.msra.mxu0 0
    %2171 = vmatprep.subr.bf16.mxu0 0
    %2172 = vmatpush1.bf16.msra.mxu0 0
    %2173 = vmatprep.subr.bf16.mxu0 0
    %2174 = vmatpush1.bf16.msra.mxu0 0
    %2175 = vmatprep.subr.bf16.mxu0 0
    %2176 = vmatpush1.bf16.msra.mxu0 0
    %2177 = vmatprep.subr.bf16.mxu0 0
    %2178 = vmatpush1.bf16.msra.mxu0 0
    %2179 = vmatprep.mubr.bf16.mxu0 0
    %2180 = vmatmul.mubr.bf16.gmra.mrb[0].mxu0 %v2104
    %v2181 = vpop.f32.mrb[0].mxu0
    %v2182 = vadd.f32 0.0, %v2181
    %v2183 = vpop.f32.mrb[0].mxu0
    %v2184 = vadd.f32 0.0, %v2183
    %v2185 = vpop.f32.mrb[0].mxu0
    %v2186 = vpop.f32.mrb[0].mxu0
    %2187 = vdwg.mxu0
    %v2188 = vadd.f32 %v2093, %v2141
    %v2189 = vadd.f32 %v2094, %v2143
    %v2190 = vadd.f32 %v2095, %v2182
    %v2191 = vadd.f32 %v2096, %v2184
    %2192 = vrot.lane.b32.xlu0 %v1513, 127
    %v2193 = vpop.permute.xlu0 %2192
    %2194 = vrot.lane.b32.xlu0 %v1517, 127
    %v2195 = vpop.permute.xlu0 %2194
    %2196 = vrot.lane.b32.xlu0 %v1514, 127
    %v2197 = vpop.permute.xlu0 %2196
    %2198 = vrot.lane.b32.xlu0 %v1518, 127
    %v2199 = vpop.permute.xlu0 %2198
    %2200 = vrot.lane.b32.xlu0 %v1515, 127
    %v2201 = vpop.permute.xlu0 %2200
    %2202 = vrot.lane.b32.xlu0 %v1519, 127
    %v2203 = vpop.permute.xlu0 %2202
    %2204 = vrot.lane.b32.xlu0 %v1516, 127
    %v2205 = vpop.permute.xlu0 %2204
    %2206 = vrot.lane.b32.xlu0 %v1520, 127
    %v2207 = vpop.permute.xlu0 %2206
    %v2208 = vsel %vm823, %v2201, %v2205
    %v2209 = vsel %vm823, %v2203, %v2207
    %v2210 = vsel %vm823, %v2197, %v2201
    %v2211 = vsel %vm823, %v2199, %v2203
    %v2212 = vsel %vm823, %v2193, %v2197
    %v2213 = vsel %vm823, %v2195, %v2199
    %v2214 = vsel %vm823, %v2205, %v2193
    %v2215 = vsel %vm823, %v2207, %v2195
    %s2216 = scalar_lea.vmem %s8, 20
    %v2217 = vld [vmem:[%s2216] sm:$0xf]
    %v2218 = vpack.c.bf16 %v2213, %v2212
    %v2219 = vpack.c.bf16 %v2211, %v2210
    %v2220 = vpack.c.bf16 %v2209, %v2208
    %v2221 = vpack.c.bf16 %v2215, %v2214
    %v2223 = vsel %vm1550, %v2217, 0
    %2225 = vmatprep.subr.bf16.mxu0 %v2219
    %2226 = vmatpush1.bf16.msra.mxu0 %v2218
    %2227 = vmatprep.subr.bf16.mxu0 0
    %2228 = vmatpush1.bf16.msra.mxu0 0
    %2229 = vmatprep.subr.bf16.mxu0 0
    %2230 = vmatpush1.bf16.msra.mxu0 0
    %2231 = vmatprep.subr.bf16.mxu0 0
    %2232 = vmatpush1.bf16.msra.mxu0 0
    %2233 = vmatprep.subr.bf16.mxu0 0
    %2234 = vmatpush1.bf16.msra.mxu0 0
    %2235 = vmatprep.subr.bf16.mxu0 0
    %2236 = vmatpush1.bf16.msra.mxu0 0
    %2237 = vmatprep.subr.bf16.mxu0 0
    %2238 = vmatpush1.bf16.msra.mxu0 0
    %2239 = vmatprep.subr.bf16.mxu0 0
    %2240 = vmatpush1.bf16.msra.mxu0 0
    %2241 = vmatprep.subr.bf16.mxu0 0
    %2242 = vmatpush1.bf16.msra.mxu0 0
    %2243 = vmatprep.subr.bf16.mxu0 0
    %2244 = vmatpush1.bf16.msra.mxu0 0
    %2245 = vmatprep.subr.bf16.mxu0 0
    %2246 = vmatpush1.bf16.msra.mxu0 0
    %2247 = vmatprep.subr.bf16.mxu0 0
    %2248 = vmatpush1.bf16.msra.mxu0 0
    %2249 = vmatprep.subr.bf16.mxu0 0
    %2250 = vmatpush1.bf16.msra.mxu0 0
    %2251 = vmatprep.subr.bf16.mxu0 0
    %2252 = vmatpush1.bf16.msra.mxu0 0
    %2253 = vmatprep.subr.bf16.mxu0 0
    %2254 = vmatpush1.bf16.msra.mxu0 0
    %2255 = vmatprep.subr.bf16.mxu0 0
    %2256 = vmatpush1.bf16.msra.mxu0 0
    %2257 = vmatprep.mubr.bf16.mxu0 0
    %2258 = vmatmul.mubr.bf16.gmra.mrb[0].mxu0 %v2223
    %v2259 = vpop.f32.mrb[0].mxu0
    %v2260 = vadd.f32 0.0, %v2259
    %v2261 = vpop.f32.mrb[0].mxu0
    %v2262 = vadd.f32 0.0, %v2261
    %v2263 = vpop.f32.mrb[0].mxu0
    %v2264 = vpop.f32.mrb[0].mxu0
    %2265 = vdwg.mxu0
    %2266 = vmatprep.subr.bf16.mxu0 %v2221
    %2267 = vmatpush1.bf16.msra.mxu0 %v2220
    %2268 = vmatprep.subr.bf16.mxu0 0
    %2269 = vmatpush1.bf16.msra.mxu0 0
    %2270 = vmatprep.subr.bf16.mxu0 0
    %2271 = vmatpush1.bf16.msra.mxu0 0
    %2272 = vmatprep.subr.bf16.mxu0 0
    %2273 = vmatpush1.bf16.msra.mxu0 0
    %2274 = vmatprep.subr.bf16.mxu0 0
    %2275 = vmatpush1.bf16.msra.mxu0 0
    %2276 = vmatprep.subr.bf16.mxu0 0
    %2277 = vmatpush1.bf16.msra.mxu0 0
    %2278 = vmatprep.subr.bf16.mxu0 0
    %2279 = vmatpush1.bf16.msra.mxu0 0
    %2280 = vmatprep.subr.bf16.mxu0 0
    %2281 = vmatpush1.bf16.msra.mxu0 0
    %2282 = vmatprep.subr.bf16.mxu0 0
    %2283 = vmatpush1.bf16.msra.mxu0 0
    %2284 = vmatprep.subr.bf16.mxu0 0
    %2285 = vmatpush1.bf16.msra.mxu0 0
    %2286 = vmatprep.subr.bf16.mxu0 0
    %2287 = vmatpush1.bf16.msra.mxu0 0
    %2288 = vmatprep.subr.bf16.mxu0 0
    %2289 = vmatpush1.bf16.msra.mxu0 0
    %2290 = vmatprep.subr.bf16.mxu0 0
    %2291 = vmatpush1.bf16.msra.mxu0 0
    %2292 = vmatprep.subr.bf16.mxu0 0
    %2293 = vmatpush1.bf16.msra.mxu0 0
    %2294 = vmatprep.subr.bf16.mxu0 0
    %2295 = vmatpush1.bf16.msra.mxu0 0
    %2296 = vmatprep.subr.bf16.mxu0 0
    %2297 = vmatpush1.bf16.msra.mxu0 0
    %2298 = vmatprep.mubr.bf16.mxu0 0
    %2299 = vmatmul.mubr.bf16.gmra.mrb[0].mxu0 %v2223
    %v2300 = vpop.f32.mrb[0].mxu0
    %v2301 = vadd.f32 0.0, %v2300
    %v2302 = vpop.f32.mrb[0].mxu0
    %v2303 = vadd.f32 0.0, %v2302
    %v2304 = vpop.f32.mrb[0].mxu0
    %v2305 = vpop.f32.mrb[0].mxu0
    %2306 = vdwg.mxu0
    %v2307 = vld [vmem:[%s931] ss:$8 sm:$0xf]
    %v2309 = vlaneseq
    %v2310 = vshrl.u32 %v2309, 7
    %v2311 = vsub.s32 0, %v2310
    %v2312 = vrot.slane %v2307, %v2311
    %v2313 = vlaneseq
    %v2314 = vshrl.u32 %v2313, 7
    %v2315 = vsub.s32 1, %v2314
    %v2316 = vrot.slane %v2307, %v2315
    %v2317 = vlaneseq
    %v2318 = vshrl.u32 %v2317, 7
    %v2319 = vsub.s32 2, %v2318
    %v2320 = vrot.slane %v2307, %v2319
    %v2321 = vlaneseq
    %v2322 = vshrl.u32 %v2321, 7
    %v2323 = vsub.s32 3, %v2322
    %v2324 = vrot.slane %v2307, %v2323
    %v2329 = vmul.f32 %v2260, %v2312
    %v2330 = vmul.f32 %v2262, %v2316
    %v2331 = vmul.f32 %v2301, %v2320
    %v2332 = vmul.f32 %v2303, %v2324
    %v2333 = vadd.f32 %v2188, %v2329
    %v2334 = vadd.f32 %v2189, %v2330
    %v2335 = vadd.f32 %v2190, %v2331
    %v2336 = vadd.f32 %v2191, %v2332
    %2337 = vrot.lane.b32.xlu0 %v1513, 113
    %v2338 = vpop.permute.xlu0 %2337
    %2339 = vrot.lane.b32.xlu0 %v1517, 113
    %v2340 = vpop.permute.xlu0 %2339
    %2341 = vrot.lane.b32.xlu0 %v1514, 113
    %v2342 = vpop.permute.xlu0 %2341
    %2343 = vrot.lane.b32.xlu0 %v1518, 113
    %v2344 = vpop.permute.xlu0 %2343
    %2345 = vrot.lane.b32.xlu0 %v1515, 113
    %v2346 = vpop.permute.xlu0 %2345
    %2347 = vrot.lane.b32.xlu0 %v1519, 113
    %v2348 = vpop.permute.xlu0 %2347
    %2349 = vrot.lane.b32.xlu0 %v1516, 113
    %v2350 = vpop.permute.xlu0 %2349
    %2351 = vrot.lane.b32.xlu0 %v1520, 113
    %v2352 = vpop.permute.xlu0 %2351
    %v2353 = vsel %vm970, %v2346, %v2350
    %v2354 = vsel %vm970, %v2348, %v2352
    %v2355 = vsel %vm970, %v2342, %v2346
    %v2356 = vsel %vm970, %v2344, %v2348
    %v2357 = vsel %vm970, %v2338, %v2342
    %v2358 = vsel %vm970, %v2340, %v2344
    %v2359 = vsel %vm970, %v2350, %v2338
    %v2360 = vsel %vm970, %v2352, %v2340
    %s2361 = scalar_lea.vmem %s8, 24
    %v2362 = vld [vmem:[%s2361] sm:$0xf]
    %v2363 = vpack.c.bf16 %v2358, %v2357
    %v2364 = vpack.c.bf16 %v2356, %v2355
    %v2365 = vpack.c.bf16 %v2354, %v2353
    %v2366 = vpack.c.bf16 %v2360, %v2359
    %v2368 = vsel %vm1550, %v2362, 0
    %2370 = vmatprep.subr.bf16.mxu0 %v2364
    %2371 = vmatpush1.bf16.msra.mxu0 %v2363
    %2372 = vmatprep.subr.bf16.mxu0 0
    %2373 = vmatpush1.bf16.msra.mxu0 0
    %2374 = vmatprep.subr.bf16.mxu0 0
    %2375 = vmatpush1.bf16.msra.mxu0 0
    %2376 = vmatprep.subr.bf16.mxu0 0
    %2377 = vmatpush1.bf16.msra.mxu0 0
    %2378 = vmatprep.subr.bf16.mxu0 0
    %2379 = vmatpush1.bf16.msra.mxu0 0
    %2380 = vmatprep.subr.bf16.mxu0 0
    %2381 = vmatpush1.bf16.msra.mxu0 0
    %2382 = vmatprep.subr.bf16.mxu0 0
    %2383 = vmatpush1.bf16.msra.mxu0 0
    %2384 = vmatprep.subr.bf16.mxu0 0
    %2385 = vmatpush1.bf16.msra.mxu0 0
    %2386 = vmatprep.subr.bf16.mxu0 0
    %2387 = vmatpush1.bf16.msra.mxu0 0
    %2388 = vmatprep.subr.bf16.mxu0 0
    %2389 = vmatpush1.bf16.msra.mxu0 0
    %2390 = vmatprep.subr.bf16.mxu0 0
    %2391 = vmatpush1.bf16.msra.mxu0 0
    %2392 = vmatprep.subr.bf16.mxu0 0
    %2393 = vmatpush1.bf16.msra.mxu0 0
    %2394 = vmatprep.subr.bf16.mxu0 0
    %2395 = vmatpush1.bf16.msra.mxu0 0
    %2396 = vmatprep.subr.bf16.mxu0 0
    %2397 = vmatpush1.bf16.msra.mxu0 0
    %2398 = vmatprep.subr.bf16.mxu0 0
    %2399 = vmatpush1.bf16.msra.mxu0 0
    %2400 = vmatprep.subr.bf16.mxu0 0
    %2401 = vmatpush1.bf16.msra.mxu0 0
    %2402 = vmatprep.mubr.bf16.mxu0 0
    %2403 = vmatmul.mubr.bf16.gmra.mrb[0].mxu0 %v2368
    %v2404 = vpop.f32.mrb[0].mxu0
    %v2405 = vadd.f32 0.0, %v2404
    %v2406 = vpop.f32.mrb[0].mxu0
    %v2407 = vadd.f32 0.0, %v2406
    %v2408 = vpop.f32.mrb[0].mxu0
    %v2409 = vpop.f32.mrb[0].mxu0
    %2410 = vdwg.mxu0
    %2411 = vmatprep.subr.bf16.mxu0 %v2366
    %2412 = vmatpush1.bf16.msra.mxu0 %v2365
    %2413 = vmatprep.subr.bf16.mxu0 0
    %2414 = vmatpush1.bf16.msra.mxu0 0
    %2415 = vmatprep.subr.bf16.mxu0 0
    %2416 = vmatpush1.bf16.msra.mxu0 0
    %2417 = vmatprep.subr.bf16.mxu0 0
    %2418 = vmatpush1.bf16.msra.mxu0 0
    %2419 = vmatprep.subr.bf16.mxu0 0
    %2420 = vmatpush1.bf16.msra.mxu0 0
    %2421 = vmatprep.subr.bf16.mxu0 0
    %2422 = vmatpush1.bf16.msra.mxu0 0
    %2423 = vmatprep.subr.bf16.mxu0 0
    %2424 = vmatpush1.bf16.msra.mxu0 0
    %2425 = vmatprep.subr.bf16.mxu0 0
    %2426 = vmatpush1.bf16.msra.mxu0 0
    %2427 = vmatprep.subr.bf16.mxu0 0
    %2428 = vmatpush1.bf16.msra.mxu0 0
    %2429 = vmatprep.subr.bf16.mxu0 0
    %2430 = vmatpush1.bf16.msra.mxu0 0
    %2431 = vmatprep.subr.bf16.mxu0 0
    %2432 = vmatpush1.bf16.msra.mxu0 0
    %2433 = vmatprep.subr.bf16.mxu0 0
    %2434 = vmatpush1.bf16.msra.mxu0 0
    %2435 = vmatprep.subr.bf16.mxu0 0
    %2436 = vmatpush1.bf16.msra.mxu0 0
    %2437 = vmatprep.subr.bf16.mxu0 0
    %2438 = vmatpush1.bf16.msra.mxu0 0
    %2439 = vmatprep.subr.bf16.mxu0 0
    %2440 = vmatpush1.bf16.msra.mxu0 0
    %2441 = vmatprep.subr.bf16.mxu0 0
    %2442 = vmatpush1.bf16.msra.mxu0 0
    %2443 = vmatprep.mubr.bf16.mxu0 0
    %2444 = vmatmul.mubr.bf16.gmra.mrb[0].mxu0 %v2368
    %v2445 = vpop.f32.mrb[0].mxu0
    %v2446 = vadd.f32 0.0, %v2445
    %v2447 = vpop.f32.mrb[0].mxu0
    %v2448 = vadd.f32 0.0, %v2447
    %v2449 = vpop.f32.mrb[0].mxu0
    %v2450 = vpop.f32.mrb[0].mxu0
    %2451 = vdwg.mxu0
    %v2452 = vld [vmem:[%s1078] ss:$8 sm:$0xf]
    %v2454 = vlaneseq
    %v2455 = vshrl.u32 %v2454, 7
    %v2456 = vsub.s32 0, %v2455
    %v2457 = vrot.slane %v2452, %v2456
    %v2458 = vlaneseq
    %v2459 = vshrl.u32 %v2458, 7
    %v2460 = vsub.s32 1, %v2459
    %v2461 = vrot.slane %v2452, %v2460
    %v2462 = vlaneseq
    %v2463 = vshrl.u32 %v2462, 7
    %v2464 = vsub.s32 2, %v2463
    %v2465 = vrot.slane %v2452, %v2464
    %v2466 = vlaneseq
    %v2467 = vshrl.u32 %v2466, 7
    %v2468 = vsub.s32 3, %v2467
    %v2469 = vrot.slane %v2452, %v2468
    %v2474 = vmul.f32 %v2405, %v2457
    %v2475 = vmul.f32 %v2407, %v2461
    %v2476 = vmul.f32 %v2446, %v2465
    %v2477 = vmul.f32 %v2448, %v2469
    %v2478 = vadd.f32 %v2333, %v2474
    %v2479 = vadd.f32 %v2334, %v2475
    %v2480 = vadd.f32 %v2335, %v2476
    %v2481 = vadd.f32 %v2336, %v2477
    %2482 = vrot.lane.b32.xlu0 %v1513, 112
    %v2483 = vpop.permute.xlu0 %2482
    %2484 = vrot.lane.b32.xlu0 %v1517, 112
    %v2485 = vpop.permute.xlu0 %2484
    %2486 = vrot.lane.b32.xlu0 %v1514, 112
    %v2487 = vpop.permute.xlu0 %2486
    %2488 = vrot.lane.b32.xlu0 %v1518, 112
    %v2489 = vpop.permute.xlu0 %2488
    %2490 = vrot.lane.b32.xlu0 %v1515, 112
    %v2491 = vpop.permute.xlu0 %2490
    %2492 = vrot.lane.b32.xlu0 %v1519, 112
    %v2493 = vpop.permute.xlu0 %2492
    %2494 = vrot.lane.b32.xlu0 %v1516, 112
    %v2495 = vpop.permute.xlu0 %2494
    %2496 = vrot.lane.b32.xlu0 %v1520, 112
    %v2497 = vpop.permute.xlu0 %2496
    %v2498 = vsel %vm1117, %v2491, %v2495
    %v2499 = vsel %vm1117, %v2493, %v2497
    %v2500 = vsel %vm1117, %v2487, %v2491
    %v2501 = vsel %vm1117, %v2489, %v2493
    %v2502 = vsel %vm1117, %v2483, %v2487
    %v2503 = vsel %vm1117, %v2485, %v2489
    %v2504 = vsel %vm1117, %v2495, %v2483
    %v2505 = vsel %vm1117, %v2497, %v2485
    %s2506 = scalar_lea.vmem %s8, 28
    %v2507 = vld [vmem:[%s2506] sm:$0xf]
    %v2508 = vpack.c.bf16 %v2503, %v2502
    %v2509 = vpack.c.bf16 %v2501, %v2500
    %v2510 = vpack.c.bf16 %v2499, %v2498
    %v2511 = vpack.c.bf16 %v2505, %v2504
    %v2513 = vsel %vm1550, %v2507, 0
    %2515 = vmatprep.subr.bf16.mxu0 %v2509
    %2516 = vmatpush1.bf16.msra.mxu0 %v2508
    %2517 = vmatprep.subr.bf16.mxu0 0
    %2518 = vmatpush1.bf16.msra.mxu0 0
    %2519 = vmatprep.subr.bf16.mxu0 0
    %2520 = vmatpush1.bf16.msra.mxu0 0
    %2521 = vmatprep.subr.bf16.mxu0 0
    %2522 = vmatpush1.bf16.msra.mxu0 0
    %2523 = vmatprep.subr.bf16.mxu0 0
    %2524 = vmatpush1.bf16.msra.mxu0 0
    %2525 = vmatprep.subr.bf16.mxu0 0
    %2526 = vmatpush1.bf16.msra.mxu0 0
    %2527 = vmatprep.subr.bf16.mxu0 0
    %2528 = vmatpush1.bf16.msra.mxu0 0
    %2529 = vmatprep.subr.bf16.mxu0 0
    %2530 = vmatpush1.bf16.msra.mxu0 0
    %2531 = vmatprep.subr.bf16.mxu0 0
    %2532 = vmatpush1.bf16.msra.mxu0 0
    %2533 = vmatprep.subr.bf16.mxu0 0
    %2534 = vmatpush1.bf16.msra.mxu0 0
    %2535 = vmatprep.subr.bf16.mxu0 0
    %2536 = vmatpush1.bf16.msra.mxu0 0
    %2537 = vmatprep.subr.bf16.mxu0 0
    %2538 = vmatpush1.bf16.msra.mxu0 0
    %2539 = vmatprep.subr.bf16.mxu0 0
    %2540 = vmatpush1.bf16.msra.mxu0 0
    %2541 = vmatprep.subr.bf16.mxu0 0
    %2542 = vmatpush1.bf16.msra.mxu0 0
    %2543 = vmatprep.subr.bf16.mxu0 0
    %2544 = vmatpush1.bf16.msra.mxu0 0
    %2545 = vmatprep.subr.bf16.mxu0 0
    %2546 = vmatpush1.bf16.msra.mxu0 0
    %2547 = vmatprep.mubr.bf16.mxu0 0
    %2548 = vmatmul.mubr.bf16.gmra.mrb[0].mxu0 %v2513
    %v2549 = vpop.f32.mrb[0].mxu0
    %v2550 = vadd.f32 0.0, %v2549
    %v2551 = vpop.f32.mrb[0].mxu0
    %v2552 = vadd.f32 0.0, %v2551
    %v2553 = vpop.f32.mrb[0].mxu0
    %v2554 = vpop.f32.mrb[0].mxu0
    %2555 = vdwg.mxu0
    %2556 = vmatprep.subr.bf16.mxu0 %v2511
    %2557 = vmatpush1.bf16.msra.mxu0 %v2510
    %2558 = vmatprep.subr.bf16.mxu0 0
    %2559 = vmatpush1.bf16.msra.mxu0 0
    %2560 = vmatprep.subr.bf16.mxu0 0
    %2561 = vmatpush1.bf16.msra.mxu0 0
    %2562 = vmatprep.subr.bf16.mxu0 0
    %2563 = vmatpush1.bf16.msra.mxu0 0
    %2564 = vmatprep.subr.bf16.mxu0 0
    %2565 = vmatpush1.bf16.msra.mxu0 0
    %2566 = vmatprep.subr.bf16.mxu0 0
    %2567 = vmatpush1.bf16.msra.mxu0 0
    %2568 = vmatprep.subr.bf16.mxu0 0
    %2569 = vmatpush1.bf16.msra.mxu0 0
    %2570 = vmatprep.subr.bf16.mxu0 0
    %2571 = vmatpush1.bf16.msra.mxu0 0
    %2572 = vmatprep.subr.bf16.mxu0 0
    %2573 = vmatpush1.bf16.msra.mxu0 0
    %2574 = vmatprep.subr.bf16.mxu0 0
    %2575 = vmatpush1.bf16.msra.mxu0 0
    %2576 = vmatprep.subr.bf16.mxu0 0
    %2577 = vmatpush1.bf16.msra.mxu0 0
    %2578 = vmatprep.subr.bf16.mxu0 0
    %2579 = vmatpush1.bf16.msra.mxu0 0
    %2580 = vmatprep.subr.bf16.mxu0 0
    %2581 = vmatpush1.bf16.msra.mxu0 0
    %2582 = vmatprep.subr.bf16.mxu0 0
    %2583 = vmatpush1.bf16.msra.mxu0 0
    %2584 = vmatprep.subr.bf16.mxu0 0
    %2585 = vmatpush1.bf16.msra.mxu0 0
    %2586 = vmatprep.subr.bf16.mxu0 0
    %2587 = vmatpush1.bf16.msra.mxu0 0
    %2588 = vmatprep.mubr.bf16.mxu0 0
    %2589 = vmatmul.mubr.bf16.gmra.mrb[0].mxu0 %v2513
    %v2590 = vpop.f32.mrb[0].mxu0
    %v2591 = vadd.f32 0.0, %v2590
    %v2592 = vpop.f32.mrb[0].mxu0
    %v2593 = vadd.f32 0.0, %v2592
    %v2594 = vpop.f32.mrb[0].mxu0
    %v2595 = vpop.f32.mrb[0].mxu0
    %2596 = vdwg.mxu0
    %v2597 = vld [vmem:[%s1225] ss:$8 sm:$0xf]
    %v2599 = vlaneseq
    %v2600 = vshrl.u32 %v2599, 7
    %v2601 = vsub.s32 0, %v2600
    %v2602 = vrot.slane %v2597, %v2601
    %v2603 = vlaneseq
    %v2604 = vshrl.u32 %v2603, 7
    %v2605 = vsub.s32 1, %v2604
    %v2606 = vrot.slane %v2597, %v2605
    %v2607 = vlaneseq
    %v2608 = vshrl.u32 %v2607, 7
    %v2609 = vsub.s32 2, %v2608
    %v2610 = vrot.slane %v2597, %v2609
    %v2611 = vlaneseq
    %v2612 = vshrl.u32 %v2611, 7
    %v2613 = vsub.s32 3, %v2612
    %v2614 = vrot.slane %v2597, %v2613
    %v2619 = vmul.f32 %v2550, %v2602
    %v2620 = vmul.f32 %v2552, %v2606
    %v2621 = vmul.f32 %v2591, %v2610
    %v2622 = vmul.f32 %v2593, %v2614
    %v2623 = vadd.f32 %v2478, %v2619
    %v2624 = vadd.f32 %v2479, %v2620
    %v2625 = vadd.f32 %v2480, %v2621
    %v2626 = vadd.f32 %v2481, %v2622
    %2627 = vrot.lane.b32.xlu0 %v1513, 111
    %v2628 = vpop.permute.xlu0 %2627
    %2629 = vrot.lane.b32.xlu0 %v1517, 111
    %v2630 = vpop.permute.xlu0 %2629
    %2631 = vrot.lane.b32.xlu0 %v1514, 111
    %v2632 = vpop.permute.xlu0 %2631
    %2633 = vrot.lane.b32.xlu0 %v1518, 111
    %v2634 = vpop.permute.xlu0 %2633
    %2635 = vrot.lane.b32.xlu0 %v1515, 111
    %v2636 = vpop.permute.xlu0 %2635
    %2637 = vrot.lane.b32.xlu0 %v1519, 111
    %v2638 = vpop.permute.xlu0 %2637
    %2639 = vrot.lane.b32.xlu0 %v1516, 111
    %v2640 = vpop.permute.xlu0 %2639
    %2641 = vrot.lane.b32.xlu0 %v1520, 111
    %v2642 = vpop.permute.xlu0 %2641
    %v2643 = vsel %vm1264, %v2636, %v2640
    %v2644 = vsel %vm1264, %v2638, %v2642
    %v2645 = vsel %vm1264, %v2632, %v2636
    %v2646 = vsel %vm1264, %v2634, %v2638
    %v2647 = vsel %vm1264, %v2628, %v2632
    %v2648 = vsel %vm1264, %v2630, %v2634
    %v2649 = vsel %vm1264, %v2640, %v2628
    %v2650 = vsel %vm1264, %v2642, %v2630
    %s2651 = scalar_lea.vmem %s8, 32
    %v2652 = vld [vmem:[%s2651] sm:$0xf]
    %v2653 = vpack.c.bf16 %v2648, %v2647
    %v2654 = vpack.c.bf16 %v2646, %v2645
    %v2655 = vpack.c.bf16 %v2644, %v2643
    %v2656 = vpack.c.bf16 %v2650, %v2649
    %v2658 = vsel %vm1550, %v2652, 0
    %2660 = vmatprep.subr.bf16.mxu0 %v2654
    %2661 = vmatpush1.bf16.msra.mxu0 %v2653
    %2662 = vmatprep.subr.bf16.mxu0 0
    %2663 = vmatpush1.bf16.msra.mxu0 0
    %2664 = vmatprep.subr.bf16.mxu0 0
    %2665 = vmatpush1.bf16.msra.mxu0 0
    %2666 = vmatprep.subr.bf16.mxu0 0
    %2667 = vmatpush1.bf16.msra.mxu0 0
    %2668 = vmatprep.subr.bf16.mxu0 0
    %2669 = vmatpush1.bf16.msra.mxu0 0
    %2670 = vmatprep.subr.bf16.mxu0 0
    %2671 = vmatpush1.bf16.msra.mxu0 0
    %2672 = vmatprep.subr.bf16.mxu0 0
    %2673 = vmatpush1.bf16.msra.mxu0 0
    %2674 = vmatprep.subr.bf16.mxu0 0
    %2675 = vmatpush1.bf16.msra.mxu0 0
    %2676 = vmatprep.subr.bf16.mxu0 0
    %2677 = vmatpush1.bf16.msra.mxu0 0
    %2678 = vmatprep.subr.bf16.mxu0 0
    %2679 = vmatpush1.bf16.msra.mxu0 0
    %2680 = vmatprep.subr.bf16.mxu0 0
    %2681 = vmatpush1.bf16.msra.mxu0 0
    %2682 = vmatprep.subr.bf16.mxu0 0
    %2683 = vmatpush1.bf16.msra.mxu0 0
    %2684 = vmatprep.subr.bf16.mxu0 0
    %2685 = vmatpush1.bf16.msra.mxu0 0
    %2686 = vmatprep.subr.bf16.mxu0 0
    %2687 = vmatpush1.bf16.msra.mxu0 0
    %2688 = vmatprep.subr.bf16.mxu0 0
    %2689 = vmatpush1.bf16.msra.mxu0 0
    %2690 = vmatprep.subr.bf16.mxu0 0
    %2691 = vmatpush1.bf16.msra.mxu0 0
    %2692 = vmatprep.mubr.bf16.mxu0 0
    %2693 = vmatmul.mubr.bf16.gmra.mrb[0].mxu0 %v2658
    %v2694 = vpop.f32.mrb[0].mxu0
    %v2695 = vadd.f32 0.0, %v2694
    %v2696 = vpop.f32.mrb[0].mxu0
    %v2697 = vadd.f32 0.0, %v2696
    %v2698 = vpop.f32.mrb[0].mxu0
    %v2699 = vpop.f32.mrb[0].mxu0
    %2700 = vdwg.mxu0
    %2701 = vmatprep.subr.bf16.mxu0 %v2656
    %2702 = vmatpush1.bf16.msra.mxu0 %v2655
    %2703 = vmatprep.subr.bf16.mxu0 0
    %2704 = vmatpush1.bf16.msra.mxu0 0
    %2705 = vmatprep.subr.bf16.mxu0 0
    %2706 = vmatpush1.bf16.msra.mxu0 0
    %2707 = vmatprep.subr.bf16.mxu0 0
    %2708 = vmatpush1.bf16.msra.mxu0 0
    %2709 = vmatprep.subr.bf16.mxu0 0
    %2710 = vmatpush1.bf16.msra.mxu0 0
    %2711 = vmatprep.subr.bf16.mxu0 0
    %2712 = vmatpush1.bf16.msra.mxu0 0
    %2713 = vmatprep.subr.bf16.mxu0 0
    %2714 = vmatpush1.bf16.msra.mxu0 0
    %2715 = vmatprep.subr.bf16.mxu0 0
    %2716 = vmatpush1.bf16.msra.mxu0 0
    %2717 = vmatprep.subr.bf16.mxu0 0
    %2718 = vmatpush1.bf16.msra.mxu0 0
    %2719 = vmatprep.subr.bf16.mxu0 0
    %2720 = vmatpush1.bf16.msra.mxu0 0
    %2721 = vmatprep.subr.bf16.mxu0 0
    %2722 = vmatpush1.bf16.msra.mxu0 0
    %2723 = vmatprep.subr.bf16.mxu0 0
    %2724 = vmatpush1.bf16.msra.mxu0 0
    %2725 = vmatprep.subr.bf16.mxu0 0
    %2726 = vmatpush1.bf16.msra.mxu0 0
    %2727 = vmatprep.subr.bf16.mxu0 0
    %2728 = vmatpush1.bf16.msra.mxu0 0
    %2729 = vmatprep.subr.bf16.mxu0 0
    %2730 = vmatpush1.bf16.msra.mxu0 0
    %2731 = vmatprep.subr.bf16.mxu0 0
    %2732 = vmatpush1.bf16.msra.mxu0 0
    %2733 = vmatprep.mubr.bf16.mxu0 0
    %2734 = vmatmul.mubr.bf16.gmra.mrb[0].mxu0 %v2658
    %v2735 = vpop.f32.mrb[0].mxu0
    %v2736 = vadd.f32 0.0, %v2735
    %v2737 = vpop.f32.mrb[0].mxu0
    %v2738 = vadd.f32 0.0, %v2737
    %v2739 = vpop.f32.mrb[0].mxu0
    %v2740 = vpop.f32.mrb[0].mxu0
    %2741 = vdwg.mxu0
    %v2742 = vld [vmem:[%s1372] ss:$8 sm:$0xf]
    %v2744 = vlaneseq
    %v2745 = vshrl.u32 %v2744, 7
    %v2746 = vsub.s32 0, %v2745
    %v2747 = vrot.slane %v2742, %v2746
    %v2748 = vlaneseq
    %v2749 = vshrl.u32 %v2748, 7
    %v2750 = vsub.s32 1, %v2749
    %v2751 = vrot.slane %v2742, %v2750
    %v2752 = vlaneseq
    %v2753 = vshrl.u32 %v2752, 7
    %v2754 = vsub.s32 2, %v2753
    %v2755 = vrot.slane %v2742, %v2754
    %v2756 = vlaneseq
    %v2757 = vshrl.u32 %v2756, 7
    %v2758 = vsub.s32 3, %v2757
    %v2759 = vrot.slane %v2742, %v2758
    %v2764 = vmul.f32 %v2695, %v2747
    %v2765 = vmul.f32 %v2697, %v2751
    %v2766 = vmul.f32 %v2736, %v2755
    %v2767 = vmul.f32 %v2738, %v2759
    %v2768 = vadd.f32 %v2623, %v2764
    %v2769 = vadd.f32 %v2624, %v2765
    %v2770 = vadd.f32 %v2625, %v2766
    %v2771 = vadd.f32 %v2626, %v2767
    %2773 = vset.pattern.permute.xlu0 0
    %2774 = vperm.xlu0 %2773, %v1420
    %v2775 = vpop.permute.xlu0 %2774
    %v2777 = vadd.f32 %v2768, %v2775
    %v2778 = vadd.f32 %v2769, %v2775
    %v2779 = vadd.f32 %v2770, %v2775
    %v2780 = vadd.f32 %v2771, %v2775
    %2781 = vst [vmem:[#allocation2 + $0x40] sm:$0xff] %v2777
    %2782 = vst [vmem:[#allocation2 + $0x48] sm:$0xff] %v2778
    %2783 = vst [vmem:[#allocation2 + $0x50] sm:$0xff] %v2779
    %2784 = vst [vmem:[#allocation2 + $0x58] sm:$0xff] %v2780
    %v2785 = vld [vmem:[%s10] sm:$0xff]
    %v2786 = vld [vmem:[%s10 + $0x8] sm:$0xff]
    %v2787 = vld [vmem:[%s10 + $0x10] sm:$0xff]
    %v2788 = vld [vmem:[%s11] sm:$0xff]
    %v2789 = vld [vmem:[%s11 + $0x8] sm:$0xff]
    %v2790 = vld [vmem:[%s11 + $0x10] sm:$0xff]
    %v2791 = vld [vmem:[%s13] sm:$0xff]
    %v2792 = vld [vmem:[#allocation2] sm:$0xff]
    %v2793 = vld [vmem:[#allocation2 + $0x8] sm:$0xff]
    %v2794 = vld [vmem:[#allocation2 + $0x10] sm:$0xff]
    %v2795 = vld [vmem:[#allocation2 + $0x18] sm:$0xff]
    %v2796 = vld [vmem:[#allocation2 + $0x20] sm:$0xff]
    %v2797 = vld [vmem:[#allocation2 + $0x28] sm:$0xff]
    %v2798 = vld [vmem:[#allocation2 + $0x30] sm:$0xff]
    %v2799 = vld [vmem:[#allocation2 + $0x38] sm:$0xff]
    %v2800 = vld [vmem:[#allocation2 + $0x40] sm:$0xff]
    %v2801 = vld [vmem:[#allocation2 + $0x48] sm:$0xff]
    %v2802 = vld [vmem:[#allocation2 + $0x50] sm:$0xff]
    %v2803 = vld [vmem:[#allocation2 + $0x58] sm:$0xff]
    %v2804 = vadd.f32 %v2792, %v2793
    %v2805 = vadd.f32 %v2804, %v2794
    %v2806 = vadd.f32 %v2805, %v2795
    %2807 = vadd.xlane.f32.xlu0 %v2806
    %v2808 = vpop.xlane.xlu0 %2807
    %v2809 = vadd.f32 %v2796, %v2797
    %v2810 = vadd.f32 %v2809, %v2798
    %v2811 = vadd.f32 %v2810, %v2799
    %2812 = vadd.xlane.f32.xlu0 %v2811
    %v2813 = vpop.xlane.xlu0 %2812
    %v2814 = vadd.f32 %v2800, %v2801
    %v2815 = vadd.f32 %v2814, %v2802
    %v2816 = vadd.f32 %v2815, %v2803
    %2817 = vadd.xlane.f32.xlu0 %v2816
    %v2818 = vpop.xlane.xlu0 %2817
    %v2819 = vmul.f32 %v2792, %v2792
    %v2820 = vmul.f32 %v2793, %v2793
    %v2821 = vmul.f32 %v2794, %v2794
    %v2822 = vmul.f32 %v2795, %v2795
    %v2823 = vmul.f32 %v2796, %v2796
    %v2824 = vmul.f32 %v2797, %v2797
    %v2825 = vmul.f32 %v2798, %v2798
    %v2826 = vmul.f32 %v2799, %v2799
    %v2827 = vmul.f32 %v2800, %v2800
    %v2828 = vmul.f32 %v2801, %v2801
    %v2829 = vmul.f32 %v2802, %v2802
    %v2830 = vmul.f32 %v2803, %v2803
    %v2831 = vadd.f32 %v2819, %v2820
    %v2832 = vadd.f32 %v2831, %v2821
    %v2833 = vadd.f32 %v2832, %v2822
    %2834 = vadd.xlane.f32.xlu0 %v2833
    %v2835 = vpop.xlane.xlu0 %2834
    %v2836 = vadd.f32 %v2823, %v2824
    %v2837 = vadd.f32 %v2836, %v2825
    %v2838 = vadd.f32 %v2837, %v2826
    %2839 = vadd.xlane.f32.xlu0 %v2838
    %v2840 = vpop.xlane.xlu0 %2839
    %v2841 = vadd.f32 %v2827, %v2828
    %v2842 = vadd.f32 %v2841, %v2829
    %v2843 = vadd.f32 %v2842, %v2830
    %2844 = vadd.xlane.f32.xlu0 %v2843
    %v2845 = vpop.xlane.xlu0 %2844
    %v2846 = vmul.f32 %v2808, 0.001953125
    %v2847 = vmul.f32 %v2813, 0.001953125
    %v2848 = vmul.f32 %v2818, 0.001953125
    %v2849 = vmul.f32 %v2835, 0.001953125
    %v2850 = vmul.f32 %v2840, 0.001953125
    %v2851 = vmul.f32 %v2845, 0.001953125
    %v2852 = vmul.f32 %v2846, %v2846
    %v2853 = vmul.f32 %v2847, %v2847
    %v2854 = vmul.f32 %v2848, %v2848
    %v2855 = vsub.f32 %v2849, %v2852
    %v2856 = vsub.f32 %v2850, %v2853
    %v2857 = vsub.f32 %v2851, %v2854
    %v2858 = vmax.f32 %v2855, 0.0
    %v2859 = vmax.f32 %v2856, 0.0
    %v2860 = vmax.f32 %v2857, 0.0
    %v2861 = vadd.f32 %v2858, 1e-05
    %v2862 = vadd.f32 %v2859, 1e-05
    %v2863 = vadd.f32 %v2860, 1e-05
    %v2864 = vrsqrt.pop %v2861
    %v2865 = vrsqrt.pop %v2862
    %v2866 = vrsqrt.pop %v2863
    %v2867 = vmul.f32 %v2785, %v2864
    %v2868 = vmul.f32 %v2786, %v2865
    %v2869 = vmul.f32 %v2787, %v2866
    %v2870 = vmul.f32 %v2846, %v2867
    %v2871 = vmul.f32 %v2847, %v2868
    %v2872 = vmul.f32 %v2848, %v2869
    %v2873 = vsub.f32 %v2788, %v2870
    %v2874 = vsub.f32 %v2789, %v2871
    %v2875 = vsub.f32 %v2790, %v2872
    %2877 = vset.pattern.permute.xlu0 0
    %2878 = vperm.xlu0 %2877, %v2867
    %v2879 = vpop.permute.xlu0 %2878
    %2882 = vset.pattern.permute.xlu0 0
    %2883 = vperm.xlu0 %2882, %v2868
    %v2884 = vpop.permute.xlu0 %2883
    %2887 = vset.pattern.permute.xlu0 0
    %2888 = vperm.xlu0 %2887, %v2869
    %v2889 = vpop.permute.xlu0 %2888
    %v2891 = vmul.f32 %v2792, %v2879
    %v2892 = vmul.f32 %v2793, %v2879
    %v2893 = vmul.f32 %v2794, %v2879
    %v2894 = vmul.f32 %v2795, %v2879
    %v2895 = vmul.f32 %v2796, %v2884
    %v2896 = vmul.f32 %v2797, %v2884
    %v2897 = vmul.f32 %v2798, %v2884
    %v2898 = vmul.f32 %v2799, %v2884
    %v2899 = vmul.f32 %v2800, %v2889
    %v2900 = vmul.f32 %v2801, %v2889
    %v2901 = vmul.f32 %v2802, %v2889
    %v2902 = vmul.f32 %v2803, %v2889
    %2904 = vset.pattern.permute.xlu0 0
    %2905 = vperm.xlu0 %2904, %v2873
    %v2906 = vpop.permute.xlu0 %2905
    %2909 = vset.pattern.permute.xlu0 0
    %2910 = vperm.xlu0 %2909, %v2874
    %v2911 = vpop.permute.xlu0 %2910
    %2914 = vset.pattern.permute.xlu0 0
    %2915 = vperm.xlu0 %2914, %v2875
    %v2916 = vpop.permute.xlu0 %2915
    %v2918 = vadd.f32 %v2891, %v2906
    %v2919 = vadd.f32 %v2892, %v2906
    %v2920 = vadd.f32 %v2893, %v2906
    %v2921 = vadd.f32 %v2894, %v2906
    %v2922 = vadd.f32 %v2895, %v2911
    %v2923 = vadd.f32 %v2896, %v2911
    %v2924 = vadd.f32 %v2897, %v2911
    %v2925 = vadd.f32 %v2898, %v2911
    %v2926 = vadd.f32 %v2899, %v2916
    %v2927 = vadd.f32 %v2900, %v2916
    %v2928 = vadd.f32 %v2901, %v2916
    %v2929 = vadd.f32 %v2902, %v2916
    %v2930 = vmax.f32 %v2918, 0.0
    %v2931 = vmax.f32 %v2919, 0.0
    %v2932 = vmax.f32 %v2920, 0.0
    %v2933 = vmax.f32 %v2921, 0.0
    %v2934 = vmax.f32 %v2922, 0.0
    %v2935 = vmax.f32 %v2923, 0.0
    %v2936 = vmax.f32 %v2924, 0.0
    %v2937 = vmax.f32 %v2925, 0.0
    %v2938 = vmax.f32 %v2926, 0.0
    %v2939 = vmax.f32 %v2927, 0.0
    %v2940 = vmax.f32 %v2928, 0.0
    %v2941 = vmax.f32 %v2929, 0.0
    %2942 = vrot.lane.b32.xlu0 %v2930, 17
    %v2943 = vpop.permute.xlu0 %2942
    %2944 = vrot.lane.b32.xlu0 %v2934, 17
    %v2945 = vpop.permute.xlu0 %2944
    %2946 = vrot.lane.b32.xlu0 %v2938, 17
    %v2947 = vpop.permute.xlu0 %2946
    %2948 = vrot.lane.b32.xlu0 %v2931, 17
    %v2949 = vpop.permute.xlu0 %2948
    %2950 = vrot.lane.b32.xlu0 %v2935, 17
    %v2951 = vpop.permute.xlu0 %2950
    %2952 = vrot.lane.b32.xlu0 %v2939, 17
    %v2953 = vpop.permute.xlu0 %2952
    %2954 = vrot.lane.b32.xlu0 %v2932, 17
    %v2955 = vpop.permute.xlu0 %2954
    %2956 = vrot.lane.b32.xlu0 %v2936, 17
    %v2957 = vpop.permute.xlu0 %2956
    %2958 = vrot.lane.b32.xlu0 %v2940, 17
    %v2959 = vpop.permute.xlu0 %2958
    %2960 = vrot.lane.b32.xlu0 %v2933, 17
    %v2961 = vpop.permute.xlu0 %2960
    %2962 = vrot.lane.b32.xlu0 %v2937, 17
    %v2963 = vpop.permute.xlu0 %2962
    %2964 = vrot.lane.b32.xlu0 %v2941, 17
    %v2965 = vpop.permute.xlu0 %2964
    %v2966 = vsel %vm132, %v2955, %v2961
    %v2967 = vsel %vm132, %v2957, %v2963
    %v2968 = vsel %vm132, %v2959, %v2965
    %v2969 = vsel %vm132, %v2949, %v2955
    %v2970 = vsel %vm132, %v2951, %v2957
    %v2971 = vsel %vm132, %v2953, %v2959
    %v2972 = vsel %vm132, %v2943, %v2949
    %v2973 = vsel %vm132, %v2945, %v2951
    %v2974 = vsel %vm132, %v2947, %v2953
    %v2975 = vsel %vm132, %v2961, %v2943
    %v2976 = vsel %vm132, %v2963, %v2945
    %v2977 = vsel %vm132, %v2965, %v2947
    %v2978 = vld [vmem:[%s12] sm:$0xf]
    %v2979 = vpack.c.bf16 %v2976, %v2975
    %v2980 = vpack.c.bf16 %v2973, %v2972
    %v2981 = vpack.c.bf16 %v2970, %v2969
    %v2982 = vpack.c.bf16 %v2967, %v2966
    %v2983 = vpack.c.bf16 %v2977, %v2977
    %v2984 = vpack.c.bf16 %v2974, %v2974
    %v2985 = vpack.c.bf16 %v2971, %v2971
    %v2986 = vpack.c.bf16 %v2968, %v2968
    %vm2987 = vcmask 195584
    %v2989 = vsel %vm2987, %v2978, 0
    %v2992 = vsel %vm146, %v2983, 0
    %v2995 = vsel %vm146, %v2984, 0
    %v2998 = vsel %vm146, %v2985, 0
    %v3001 = vsel %vm146, %v2986, 0
    %3003 = vmatprep.subr.bf16.mxu0 %v2980
    %3004 = vmatpush1.bf16.msra.mxu0 %v2979
    %3005 = vmatprep.subr.bf16.mxu0 %v2995
    %3006 = vmatpush1.bf16.msra.mxu0 %v2992
    %3007 = vmatprep.subr.bf16.mxu0 0
    %3008 = vmatpush1.bf16.msra.mxu0 0
    %3009 = vmatprep.subr.bf16.mxu0 0
    %3010 = vmatpush1.bf16.msra.mxu0 0
    %3011 = vmatprep.subr.bf16.mxu0 0
    %3012 = vmatpush1.bf16.msra.mxu0 0
    %3013 = vmatprep.subr.bf16.mxu0 0
    %3014 = vmatpush1.bf16.msra.mxu0 0
    %3015 = vmatprep.subr.bf16.mxu0 0
    %3016 = vmatpush1.bf16.msra.mxu0 0
    %3017 = vmatprep.subr.bf16.mxu0 0
    %3018 = vmatpush1.bf16.msra.mxu0 0
    %3019 = vmatprep.subr.bf16.mxu0 0
    %3020 = vmatpush1.bf16.msra.mxu0 0
    %3021 = vmatprep.subr.bf16.mxu0 0
    %3022 = vmatpush1.bf16.msra.mxu0 0
    %3023 = vmatprep.subr.bf16.mxu0 0
    %3024 = vmatpush1.bf16.msra.mxu0 0
    %3025 = vmatprep.subr.bf16.mxu0 0
    %3026 = vmatpush1.bf16.msra.mxu0 0
    %3027 = vmatprep.subr.bf16.mxu0 0
    %3028 = vmatpush1.bf16.msra.mxu0 0
    %3029 = vmatprep.subr.bf16.mxu0 0
    %3030 = vmatpush1.bf16.msra.mxu0 0
    %3031 = vmatprep.subr.bf16.mxu0 0
    %3032 = vmatpush1.bf16.msra.mxu0 0
    %3033 = vmatprep.subr.bf16.mxu0 0
    %3034 = vmatpush1.bf16.msra.mxu0 0
    %3035 = vmatprep.mubr.bf16.mxu0 0
    %3036 = vmatmul.mubr.bf16.gmra.mrb[0].mxu0 %v2989
    %v3037 = vpop.f32.mrb[0].mxu0
    %v3038 = vadd.f32 0.0, %v3037
    %v3039 = vpop.f32.mrb[0].mxu0
    %v3040 = vadd.f32 0.0, %v3039
    %v3041 = vpop.f32.mrb[0].mxu0
    %v3042 = vpop.f32.mrb[0].mxu0
    %3043 = vdwg.mxu0
    %3044 = vmatprep.subr.bf16.mxu0 %v2982
    %3045 = vmatpush1.bf16.msra.mxu0 %v2981
    %3046 = vmatprep.subr.bf16.mxu0 %v3001
    %3047 = vmatpush1.bf16.msra.mxu0 %v2998
    %3048 = vmatprep.subr.bf16.mxu0 0
    %3049 = vmatpush1.bf16.msra.mxu0 0
    %3050 = vmatprep.subr.bf16.mxu0 0
    %3051 = vmatpush1.bf16.msra.mxu0 0
    %3052 = vmatprep.subr.bf16.mxu0 0
    %3053 = vmatpush1.bf16.msra.mxu0 0
    %3054 = vmatprep.subr.bf16.mxu0 0
    %3055 = vmatpush1.bf16.msra.mxu0 0
    %3056 = vmatprep.subr.bf16.mxu0 0
    %3057 = vmatpush1.bf16.msra.mxu0 0
    %3058 = vmatprep.subr.bf16.mxu0 0
    %3059 = vmatpush1.bf16.msra.mxu0 0
    %3060 = vmatprep.subr.bf16.mxu0 0
    %3061 = vmatpush1.bf16.msra.mxu0 0
    %3062 = vmatprep.subr.bf16.mxu0 0
    %3063 = vmatpush1.bf16.msra.mxu0 0
    %3064 = vmatprep.subr.bf16.mxu0 0
    %3065 = vmatpush1.bf16.msra.mxu0 0
    %3066 = vmatprep.subr.bf16.mxu0 0
    %3067 = vmatpush1.bf16.msra.mxu0 0
    %3068 = vmatprep.subr.bf16.mxu0 0
    %3069 = vmatpush1.bf16.msra.mxu0 0
    %3070 = vmatprep.subr.bf16.mxu0 0
    %3071 = vmatpush1.bf16.msra.mxu0 0
    %3072 = vmatprep.subr.bf16.mxu0 0
    %3073 = vmatpush1.bf16.msra.mxu0 0
    %3074 = vmatprep.subr.bf16.mxu0 0
    %3075 = vmatpush1.bf16.msra.mxu0 0
    %3076 = vmatprep.mubr.bf16.mxu0 0
    %3077 = vmatmul.mubr.bf16.gmra.mrb[0].mxu0 %v2989
    %v3078 = vpop.f32.mrb[0].mxu0
    %v3079 = vadd.f32 0.0, %v3078
    %v3080 = vpop.f32.mrb[0].mxu0
    %v3081 = vadd.f32 0.0, %v3080
    %v3082 = vpop.f32.mrb[0].mxu0
    %v3083 = vpop.f32.mrb[0].mxu0
    %3084 = vdwg.mxu0
    %v3085 = vld [vmem:[%s1] ss:$8 sm:$0xf]
    %v3087 = vlaneseq
    %v3088 = vshrl.u32 %v3087, 7
    %v3089 = vsub.s32 0, %v3088
    %v3090 = vrot.slane %v3085, %v3089
    %v3091 = vlaneseq
    %v3092 = vshrl.u32 %v3091, 7
    %v3093 = vsub.s32 1, %v3092
    %v3094 = vrot.slane %v3085, %v3093
    %v3095 = vlaneseq
    %v3096 = vshrl.u32 %v3095, 7
    %v3097 = vsub.s32 2, %v3096
    %v3098 = vrot.slane %v3085, %v3097
    %v3099 = vlaneseq
    %v3100 = vshrl.u32 %v3099, 7
    %v3101 = vsub.s32 3, %v3100
    %v3102 = vrot.slane %v3085, %v3101
    %v3107 = vmul.f32 %v3038, %v3090
    %v3108 = vmul.f32 %v3040, %v3094
    %v3109 = vmul.f32 %v3079, %v3098
    %v3110 = vmul.f32 %v3081, %v3102
    %3111 = vrot.lane.b32.xlu0 %v2930, 16
    %v3112 = vpop.permute.xlu0 %3111
    %3113 = vrot.lane.b32.xlu0 %v2934, 16
    %v3114 = vpop.permute.xlu0 %3113
    %3115 = vrot.lane.b32.xlu0 %v2938, 16
    %v3116 = vpop.permute.xlu0 %3115
    %3117 = vrot.lane.b32.xlu0 %v2931, 16
    %v3118 = vpop.permute.xlu0 %3117
    %3119 = vrot.lane.b32.xlu0 %v2935, 16
    %v3120 = vpop.permute.xlu0 %3119
    %3121 = vrot.lane.b32.xlu0 %v2939, 16
    %v3122 = vpop.permute.xlu0 %3121
    %3123 = vrot.lane.b32.xlu0 %v2932, 16
    %v3124 = vpop.permute.xlu0 %3123
    %3125 = vrot.lane.b32.xlu0 %v2936, 16
    %v3126 = vpop.permute.xlu0 %3125
    %3127 = vrot.lane.b32.xlu0 %v2940, 16
    %v3128 = vpop.permute.xlu0 %3127
    %3129 = vrot.lane.b32.xlu0 %v2933, 16
    %v3130 = vpop.permute.xlu0 %3129
    %3131 = vrot.lane.b32.xlu0 %v2937, 16
    %v3132 = vpop.permute.xlu0 %3131
    %3133 = vrot.lane.b32.xlu0 %v2941, 16
    %v3134 = vpop.permute.xlu0 %3133
    %v3135 = vsel %vm275, %v3124, %v3130
    %v3136 = vsel %vm275, %v3126, %v3132
    %v3137 = vsel %vm275, %v3128, %v3134
    %v3138 = vsel %vm275, %v3118, %v3124
    %v3139 = vsel %vm275, %v3120, %v3126
    %v3140 = vsel %vm275, %v3122, %v3128
    %v3141 = vsel %vm275, %v3112, %v3118
    %v3142 = vsel %vm275, %v3114, %v3120
    %v3143 = vsel %vm275, %v3116, %v3122
    %v3144 = vsel %vm275, %v3130, %v3112
    %v3145 = vsel %vm275, %v3132, %v3114
    %v3146 = vsel %vm275, %v3134, %v3116
    %s3147 = scalar_lea.vmem %s12, 4
    %v3148 = vld [vmem:[%s3147] sm:$0xf]
    %v3149 = vpack.c.bf16 %v3145, %v3144
    %v3150 = vpack.c.bf16 %v3142, %v3141
    %v3151 = vpack.c.bf16 %v3139, %v3138
    %v3152 = vpack.c.bf16 %v3136, %v3135
    %v3153 = vpack.c.bf16 %v3146, %v3146
    %v3154 = vpack.c.bf16 %v3143, %v3143
    %v3155 = vpack.c.bf16 %v3140, %v3140
    %v3156 = vpack.c.bf16 %v3137, %v3137
    %v3158 = vsel %vm2987, %v3148, 0
    %v3161 = vsel %vm146, %v3153, 0
    %v3164 = vsel %vm146, %v3154, 0
    %v3167 = vsel %vm146, %v3155, 0
    %v3170 = vsel %vm146, %v3156, 0
    %3172 = vmatprep.subr.bf16.mxu0 %v3150
    %3173 = vmatpush1.bf16.msra.mxu0 %v3149
    %3174 = vmatprep.subr.bf16.mxu0 %v3164
    %3175 = vmatpush1.bf16.msra.mxu0 %v3161
    %3176 = vmatprep.subr.bf16.mxu0 0
    %3177 = vmatpush1.bf16.msra.mxu0 0
    %3178 = vmatprep.subr.bf16.mxu0 0
    %3179 = vmatpush1.bf16.msra.mxu0 0
    %3180 = vmatprep.subr.bf16.mxu0 0
    %3181 = vmatpush1.bf16.msra.mxu0 0
    %3182 = vmatprep.subr.bf16.mxu0 0
    %3183 = vmatpush1.bf16.msra.mxu0 0
    %3184 = vmatprep.subr.bf16.mxu0 0
    %3185 = vmatpush1.bf16.msra.mxu0 0
    %3186 = vmatprep.subr.bf16.mxu0 0
    %3187 = vmatpush1.bf16.msra.mxu0 0
    %3188 = vmatprep.subr.bf16.mxu0 0
    %3189 = vmatpush1.bf16.msra.mxu0 0
    %3190 = vmatprep.subr.bf16.mxu0 0
    %3191 = vmatpush1.bf16.msra.mxu0 0
    %3192 = vmatprep.subr.bf16.mxu0 0
    %3193 = vmatpush1.bf16.msra.mxu0 0
    %3194 = vmatprep.subr.bf16.mxu0 0
    %3195 = vmatpush1.bf16.msra.mxu0 0
    %3196 = vmatprep.subr.bf16.mxu0 0
    %3197 = vmatpush1.bf16.msra.mxu0 0
    %3198 = vmatprep.subr.bf16.mxu0 0
    %3199 = vmatpush1.bf16.msra.mxu0 0
    %3200 = vmatprep.subr.bf16.mxu0 0
    %3201 = vmatpush1.bf16.msra.mxu0 0
    %3202 = vmatprep.subr.bf16.mxu0 0
    %3203 = vmatpush1.bf16.msra.mxu0 0
    %3204 = vmatprep.mubr.bf16.mxu0 0
    %3205 = vmatmul.mubr.bf16.gmra.mrb[0].mxu0 %v3158
    %v3206 = vpop.f32.mrb[0].mxu0
    %v3207 = vadd.f32 0.0, %v3206
    %v3208 = vpop.f32.mrb[0].mxu0
    %v3209 = vadd.f32 0.0, %v3208
    %v3210 = vpop.f32.mrb[0].mxu0
    %v3211 = vpop.f32.mrb[0].mxu0
    %3212 = vdwg.mxu0
    %3213 = vmatprep.subr.bf16.mxu0 %v3152
    %3214 = vmatpush1.bf16.msra.mxu0 %v3151
    %3215 = vmatprep.subr.bf16.mxu0 %v3170
    %3216 = vmatpush1.bf16.msra.mxu0 %v3167
    %3217 = vmatprep.subr.bf16.mxu0 0
    %3218 = vmatpush1.bf16.msra.mxu0 0
    %3219 = vmatprep.subr.bf16.mxu0 0
    %3220 = vmatpush1.bf16.msra.mxu0 0
    %3221 = vmatprep.subr.bf16.mxu0 0
    %3222 = vmatpush1.bf16.msra.mxu0 0
    %3223 = vmatprep.subr.bf16.mxu0 0
    %3224 = vmatpush1.bf16.msra.mxu0 0
    %3225 = vmatprep.subr.bf16.mxu0 0
    %3226 = vmatpush1.bf16.msra.mxu0 0
    %3227 = vmatprep.subr.bf16.mxu0 0
    %3228 = vmatpush1.bf16.msra.mxu0 0
    %3229 = vmatprep.subr.bf16.mxu0 0
    %3230 = vmatpush1.bf16.msra.mxu0 0
    %3231 = vmatprep.subr.bf16.mxu0 0
    %3232 = vmatpush1.bf16.msra.mxu0 0
    %3233 = vmatprep.subr.bf16.mxu0 0
    %3234 = vmatpush1.bf16.msra.mxu0 0
    %3235 = vmatprep.subr.bf16.mxu0 0
    %3236 = vmatpush1.bf16.msra.mxu0 0
    %3237 = vmatprep.subr.bf16.mxu0 0
    %3238 = vmatpush1.bf16.msra.mxu0 0
    %3239 = vmatprep.subr.bf16.mxu0 0
    %3240 = vmatpush1.bf16.msra.mxu0 0
    %3241 = vmatprep.subr.bf16.mxu0 0
    %3242 = vmatpush1.bf16.msra.mxu0 0
    %3243 = vmatprep.subr.bf16.mxu0 0
    %3244 = vmatpush1.bf16.msra.mxu0 0
    %3245 = vmatprep.mubr.bf16.mxu0 0
    %3246 = vmatmul.mubr.bf16.gmra.mrb[0].mxu0 %v3158
    %v3247 = vpop.f32.mrb[0].mxu0
    %v3248 = vadd.f32 0.0, %v3247
    %v3249 = vpop.f32.mrb[0].mxu0
    %v3250 = vadd.f32 0.0, %v3249
    %v3251 = vpop.f32.mrb[0].mxu0
    %v3252 = vpop.f32.mrb[0].mxu0
    %3253 = vdwg.mxu0
    %v3254 = vld [vmem:[%s383] ss:$8 sm:$0xf]
    %v3256 = vlaneseq
    %v3257 = vshrl.u32 %v3256, 7
    %v3258 = vsub.s32 0, %v3257
    %v3259 = vrot.slane %v3254, %v3258
    %v3260 = vlaneseq
    %v3261 = vshrl.u32 %v3260, 7
    %v3262 = vsub.s32 1, %v3261
    %v3263 = vrot.slane %v3254, %v3262
    %v3264 = vlaneseq
    %v3265 = vshrl.u32 %v3264, 7
    %v3266 = vsub.s32 2, %v3265
    %v3267 = vrot.slane %v3254, %v3266
    %v3268 = vlaneseq
    %v3269 = vshrl.u32 %v3268, 7
    %v3270 = vsub.s32 3, %v3269
    %v3271 = vrot.slane %v3254, %v3270
    %v3276 = vmul.f32 %v3207, %v3259
    %v3277 = vmul.f32 %v3209, %v3263
    %v3278 = vmul.f32 %v3248, %v3267
    %v3279 = vmul.f32 %v3250, %v3271
    %v3280 = vadd.f32 %v3107, %v3276
    %v3281 = vadd.f32 %v3108, %v3277
    %v3282 = vadd.f32 %v3109, %v3278
    %v3283 = vadd.f32 %v3110, %v3279
    %3284 = vrot.lane.b32.xlu0 %v2930, 15
    %v3285 = vpop.permute.xlu0 %3284
    %3286 = vrot.lane.b32.xlu0 %v2934, 15
    %v3287 = vpop.permute.xlu0 %3286
    %3288 = vrot.lane.b32.xlu0 %v2938, 15
    %v3289 = vpop.permute.xlu0 %3288
    %3290 = vrot.lane.b32.xlu0 %v2931, 15
    %v3291 = vpop.permute.xlu0 %3290
    %3292 = vrot.lane.b32.xlu0 %v2935, 15
    %v3293 = vpop.permute.xlu0 %3292
    %3294 = vrot.lane.b32.xlu0 %v2939, 15
    %v3295 = vpop.permute.xlu0 %3294
    %3296 = vrot.lane.b32.xlu0 %v2932, 15
    %v3297 = vpop.permute.xlu0 %3296
    %3298 = vrot.lane.b32.xlu0 %v2936, 15
    %v3299 = vpop.permute.xlu0 %3298
    %3300 = vrot.lane.b32.xlu0 %v2940, 15
    %v3301 = vpop.permute.xlu0 %3300
    %3302 = vrot.lane.b32.xlu0 %v2933, 15
    %v3303 = vpop.permute.xlu0 %3302
    %3304 = vrot.lane.b32.xlu0 %v2937, 15
    %v3305 = vpop.permute.xlu0 %3304
    %3306 = vrot.lane.b32.xlu0 %v2941, 15
    %v3307 = vpop.permute.xlu0 %3306
    %v3308 = vsel %vm422, %v3297, %v3303
    %v3309 = vsel %vm422, %v3299, %v3305
    %v3310 = vsel %vm422, %v3301, %v3307
    %v3311 = vsel %vm422, %v3291, %v3297
    %v3312 = vsel %vm422, %v3293, %v3299
    %v3313 = vsel %vm422, %v3295, %v3301
    %v3314 = vsel %vm422, %v3285, %v3291
    %v3315 = vsel %vm422, %v3287, %v3293
    %v3316 = vsel %vm422, %v3289, %v3295
    %v3317 = vsel %vm422, %v3303, %v3285
    %v3318 = vsel %vm422, %v3305, %v3287
    %v3319 = vsel %vm422, %v3307, %v3289
    %s3320 = scalar_lea.vmem %s12, 8
    %v3321 = vld [vmem:[%s3320] sm:$0xf]
    %v3322 = vpack.c.bf16 %v3318, %v3317
    %v3323 = vpack.c.bf16 %v3315, %v3314
    %v3324 = vpack.c.bf16 %v3312, %v3311
    %v3325 = vpack.c.bf16 %v3309, %v3308
    %v3326 = vpack.c.bf16 %v3319, %v3319
    %v3327 = vpack.c.bf16 %v3316, %v3316
    %v3328 = vpack.c.bf16 %v3313, %v3313
    %v3329 = vpack.c.bf16 %v3310, %v3310
    %v3331 = vsel %vm2987, %v3321, 0
    %v3334 = vsel %vm146, %v3326, 0
    %v3337 = vsel %vm146, %v3327, 0
    %v3340 = vsel %vm146, %v3328, 0
    %v3343 = vsel %vm146, %v3329, 0
    %3345 = vmatprep.subr.bf16.mxu0 %v3323
    %3346 = vmatpush1.bf16.msra.mxu0 %v3322
    %3347 = vmatprep.subr.bf16.mxu0 %v3337
    %3348 = vmatpush1.bf16.msra.mxu0 %v3334
    %3349 = vmatprep.subr.bf16.mxu0 0
    %3350 = vmatpush1.bf16.msra.mxu0 0
    %3351 = vmatprep.subr.bf16.mxu0 0
    %3352 = vmatpush1.bf16.msra.mxu0 0
    %3353 = vmatprep.subr.bf16.mxu0 0
    %3354 = vmatpush1.bf16.msra.mxu0 0
    %3355 = vmatprep.subr.bf16.mxu0 0
    %3356 = vmatpush1.bf16.msra.mxu0 0
    %3357 = vmatprep.subr.bf16.mxu0 0
    %3358 = vmatpush1.bf16.msra.mxu0 0
    %3359 = vmatprep.subr.bf16.mxu0 0
    %3360 = vmatpush1.bf16.msra.mxu0 0
    %3361 = vmatprep.subr.bf16.mxu0 0
    %3362 = vmatpush1.bf16.msra.mxu0 0
    %3363 = vmatprep.subr.bf16.mxu0 0
    %3364 = vmatpush1.bf16.msra.mxu0 0
    %3365 = vmatprep.subr.bf16.mxu0 0
    %3366 = vmatpush1.bf16.msra.mxu0 0
    %3367 = vmatprep.subr.bf16.mxu0 0
    %3368 = vmatpush1.bf16.msra.mxu0 0
    %3369 = vmatprep.subr.bf16.mxu0 0
    %3370 = vmatpush1.bf16.msra.mxu0 0
    %3371 = vmatprep.subr.bf16.mxu0 0
    %3372 = vmatpush1.bf16.msra.mxu0 0
    %3373 = vmatprep.subr.bf16.mxu0 0
    %3374 = vmatpush1.bf16.msra.mxu0 0
    %3375 = vmatprep.subr.bf16.mxu0 0
    %3376 = vmatpush1.bf16.msra.mxu0 0
    %3377 = vmatprep.mubr.bf16.mxu0 0
    %3378 = vmatmul.mubr.bf16.gmra.mrb[0].mxu0 %v3331
    %v3379 = vpop.f32.mrb[0].mxu0
    %v3380 = vadd.f32 0.0, %v3379
    %v3381 = vpop.f32.mrb[0].mxu0
    %v3382 = vadd.f32 0.0, %v3381
    %v3383 = vpop.f32.mrb[0].mxu0
    %v3384 = vpop.f32.mrb[0].mxu0
    %3385 = vdwg.mxu0
    %3386 = vmatprep.subr.bf16.mxu0 %v3325
    %3387 = vmatpush1.bf16.msra.mxu0 %v3324
    %3388 = vmatprep.subr.bf16.mxu0 %v3343
    %3389 = vmatpush1.bf16.msra.mxu0 %v3340
    %3390 = vmatprep.subr.bf16.mxu0 0
    %3391 = vmatpush1.bf16.msra.mxu0 0
    %3392 = vmatprep.subr.bf16.mxu0 0
    %3393 = vmatpush1.bf16.msra.mxu0 0
    %3394 = vmatprep.subr.bf16.mxu0 0
    %3395 = vmatpush1.bf16.msra.mxu0 0
    %3396 = vmatprep.subr.bf16.mxu0 0
    %3397 = vmatpush1.bf16.msra.mxu0 0
    %3398 = vmatprep.subr.bf16.mxu0 0
    %3399 = vmatpush1.bf16.msra.mxu0 0
    %3400 = vmatprep.subr.bf16.mxu0 0
    %3401 = vmatpush1.bf16.msra.mxu0 0
    %3402 = vmatprep.subr.bf16.mxu0 0
    %3403 = vmatpush1.bf16.msra.mxu0 0
    %3404 = vmatprep.subr.bf16.mxu0 0
    %3405 = vmatpush1.bf16.msra.mxu0 0
    %3406 = vmatprep.subr.bf16.mxu0 0
    %3407 = vmatpush1.bf16.msra.mxu0 0
    %3408 = vmatprep.subr.bf16.mxu0 0
    %3409 = vmatpush1.bf16.msra.mxu0 0
    %3410 = vmatprep.subr.bf16.mxu0 0
    %3411 = vmatpush1.bf16.msra.mxu0 0
    %3412 = vmatprep.subr.bf16.mxu0 0
    %3413 = vmatpush1.bf16.msra.mxu0 0
    %3414 = vmatprep.subr.bf16.mxu0 0
    %3415 = vmatpush1.bf16.msra.mxu0 0
    %3416 = vmatprep.subr.bf16.mxu0 0
    %3417 = vmatpush1.bf16.msra.mxu0 0
    %3418 = vmatprep.mubr.bf16.mxu0 0
    %3419 = vmatmul.mubr.bf16.gmra.mrb[0].mxu0 %v3331
    %v3420 = vpop.f32.mrb[0].mxu0
    %v3421 = vadd.f32 0.0, %v3420
    %v3422 = vpop.f32.mrb[0].mxu0
    %v3423 = vadd.f32 0.0, %v3422
    %v3424 = vpop.f32.mrb[0].mxu0
    %v3425 = vpop.f32.mrb[0].mxu0
    %3426 = vdwg.mxu0
    %v3427 = vld [vmem:[%s530] ss:$8 sm:$0xf]
    %v3429 = vlaneseq
    %v3430 = vshrl.u32 %v3429, 7
    %v3431 = vsub.s32 0, %v3430
    %v3432 = vrot.slane %v3427, %v3431
    %v3433 = vlaneseq
    %v3434 = vshrl.u32 %v3433, 7
    %v3435 = vsub.s32 1, %v3434
    %v3436 = vrot.slane %v3427, %v3435
    %v3437 = vlaneseq
    %v3438 = vshrl.u32 %v3437, 7
    %v3439 = vsub.s32 2, %v3438
    %v3440 = vrot.slane %v3427, %v3439
    %v3441 = vlaneseq
    %v3442 = vshrl.u32 %v3441, 7
    %v3443 = vsub.s32 3, %v3442
    %v3444 = vrot.slane %v3427, %v3443
    %v3449 = vmul.f32 %v3380, %v3432
    %v3450 = vmul.f32 %v3382, %v3436
    %v3451 = vmul.f32 %v3421, %v3440
    %v3452 = vmul.f32 %v3423, %v3444
    %v3453 = vadd.f32 %v3280, %v3449
    %v3454 = vadd.f32 %v3281, %v3450
    %v3455 = vadd.f32 %v3282, %v3451
    %v3456 = vadd.f32 %v3283, %v3452
    %3457 = vrot.lane.b32.xlu0 %v2930, 1
    %v3458 = vpop.permute.xlu0 %3457
    %3459 = vrot.lane.b32.xlu0 %v2934, 1
    %v3460 = vpop.permute.xlu0 %3459
    %3461 = vrot.lane.b32.xlu0 %v2938, 1
    %v3462 = vpop.permute.xlu0 %3461
    %3463 = vrot.lane.b32.xlu0 %v2931, 1
    %v3464 = vpop.permute.xlu0 %3463
    %3465 = vrot.lane.b32.xlu0 %v2935, 1
    %v3466 = vpop.permute.xlu0 %3465
    %3467 = vrot.lane.b32.xlu0 %v2939, 1
    %v3468 = vpop.permute.xlu0 %3467
    %3469 = vrot.lane.b32.xlu0 %v2932, 1
    %v3470 = vpop.permute.xlu0 %3469
    %3471 = vrot.lane.b32.xlu0 %v2936, 1
    %v3472 = vpop.permute.xlu0 %3471
    %3473 = vrot.lane.b32.xlu0 %v2940, 1
    %v3474 = vpop.permute.xlu0 %3473
    %3475 = vrot.lane.b32.xlu0 %v2933, 1
    %v3476 = vpop.permute.xlu0 %3475
    %3477 = vrot.lane.b32.xlu0 %v2937, 1
    %v3478 = vpop.permute.xlu0 %3477
    %3479 = vrot.lane.b32.xlu0 %v2941, 1
    %v3480 = vpop.permute.xlu0 %3479
    %v3481 = vsel %vm569, %v3470, %v3476
    %v3482 = vsel %vm569, %v3472, %v3478
    %v3483 = vsel %vm569, %v3474, %v3480
    %v3484 = vsel %vm569, %v3464, %v3470
    %v3485 = vsel %vm569, %v3466, %v3472
    %v3486 = vsel %vm569, %v3468, %v3474
    %v3487 = vsel %vm569, %v3458, %v3464
    %v3488 = vsel %vm569, %v3460, %v3466
    %v3489 = vsel %vm569, %v3462, %v3468
    %v3490 = vsel %vm569, %v3476, %v3458
    %v3491 = vsel %vm569, %v3478, %v3460
    %v3492 = vsel %vm569, %v3480, %v3462
    %s3493 = scalar_lea.vmem %s12, 12
    %v3494 = vld [vmem:[%s3493] sm:$0xf]
    %v3495 = vpack.c.bf16 %v3491, %v3490
    %v3496 = vpack.c.bf16 %v3488, %v3487
    %v3497 = vpack.c.bf16 %v3485, %v3484
    %v3498 = vpack.c.bf16 %v3482, %v3481
    %v3499 = vpack.c.bf16 %v3492, %v3492
    %v3500 = vpack.c.bf16 %v3489, %v3489
    %v3501 = vpack.c.bf16 %v3486, %v3486
    %v3502 = vpack.c.bf16 %v3483, %v3483
    %v3504 = vsel %vm2987, %v3494, 0
    %v3507 = vsel %vm146, %v3499, 0
    %v3510 = vsel %vm146, %v3500, 0
    %v3513 = vsel %vm146, %v3501, 0
    %v3516 = vsel %vm146, %v3502, 0
    %3518 = vmatprep.subr.bf16.mxu0 %v3496
    %3519 = vmatpush1.bf16.msra.mxu0 %v3495
    %3520 = vmatprep.subr.bf16.mxu0 %v3510
    %3521 = vmatpush1.bf16.msra.mxu0 %v3507
    %3522 = vmatprep.subr.bf16.mxu0 0
    %3523 = vmatpush1.bf16.msra.mxu0 0
    %3524 = vmatprep.subr.bf16.mxu0 0
    %3525 = vmatpush1.bf16.msra.mxu0 0
    %3526 = vmatprep.subr.bf16.mxu0 0
    %3527 = vmatpush1.bf16.msra.mxu0 0
    %3528 = vmatprep.subr.bf16.mxu0 0
    %3529 = vmatpush1.bf16.msra.mxu0 0
    %3530 = vmatprep.subr.bf16.mxu0 0
    %3531 = vmatpush1.bf16.msra.mxu0 0
    %3532 = vmatprep.subr.bf16.mxu0 0
    %3533 = vmatpush1.bf16.msra.mxu0 0
    %3534 = vmatprep.subr.bf16.mxu0 0
    %3535 = vmatpush1.bf16.msra.mxu0 0
    %3536 = vmatprep.subr.bf16.mxu0 0
    %3537 = vmatpush1.bf16.msra.mxu0 0
    %3538 = vmatprep.subr.bf16.mxu0 0
    %3539 = vmatpush1.bf16.msra.mxu0 0
    %3540 = vmatprep.subr.bf16.mxu0 0
    %3541 = vmatpush1.bf16.msra.mxu0 0
    %3542 = vmatprep.subr.bf16.mxu0 0
    %3543 = vmatpush1.bf16.msra.mxu0 0
    %3544 = vmatprep.subr.bf16.mxu0 0
    %3545 = vmatpush1.bf16.msra.mxu0 0
    %3546 = vmatprep.subr.bf16.mxu0 0
    %3547 = vmatpush1.bf16.msra.mxu0 0
    %3548 = vmatprep.subr.bf16.mxu0 0
    %3549 = vmatpush1.bf16.msra.mxu0 0
    %3550 = vmatprep.mubr.bf16.mxu0 0
    %3551 = vmatmul.mubr.bf16.gmra.mrb[0].mxu0 %v3504
    %v3552 = vpop.f32.mrb[0].mxu0
    %v3553 = vadd.f32 0.0, %v3552
    %v3554 = vpop.f32.mrb[0].mxu0
    %v3555 = vadd.f32 0.0, %v3554
    %v3556 = vpop.f32.mrb[0].mxu0
    %v3557 = vpop.f32.mrb[0].mxu0
    %3558 = vdwg.mxu0
    %3559 = vmatprep.subr.bf16.mxu0 %v3498
    %3560 = vmatpush1.bf16.msra.mxu0 %v3497
    %3561 = vmatprep.subr.bf16.mxu0 %v3516
    %3562 = vmatpush1.bf16.msra.mxu0 %v3513
    %3563 = vmatprep.subr.bf16.mxu0 0
    %3564 = vmatpush1.bf16.msra.mxu0 0
    %3565 = vmatprep.subr.bf16.mxu0 0
    %3566 = vmatpush1.bf16.msra.mxu0 0
    %3567 = vmatprep.subr.bf16.mxu0 0
    %3568 = vmatpush1.bf16.msra.mxu0 0
    %3569 = vmatprep.subr.bf16.mxu0 0
    %3570 = vmatpush1.bf16.msra.mxu0 0
    %3571 = vmatprep.subr.bf16.mxu0 0
    %3572 = vmatpush1.bf16.msra.mxu0 0
    %3573 = vmatprep.subr.bf16.mxu0 0
    %3574 = vmatpush1.bf16.msra.mxu0 0
    %3575 = vmatprep.subr.bf16.mxu0 0
    %3576 = vmatpush1.bf16.msra.mxu0 0
    %3577 = vmatprep.subr.bf16.mxu0 0
    %3578 = vmatpush1.bf16.msra.mxu0 0
    %3579 = vmatprep.subr.bf16.mxu0 0
    %3580 = vmatpush1.bf16.msra.mxu0 0
    %3581 = vmatprep.subr.bf16.mxu0 0
    %3582 = vmatpush1.bf16.msra.mxu0 0
    %3583 = vmatprep.subr.bf16.mxu0 0
    %3584 = vmatpush1.bf16.msra.mxu0 0
    %3585 = vmatprep.subr.bf16.mxu0 0
    %3586 = vmatpush1.bf16.msra.mxu0 0
    %3587 = vmatprep.subr.bf16.mxu0 0
    %3588 = vmatpush1.bf16.msra.mxu0 0
    %3589 = vmatprep.subr.bf16.mxu0 0
    %3590 = vmatpush1.bf16.msra.mxu0 0
    %3591 = vmatprep.mubr.bf16.mxu0 0
    %3592 = vmatmul.mubr.bf16.gmra.mrb[0].mxu0 %v3504
    %v3593 = vpop.f32.mrb[0].mxu0
    %v3594 = vadd.f32 0.0, %v3593
    %v3595 = vpop.f32.mrb[0].mxu0
    %v3596 = vadd.f32 0.0, %v3595
    %v3597 = vpop.f32.mrb[0].mxu0
    %v3598 = vpop.f32.mrb[0].mxu0
    %3599 = vdwg.mxu0
    %v3600 = vld [vmem:[%s677] ss:$8 sm:$0xf]
    %v3602 = vlaneseq
    %v3603 = vshrl.u32 %v3602, 7
    %v3604 = vsub.s32 0, %v3603
    %v3605 = vrot.slane %v3600, %v3604
    %v3606 = vlaneseq
    %v3607 = vshrl.u32 %v3606, 7
    %v3608 = vsub.s32 1, %v3607
    %v3609 = vrot.slane %v3600, %v3608
    %v3610 = vlaneseq
    %v3611 = vshrl.u32 %v3610, 7
    %v3612 = vsub.s32 2, %v3611
    %v3613 = vrot.slane %v3600, %v3612
    %v3614 = vlaneseq
    %v3615 = vshrl.u32 %v3614, 7
    %v3616 = vsub.s32 3, %v3615
    %v3617 = vrot.slane %v3600, %v3616
    %v3622 = vmul.f32 %v3553, %v3605
    %v3623 = vmul.f32 %v3555, %v3609
    %v3624 = vmul.f32 %v3594, %v3613
    %v3625 = vmul.f32 %v3596, %v3617
    %v3626 = vadd.f32 %v3453, %v3622
    %v3627 = vadd.f32 %v3454, %v3623
    %v3628 = vadd.f32 %v3455, %v3624
    %v3629 = vadd.f32 %v3456, %v3625
    %s3630 = scalar_lea.vmem %s12, 16
    %v3631 = vld [vmem:[%s3630] sm:$0xf]
    %v3632 = vpack.c.bf16 %v2934, %v2930
    %v3633 = vpack.c.bf16 %v2935, %v2931
    %v3634 = vpack.c.bf16 %v2936, %v2932
    %v3635 = vpack.c.bf16 %v2937, %v2933
    %v3636 = vpack.c.bf16 %v2938, %v2938
    %v3637 = vpack.c.bf16 %v2939, %v2939
    %v3638 = vpack.c.bf16 %v2940, %v2940
    %v3639 = vpack.c.bf16 %v2941, %v2941
    %v3641 = vsel %vm2987, %v3631, 0
    %v3644 = vsel %vm146, %v3636, 0
    %v3647 = vsel %vm146, %v3637, 0
    %v3650 = vsel %vm146, %v3638, 0
    %v3653 = vsel %vm146, %v3639, 0
    %3655 = vmatprep.subr.bf16.mxu0 %v3633
    %3656 = vmatpush1.bf16.msra.mxu0 %v3632
    %3657 = vmatprep.subr.bf16.mxu0 %v3647
    %3658 = vmatpush1.bf16.msra.mxu0 %v3644
    %3659 = vmatprep.subr.bf16.mxu0 0
    %3660 = vmatpush1.bf16.msra.mxu0 0
    %3661 = vmatprep.subr.bf16.mxu0 0
    %3662 = vmatpush1.bf16.msra.mxu0 0
    %3663 = vmatprep.subr.bf16.mxu0 0
    %3664 = vmatpush1.bf16.msra.mxu0 0
    %3665 = vmatprep.subr.bf16.mxu0 0
    %3666 = vmatpush1.bf16.msra.mxu0 0
    %3667 = vmatprep.subr.bf16.mxu0 0
    %3668 = vmatpush1.bf16.msra.mxu0 0
    %3669 = vmatprep.subr.bf16.mxu0 0
    %3670 = vmatpush1.bf16.msra.mxu0 0
    %3671 = vmatprep.subr.bf16.mxu0 0
    %3672 = vmatpush1.bf16.msra.mxu0 0
    %3673 = vmatprep.subr.bf16.mxu0 0
    %3674 = vmatpush1.bf16.msra.mxu0 0
    %3675 = vmatprep.subr.bf16.mxu0 0
    %3676 = vmatpush1.bf16.msra.mxu0 0
    %3677 = vmatprep.subr.bf16.mxu0 0
    %3678 = vmatpush1.bf16.msra.mxu0 0
    %3679 = vmatprep.subr.bf16.mxu0 0
    %3680 = vmatpush1.bf16.msra.mxu0 0
    %3681 = vmatprep.subr.bf16.mxu0 0
    %3682 = vmatpush1.bf16.msra.mxu0 0
    %3683 = vmatprep.subr.bf16.mxu0 0
    %3684 = vmatpush1.bf16.msra.mxu0 0
    %3685 = vmatprep.subr.bf16.mxu0 0
    %3686 = vmatpush1.bf16.msra.mxu0 0
    %3687 = vmatprep.mubr.bf16.mxu0 0
    %3688 = vmatmul.mubr.bf16.gmra.mrb[0].mxu0 %v3641
    %v3689 = vpop.f32.mrb[0].mxu0
    %v3690 = vadd.f32 0.0, %v3689
    %v3691 = vpop.f32.mrb[0].mxu0
    %v3692 = vadd.f32 0.0, %v3691
    %v3693 = vpop.f32.mrb[0].mxu0
    %v3694 = vpop.f32.mrb[0].mxu0
    %3695 = vdwg.mxu0
    %3696 = vmatprep.subr.bf16.mxu0 %v3635
    %3697 = vmatpush1.bf16.msra.mxu0 %v3634
    %3698 = vmatprep.subr.bf16.mxu0 %v3653
    %3699 = vmatpush1.bf16.msra.mxu0 %v3650
    %3700 = vmatprep.subr.bf16.mxu0 0
    %3701 = vmatpush1.bf16.msra.mxu0 0
    %3702 = vmatprep.subr.bf16.mxu0 0
    %3703 = vmatpush1.bf16.msra.mxu0 0
    %3704 = vmatprep.subr.bf16.mxu0 0
    %3705 = vmatpush1.bf16.msra.mxu0 0
    %3706 = vmatprep.subr.bf16.mxu0 0
    %3707 = vmatpush1.bf16.msra.mxu0 0
    %3708 = vmatprep.subr.bf16.mxu0 0
    %3709 = vmatpush1.bf16.msra.mxu0 0
    %3710 = vmatprep.subr.bf16.mxu0 0
    %3711 = vmatpush1.bf16.msra.mxu0 0
    %3712 = vmatprep.subr.bf16.mxu0 0
    %3713 = vmatpush1.bf16.msra.mxu0 0
    %3714 = vmatprep.subr.bf16.mxu0 0
    %3715 = vmatpush1.bf16.msra.mxu0 0
    %3716 = vmatprep.subr.bf16.mxu0 0
    %3717 = vmatpush1.bf16.msra.mxu0 0
    %3718 = vmatprep.subr.bf16.mxu0 0
    %3719 = vmatpush1.bf16.msra.mxu0 0
    %3720 = vmatprep.subr.bf16.mxu0 0
    %3721 = vmatpush1.bf16.msra.mxu0 0
    %3722 = vmatprep.subr.bf16.mxu0 0
    %3723 = vmatpush1.bf16.msra.mxu0 0
    %3724 = vmatprep.subr.bf16.mxu0 0
    %3725 = vmatpush1.bf16.msra.mxu0 0
    %3726 = vmatprep.subr.bf16.mxu0 0
    %3727 = vmatpush1.bf16.msra.mxu0 0
    %3728 = vmatprep.mubr.bf16.mxu0 0
    %3729 = vmatmul.mubr.bf16.gmra.mrb[0].mxu0 %v3641
    %v3730 = vpop.f32.mrb[0].mxu0
    %v3731 = vadd.f32 0.0, %v3730
    %v3732 = vpop.f32.mrb[0].mxu0
    %v3733 = vadd.f32 0.0, %v3732
    %v3734 = vpop.f32.mrb[0].mxu0
    %v3735 = vpop.f32.mrb[0].mxu0
    %3736 = vdwg.mxu0
    %v3737 = vadd.f32 %v3626, %v3690
    %v3738 = vadd.f32 %v3627, %v3692
    %v3739 = vadd.f32 %v3628, %v3731
    %v3740 = vadd.f32 %v3629, %v3733
    %3741 = vrot.lane.b32.xlu0 %v2930, 127
    %v3742 = vpop.permute.xlu0 %3741
    %3743 = vrot.lane.b32.xlu0 %v2934, 127
    %v3744 = vpop.permute.xlu0 %3743
    %3745 = vrot.lane.b32.xlu0 %v2938, 127
    %v3746 = vpop.permute.xlu0 %3745
    %3747 = vrot.lane.b32.xlu0 %v2931, 127
    %v3748 = vpop.permute.xlu0 %3747
    %3749 = vrot.lane.b32.xlu0 %v2935, 127
    %v3750 = vpop.permute.xlu0 %3749
    %3751 = vrot.lane.b32.xlu0 %v2939, 127
    %v3752 = vpop.permute.xlu0 %3751
    %3753 = vrot.lane.b32.xlu0 %v2932, 127
    %v3754 = vpop.permute.xlu0 %3753
    %3755 = vrot.lane.b32.xlu0 %v2936, 127
    %v3756 = vpop.permute.xlu0 %3755
    %3757 = vrot.lane.b32.xlu0 %v2940, 127
    %v3758 = vpop.permute.xlu0 %3757
    %3759 = vrot.lane.b32.xlu0 %v2933, 127
    %v3760 = vpop.permute.xlu0 %3759
    %3761 = vrot.lane.b32.xlu0 %v2937, 127
    %v3762 = vpop.permute.xlu0 %3761
    %3763 = vrot.lane.b32.xlu0 %v2941, 127
    %v3764 = vpop.permute.xlu0 %3763
    %v3765 = vsel %vm823, %v3754, %v3760
    %v3766 = vsel %vm823, %v3756, %v3762
    %v3767 = vsel %vm823, %v3758, %v3764
    %v3768 = vsel %vm823, %v3748, %v3754
    %v3769 = vsel %vm823, %v3750, %v3756
    %v3770 = vsel %vm823, %v3752, %v3758
    %v3771 = vsel %vm823, %v3742, %v3748
    %v3772 = vsel %vm823, %v3744, %v3750
    %v3773 = vsel %vm823, %v3746, %v3752
    %v3774 = vsel %vm823, %v3760, %v3742
    %v3775 = vsel %vm823, %v3762, %v3744
    %v3776 = vsel %vm823, %v3764, %v3746
    %s3777 = scalar_lea.vmem %s12, 20
    %v3778 = vld [vmem:[%s3777] sm:$0xf]
    %v3779 = vpack.c.bf16 %v3772, %v3771
    %v3780 = vpack.c.bf16 %v3769, %v3768
    %v3781 = vpack.c.bf16 %v3766, %v3765
    %v3782 = vpack.c.bf16 %v3775, %v3774
    %v3783 = vpack.c.bf16 %v3773, %v3773
    %v3784 = vpack.c.bf16 %v3770, %v3770
    %v3785 = vpack.c.bf16 %v3767, %v3767
    %v3786 = vpack.c.bf16 %v3776, %v3776
    %v3788 = vsel %vm2987, %v3778, 0
    %v3791 = vsel %vm146, %v3783, 0
    %v3794 = vsel %vm146, %v3784, 0
    %v3797 = vsel %vm146, %v3785, 0
    %v3800 = vsel %vm146, %v3786, 0
    %3802 = vmatprep.subr.bf16.mxu0 %v3780
    %3803 = vmatpush1.bf16.msra.mxu0 %v3779
    %3804 = vmatprep.subr.bf16.mxu0 %v3794
    %3805 = vmatpush1.bf16.msra.mxu0 %v3791
    %3806 = vmatprep.subr.bf16.mxu0 0
    %3807 = vmatpush1.bf16.msra.mxu0 0
    %3808 = vmatprep.subr.bf16.mxu0 0
    %3809 = vmatpush1.bf16.msra.mxu0 0
    %3810 = vmatprep.subr.bf16.mxu0 0
    %3811 = vmatpush1.bf16.msra.mxu0 0
    %3812 = vmatprep.subr.bf16.mxu0 0
    %3813 = vmatpush1.bf16.msra.mxu0 0
    %3814 = vmatprep.subr.bf16.mxu0 0
    %3815 = vmatpush1.bf16.msra.mxu0 0
    %3816 = vmatprep.subr.bf16.mxu0 0
    %3817 = vmatpush1.bf16.msra.mxu0 0
    %3818 = vmatprep.subr.bf16.mxu0 0
    %3819 = vmatpush1.bf16.msra.mxu0 0
    %3820 = vmatprep.subr.bf16.mxu0 0
    %3821 = vmatpush1.bf16.msra.mxu0 0
    %3822 = vmatprep.subr.bf16.mxu0 0
    %3823 = vmatpush1.bf16.msra.mxu0 0
    %3824 = vmatprep.subr.bf16.mxu0 0
    %3825 = vmatpush1.bf16.msra.mxu0 0
    %3826 = vmatprep.subr.bf16.mxu0 0
    %3827 = vmatpush1.bf16.msra.mxu0 0
    %3828 = vmatprep.subr.bf16.mxu0 0
    %3829 = vmatpush1.bf16.msra.mxu0 0
    %3830 = vmatprep.subr.bf16.mxu0 0
    %3831 = vmatpush1.bf16.msra.mxu0 0
    %3832 = vmatprep.subr.bf16.mxu0 0
    %3833 = vmatpush1.bf16.msra.mxu0 0
    %3834 = vmatprep.mubr.bf16.mxu0 0
    %3835 = vmatmul.mubr.bf16.gmra.mrb[0].mxu0 %v3788
    %v3836 = vpop.f32.mrb[0].mxu0
    %v3837 = vadd.f32 0.0, %v3836
    %v3838 = vpop.f32.mrb[0].mxu0
    %v3839 = vadd.f32 0.0, %v3838
    %v3840 = vpop.f32.mrb[0].mxu0
    %v3841 = vpop.f32.mrb[0].mxu0
    %3842 = vdwg.mxu0
    %3843 = vmatprep.subr.bf16.mxu0 %v3782
    %3844 = vmatpush1.bf16.msra.mxu0 %v3781
    %3845 = vmatprep.subr.bf16.mxu0 %v3800
    %3846 = vmatpush1.bf16.msra.mxu0 %v3797
    %3847 = vmatprep.subr.bf16.mxu0 0
    %3848 = vmatpush1.bf16.msra.mxu0 0
    %3849 = vmatprep.subr.bf16.mxu0 0
    %3850 = vmatpush1.bf16.msra.mxu0 0
    %3851 = vmatprep.subr.bf16.mxu0 0
    %3852 = vmatpush1.bf16.msra.mxu0 0
    %3853 = vmatprep.subr.bf16.mxu0 0
    %3854 = vmatpush1.bf16.msra.mxu0 0
    %3855 = vmatprep.subr.bf16.mxu0 0
    %3856 = vmatpush1.bf16.msra.mxu0 0
    %3857 = vmatprep.subr.bf16.mxu0 0
    %3858 = vmatpush1.bf16.msra.mxu0 0
    %3859 = vmatprep.subr.bf16.mxu0 0
    %3860 = vmatpush1.bf16.msra.mxu0 0
    %3861 = vmatprep.subr.bf16.mxu0 0
    %3862 = vmatpush1.bf16.msra.mxu0 0
    %3863 = vmatprep.subr.bf16.mxu0 0
    %3864 = vmatpush1.bf16.msra.mxu0 0
    %3865 = vmatprep.subr.bf16.mxu0 0
    %3866 = vmatpush1.bf16.msra.mxu0 0
    %3867 = vmatprep.subr.bf16.mxu0 0
    %3868 = vmatpush1.bf16.msra.mxu0 0
    %3869 = vmatprep.subr.bf16.mxu0 0
    %3870 = vmatpush1.bf16.msra.mxu0 0
    %3871 = vmatprep.subr.bf16.mxu0 0
    %3872 = vmatpush1.bf16.msra.mxu0 0
    %3873 = vmatprep.subr.bf16.mxu0 0
    %3874 = vmatpush1.bf16.msra.mxu0 0
    %3875 = vmatprep.mubr.bf16.mxu0 0
    %3876 = vmatmul.mubr.bf16.gmra.mrb[0].mxu0 %v3788
    %v3877 = vpop.f32.mrb[0].mxu0
    %v3878 = vadd.f32 0.0, %v3877
    %v3879 = vpop.f32.mrb[0].mxu0
    %v3880 = vadd.f32 0.0, %v3879
    %v3881 = vpop.f32.mrb[0].mxu0
    %v3882 = vpop.f32.mrb[0].mxu0
    %3883 = vdwg.mxu0
    %v3884 = vld [vmem:[%s931] ss:$8 sm:$0xf]
    %v3886 = vlaneseq
    %v3887 = vshrl.u32 %v3886, 7
    %v3888 = vsub.s32 0, %v3887
    %v3889 = vrot.slane %v3884, %v3888
    %v3890 = vlaneseq
    %v3891 = vshrl.u32 %v3890, 7
    %v3892 = vsub.s32 1, %v3891
    %v3893 = vrot.slane %v3884, %v3892
    %v3894 = vlaneseq
    %v3895 = vshrl.u32 %v3894, 7
    %v3896 = vsub.s32 2, %v3895
    %v3897 = vrot.slane %v3884, %v3896
    %v3898 = vlaneseq
    %v3899 = vshrl.u32 %v3898, 7
    %v3900 = vsub.s32 3, %v3899
    %v3901 = vrot.slane %v3884, %v3900
    %v3906 = vmul.f32 %v3837, %v3889
    %v3907 = vmul.f32 %v3839, %v3893
    %v3908 = vmul.f32 %v3878, %v3897
    %v3909 = vmul.f32 %v3880, %v3901
    %v3910 = vadd.f32 %v3737, %v3906
    %v3911 = vadd.f32 %v3738, %v3907
    %v3912 = vadd.f32 %v3739, %v3908
    %v3913 = vadd.f32 %v3740, %v3909
    %3914 = vrot.lane.b32.xlu0 %v2930, 113
    %v3915 = vpop.permute.xlu0 %3914
    %3916 = vrot.lane.b32.xlu0 %v2934, 113
    %v3917 = vpop.permute.xlu0 %3916
    %3918 = vrot.lane.b32.xlu0 %v2938, 113
    %v3919 = vpop.permute.xlu0 %3918
    %3920 = vrot.lane.b32.xlu0 %v2931, 113
    %v3921 = vpop.permute.xlu0 %3920
    %3922 = vrot.lane.b32.xlu0 %v2935, 113
    %v3923 = vpop.permute.xlu0 %3922
    %3924 = vrot.lane.b32.xlu0 %v2939, 113
    %v3925 = vpop.permute.xlu0 %3924
    %3926 = vrot.lane.b32.xlu0 %v2932, 113
    %v3927 = vpop.permute.xlu0 %3926
    %3928 = vrot.lane.b32.xlu0 %v2936, 113
    %v3929 = vpop.permute.xlu0 %3928
    %3930 = vrot.lane.b32.xlu0 %v2940, 113
    %v3931 = vpop.permute.xlu0 %3930
    %3932 = vrot.lane.b32.xlu0 %v2933, 113
    %v3933 = vpop.permute.xlu0 %3932
    %3934 = vrot.lane.b32.xlu0 %v2937, 113
    %v3935 = vpop.permute.xlu0 %3934
    %3936 = vrot.lane.b32.xlu0 %v2941, 113
    %v3937 = vpop.permute.xlu0 %3936
    %v3938 = vsel %vm970, %v3927, %v3933
    %v3939 = vsel %vm970, %v3929, %v3935
    %v3940 = vsel %vm970, %v3931, %v3937
    %v3941 = vsel %vm970, %v3921, %v3927
    %v3942 = vsel %vm970, %v3923, %v3929
    %v3943 = vsel %vm970, %v3925, %v3931
    %v3944 = vsel %vm970, %v3915, %v3921
    %v3945 = vsel %vm970, %v3917, %v3923
    %v3946 = vsel %vm970, %v3919, %v3925
    %v3947 = vsel %vm970, %v3933, %v3915
    %v3948 = vsel %vm970, %v3935, %v3917
    %v3949 = vsel %vm970, %v3937, %v3919
    %s3950 = scalar_lea.vmem %s12, 24
    %v3951 = vld [vmem:[%s3950] sm:$0xf]
    %v3952 = vpack.c.bf16 %v3945, %v3944
    %v3953 = vpack.c.bf16 %v3942, %v3941
    %v3954 = vpack.c.bf16 %v3939, %v3938
    %v3955 = vpack.c.bf16 %v3948, %v3947
    %v3956 = vpack.c.bf16 %v3946, %v3946
    %v3957 = vpack.c.bf16 %v3943, %v3943
    %v3958 = vpack.c.bf16 %v3940, %v3940
    %v3959 = vpack.c.bf16 %v3949, %v3949
    %v3961 = vsel %vm2987, %v3951, 0
    %v3964 = vsel %vm146, %v3956, 0
    %v3967 = vsel %vm146, %v3957, 0
    %v3970 = vsel %vm146, %v3958, 0
    %v3973 = vsel %vm146, %v3959, 0
    %3975 = vmatprep.subr.bf16.mxu0 %v3953
    %3976 = vmatpush1.bf16.msra.mxu0 %v3952
    %3977 = vmatprep.subr.bf16.mxu0 %v3967
    %3978 = vmatpush1.bf16.msra.mxu0 %v3964
    %3979 = vmatprep.subr.bf16.mxu0 0
    %3980 = vmatpush1.bf16.msra.mxu0 0
    %3981 = vmatprep.subr.bf16.mxu0 0
    %3982 = vmatpush1.bf16.msra.mxu0 0
    %3983 = vmatprep.subr.bf16.mxu0 0
    %3984 = vmatpush1.bf16.msra.mxu0 0
    %3985 = vmatprep.subr.bf16.mxu0 0
    %3986 = vmatpush1.bf16.msra.mxu0 0
    %3987 = vmatprep.subr.bf16.mxu0 0
    %3988 = vmatpush1.bf16.msra.mxu0 0
    %3989 = vmatprep.subr.bf16.mxu0 0
    %3990 = vmatpush1.bf16.msra.mxu0 0
    %3991 = vmatprep.subr.bf16.mxu0 0
    %3992 = vmatpush1.bf16.msra.mxu0 0
    %3993 = vmatprep.subr.bf16.mxu0 0
    %3994 = vmatpush1.bf16.msra.mxu0 0
    %3995 = vmatprep.subr.bf16.mxu0 0
    %3996 = vmatpush1.bf16.msra.mxu0 0
    %3997 = vmatprep.subr.bf16.mxu0 0
    %3998 = vmatpush1.bf16.msra.mxu0 0
    %3999 = vmatprep.subr.bf16.mxu0 0
    %4000 = vmatpush1.bf16.msra.mxu0 0
    %4001 = vmatprep.subr.bf16.mxu0 0
    %4002 = vmatpush1.bf16.msra.mxu0 0
    %4003 = vmatprep.subr.bf16.mxu0 0
    %4004 = vmatpush1.bf16.msra.mxu0 0
    %4005 = vmatprep.subr.bf16.mxu0 0
    %4006 = vmatpush1.bf16.msra.mxu0 0
    %4007 = vmatprep.mubr.bf16.mxu0 0
    %4008 = vmatmul.mubr.bf16.gmra.mrb[0].mxu0 %v3961
    %v4009 = vpop.f32.mrb[0].mxu0
    %v4010 = vadd.f32 0.0, %v4009
    %v4011 = vpop.f32.mrb[0].mxu0
    %v4012 = vadd.f32 0.0, %v4011
    %v4013 = vpop.f32.mrb[0].mxu0
    %v4014 = vpop.f32.mrb[0].mxu0
    %4015 = vdwg.mxu0
    %4016 = vmatprep.subr.bf16.mxu0 %v3955
    %4017 = vmatpush1.bf16.msra.mxu0 %v3954
    %4018 = vmatprep.subr.bf16.mxu0 %v3973
    %4019 = vmatpush1.bf16.msra.mxu0 %v3970
    %4020 = vmatprep.subr.bf16.mxu0 0
    %4021 = vmatpush1.bf16.msra.mxu0 0
    %4022 = vmatprep.subr.bf16.mxu0 0
    %4023 = vmatpush1.bf16.msra.mxu0 0
    %4024 = vmatprep.subr.bf16.mxu0 0
    %4025 = vmatpush1.bf16.msra.mxu0 0
    %4026 = vmatprep.subr.bf16.mxu0 0
    %4027 = vmatpush1.bf16.msra.mxu0 0
    %4028 = vmatprep.subr.bf16.mxu0 0
    %4029 = vmatpush1.bf16.msra.mxu0 0
    %4030 = vmatprep.subr.bf16.mxu0 0
    %4031 = vmatpush1.bf16.msra.mxu0 0
    %4032 = vmatprep.subr.bf16.mxu0 0
    %4033 = vmatpush1.bf16.msra.mxu0 0
    %4034 = vmatprep.subr.bf16.mxu0 0
    %4035 = vmatpush1.bf16.msra.mxu0 0
    %4036 = vmatprep.subr.bf16.mxu0 0
    %4037 = vmatpush1.bf16.msra.mxu0 0
    %4038 = vmatprep.subr.bf16.mxu0 0
    %4039 = vmatpush1.bf16.msra.mxu0 0
    %4040 = vmatprep.subr.bf16.mxu0 0
    %4041 = vmatpush1.bf16.msra.mxu0 0
    %4042 = vmatprep.subr.bf16.mxu0 0
    %4043 = vmatpush1.bf16.msra.mxu0 0
    %4044 = vmatprep.subr.bf16.mxu0 0
    %4045 = vmatpush1.bf16.msra.mxu0 0
    %4046 = vmatprep.subr.bf16.mxu0 0
    %4047 = vmatpush1.bf16.msra.mxu0 0
    %4048 = vmatprep.mubr.bf16.mxu0 0
    %4049 = vmatmul.mubr.bf16.gmra.mrb[0].mxu0 %v3961
    %v4050 = vpop.f32.mrb[0].mxu0
    %v4051 = vadd.f32 0.0, %v4050
    %v4052 = vpop.f32.mrb[0].mxu0
    %v4053 = vadd.f32 0.0, %v4052
    %v4054 = vpop.f32.mrb[0].mxu0
    %v4055 = vpop.f32.mrb[0].mxu0
    %4056 = vdwg.mxu0
    %v4057 = vld [vmem:[%s1078] ss:$8 sm:$0xf]
    %v4059 = vlaneseq
    %v4060 = vshrl.u32 %v4059, 7
    %v4061 = vsub.s32 0, %v4060
    %v4062 = vrot.slane %v4057, %v4061
    %v4063 = vlaneseq
    %v4064 = vshrl.u32 %v4063, 7
    %v4065 = vsub.s32 1, %v4064
    %v4066 = vrot.slane %v4057, %v4065
    %v4067 = vlaneseq
    %v4068 = vshrl.u32 %v4067, 7
    %v4069 = vsub.s32 2, %v4068
    %v4070 = vrot.slane %v4057, %v4069
    %v4071 = vlaneseq
    %v4072 = vshrl.u32 %v4071, 7
    %v4073 = vsub.s32 3, %v4072
    %v4074 = vrot.slane %v4057, %v4073
    %v4079 = vmul.f32 %v4010, %v4062
    %v4080 = vmul.f32 %v4012, %v4066
    %v4081 = vmul.f32 %v4051, %v4070
    %v4082 = vmul.f32 %v4053, %v4074
    %v4083 = vadd.f32 %v3910, %v4079
    %v4084 = vadd.f32 %v3911, %v4080
    %v4085 = vadd.f32 %v3912, %v4081
    %v4086 = vadd.f32 %v3913, %v4082
    %4087 = vrot.lane.b32.xlu0 %v2930, 112
    %v4088 = vpop.permute.xlu0 %4087
    %4089 = vrot.lane.b32.xlu0 %v2934, 112
    %v4090 = vpop.permute.xlu0 %4089
    %4091 = vrot.lane.b32.xlu0 %v2938, 112
    %v4092 = vpop.permute.xlu0 %4091
    %4093 = vrot.lane.b32.xlu0 %v2931, 112
    %v4094 = vpop.permute.xlu0 %4093
    %4095 = vrot.lane.b32.xlu0 %v2935, 112
    %v4096 = vpop.permute.xlu0 %4095
    %4097 = vrot.lane.b32.xlu0 %v2939, 112
    %v4098 = vpop.permute.xlu0 %4097
    %4099 = vrot.lane.b32.xlu0 %v2932, 112
    %v4100 = vpop.permute.xlu0 %4099
    %4101 = vrot.lane.b32.xlu0 %v2936, 112
    %v4102 = vpop.permute.xlu0 %4101
    %4103 = vrot.lane.b32.xlu0 %v2940, 112
    %v4104 = vpop.permute.xlu0 %4103
    %4105 = vrot.lane.b32.xlu0 %v2933, 112
    %v4106 = vpop.permute.xlu0 %4105
    %4107 = vrot.lane.b32.xlu0 %v2937, 112
    %v4108 = vpop.permute.xlu0 %4107
    %4109 = vrot.lane.b32.xlu0 %v2941, 112
    %v4110 = vpop.permute.xlu0 %4109
    %v4111 = vsel %vm1117, %v4100, %v4106
    %v4112 = vsel %vm1117, %v4102, %v4108
    %v4113 = vsel %vm1117, %v4104, %v4110
    %v4114 = vsel %vm1117, %v4094, %v4100
    %v4115 = vsel %vm1117, %v4096, %v4102
    %v4116 = vsel %vm1117, %v4098, %v4104
    %v4117 = vsel %vm1117, %v4088, %v4094
    %v4118 = vsel %vm1117, %v4090, %v4096
    %v4119 = vsel %vm1117, %v4092, %v4098
    %v4120 = vsel %vm1117, %v4106, %v4088
    %v4121 = vsel %vm1117, %v4108, %v4090
    %v4122 = vsel %vm1117, %v4110, %v4092
    %s4123 = scalar_lea.vmem %s12, 28
    %v4124 = vld [vmem:[%s4123] sm:$0xf]
    %v4125 = vpack.c.bf16 %v4118, %v4117
    %v4126 = vpack.c.bf16 %v4115, %v4114
    %v4127 = vpack.c.bf16 %v4112, %v4111
    %v4128 = vpack.c.bf16 %v4121, %v4120
    %v4129 = vpack.c.bf16 %v4119, %v4119
    %v4130 = vpack.c.bf16 %v4116, %v4116
    %v4131 = vpack.c.bf16 %v4113, %v4113
    %v4132 = vpack.c.bf16 %v4122, %v4122
    %v4134 = vsel %vm2987, %v4124, 0
    %v4137 = vsel %vm146, %v4129, 0
    %v4140 = vsel %vm146, %v4130, 0
    %v4143 = vsel %vm146, %v4131, 0
    %v4146 = vsel %vm146, %v4132, 0
    %4148 = vmatprep.subr.bf16.mxu0 %v4126
    %4149 = vmatpush1.bf16.msra.mxu0 %v4125
    %4150 = vmatprep.subr.bf16.mxu0 %v4140
    %4151 = vmatpush1.bf16.msra.mxu0 %v4137
    %4152 = vmatprep.subr.bf16.mxu0 0
    %4153 = vmatpush1.bf16.msra.mxu0 0
    %4154 = vmatprep.subr.bf16.mxu0 0
    %4155 = vmatpush1.bf16.msra.mxu0 0
    %4156 = vmatprep.subr.bf16.mxu0 0
    %4157 = vmatpush1.bf16.msra.mxu0 0
    %4158 = vmatprep.subr.bf16.mxu0 0
    %4159 = vmatpush1.bf16.msra.mxu0 0
    %4160 = vmatprep.subr.bf16.mxu0 0
    %4161 = vmatpush1.bf16.msra.mxu0 0
    %4162 = vmatprep.subr.bf16.mxu0 0
    %4163 = vmatpush1.bf16.msra.mxu0 0
    %4164 = vmatprep.subr.bf16.mxu0 0
    %4165 = vmatpush1.bf16.msra.mxu0 0
    %4166 = vmatprep.subr.bf16.mxu0 0
    %4167 = vmatpush1.bf16.msra.mxu0 0
    %4168 = vmatprep.subr.bf16.mxu0 0
    %4169 = vmatpush1.bf16.msra.mxu0 0
    %4170 = vmatprep.subr.bf16.mxu0 0
    %4171 = vmatpush1.bf16.msra.mxu0 0
    %4172 = vmatprep.subr.bf16.mxu0 0
    %4173 = vmatpush1.bf16.msra.mxu0 0
    %4174 = vmatprep.subr.bf16.mxu0 0
    %4175 = vmatpush1.bf16.msra.mxu0 0
    %4176 = vmatprep.subr.bf16.mxu0 0
    %4177 = vmatpush1.bf16.msra.mxu0 0
    %4178 = vmatprep.subr.bf16.mxu0 0
    %4179 = vmatpush1.bf16.msra.mxu0 0
    %4180 = vmatprep.mubr.bf16.mxu0 0
    %4181 = vmatmul.mubr.bf16.gmra.mrb[0].mxu0 %v4134
    %v4182 = vpop.f32.mrb[0].mxu0
    %v4183 = vadd.f32 0.0, %v4182
    %v4184 = vpop.f32.mrb[0].mxu0
    %v4185 = vadd.f32 0.0, %v4184
    %v4186 = vpop.f32.mrb[0].mxu0
    %v4187 = vpop.f32.mrb[0].mxu0
    %4188 = vdwg.mxu0
    %4189 = vmatprep.subr.bf16.mxu0 %v4128
    %4190 = vmatpush1.bf16.msra.mxu0 %v4127
    %4191 = vmatprep.subr.bf16.mxu0 %v4146
    %4192 = vmatpush1.bf16.msra.mxu0 %v4143
    %4193 = vmatprep.subr.bf16.mxu0 0
    %4194 = vmatpush1.bf16.msra.mxu0 0
    %4195 = vmatprep.subr.bf16.mxu0 0
    %4196 = vmatpush1.bf16.msra.mxu0 0
    %4197 = vmatprep.subr.bf16.mxu0 0
    %4198 = vmatpush1.bf16.msra.mxu0 0
    %4199 = vmatprep.subr.bf16.mxu0 0
    %4200 = vmatpush1.bf16.msra.mxu0 0
    %4201 = vmatprep.subr.bf16.mxu0 0
    %4202 = vmatpush1.bf16.msra.mxu0 0
    %4203 = vmatprep.subr.bf16.mxu0 0
    %4204 = vmatpush1.bf16.msra.mxu0 0
    %4205 = vmatprep.subr.bf16.mxu0 0
    %4206 = vmatpush1.bf16.msra.mxu0 0
    %4207 = vmatprep.subr.bf16.mxu0 0
    %4208 = vmatpush1.bf16.msra.mxu0 0
    %4209 = vmatprep.subr.bf16.mxu0 0
    %4210 = vmatpush1.bf16.msra.mxu0 0
    %4211 = vmatprep.subr.bf16.mxu0 0
    %4212 = vmatpush1.bf16.msra.mxu0 0
    %4213 = vmatprep.subr.bf16.mxu0 0
    %4214 = vmatpush1.bf16.msra.mxu0 0
    %4215 = vmatprep.subr.bf16.mxu0 0
    %4216 = vmatpush1.bf16.msra.mxu0 0
    %4217 = vmatprep.subr.bf16.mxu0 0
    %4218 = vmatpush1.bf16.msra.mxu0 0
    %4219 = vmatprep.subr.bf16.mxu0 0
    %4220 = vmatpush1.bf16.msra.mxu0 0
    %4221 = vmatprep.mubr.bf16.mxu0 0
    %4222 = vmatmul.mubr.bf16.gmra.mrb[0].mxu0 %v4134
    %v4223 = vpop.f32.mrb[0].mxu0
    %v4224 = vadd.f32 0.0, %v4223
    %v4225 = vpop.f32.mrb[0].mxu0
    %v4226 = vadd.f32 0.0, %v4225
    %v4227 = vpop.f32.mrb[0].mxu0
    %v4228 = vpop.f32.mrb[0].mxu0
    %4229 = vdwg.mxu0
    %v4230 = vld [vmem:[%s1225] ss:$8 sm:$0xf]
    %v4232 = vlaneseq
    %v4233 = vshrl.u32 %v4232, 7
    %v4234 = vsub.s32 0, %v4233
    %v4235 = vrot.slane %v4230, %v4234
    %v4236 = vlaneseq
    %v4237 = vshrl.u32 %v4236, 7
    %v4238 = vsub.s32 1, %v4237
    %v4239 = vrot.slane %v4230, %v4238
    %v4240 = vlaneseq
    %v4241 = vshrl.u32 %v4240, 7
    %v4242 = vsub.s32 2, %v4241
    %v4243 = vrot.slane %v4230, %v4242
    %v4244 = vlaneseq
    %v4245 = vshrl.u32 %v4244, 7
    %v4246 = vsub.s32 3, %v4245
    %v4247 = vrot.slane %v4230, %v4246
    %v4252 = vmul.f32 %v4183, %v4235
    %v4253 = vmul.f32 %v4185, %v4239
    %v4254 = vmul.f32 %v4224, %v4243
    %v4255 = vmul.f32 %v4226, %v4247
    %v4256 = vadd.f32 %v4083, %v4252
    %v4257 = vadd.f32 %v4084, %v4253
    %v4258 = vadd.f32 %v4085, %v4254
    %v4259 = vadd.f32 %v4086, %v4255
    %4260 = vrot.lane.b32.xlu0 %v2930, 111
    %v4261 = vpop.permute.xlu0 %4260
    %4262 = vrot.lane.b32.xlu0 %v2934, 111
    %v4263 = vpop.permute.xlu0 %4262
    %4264 = vrot.lane.b32.xlu0 %v2938, 111
    %v4265 = vpop.permute.xlu0 %4264
    %4266 = vrot.lane.b32.xlu0 %v2931, 111
    %v4267 = vpop.permute.xlu0 %4266
    %4268 = vrot.lane.b32.xlu0 %v2935, 111
    %v4269 = vpop.permute.xlu0 %4268
    %4270 = vrot.lane.b32.xlu0 %v2939, 111
    %v4271 = vpop.permute.xlu0 %4270
    %4272 = vrot.lane.b32.xlu0 %v2932, 111
    %v4273 = vpop.permute.xlu0 %4272
    %4274 = vrot.lane.b32.xlu0 %v2936, 111
    %v4275 = vpop.permute.xlu0 %4274
    %4276 = vrot.lane.b32.xlu0 %v2940, 111
    %v4277 = vpop.permute.xlu0 %4276
    %4278 = vrot.lane.b32.xlu0 %v2933, 111
    %v4279 = vpop.permute.xlu0 %4278
    %4280 = vrot.lane.b32.xlu0 %v2937, 111
    %v4281 = vpop.permute.xlu0 %4280
    %4282 = vrot.lane.b32.xlu0 %v2941, 111
    %v4283 = vpop.permute.xlu0 %4282
    %v4284 = vsel %vm1264, %v4273, %v4279
    %v4285 = vsel %vm1264, %v4275, %v4281
    %v4286 = vsel %vm1264, %v4277, %v4283
    %v4287 = vsel %vm1264, %v4267, %v4273
    %v4288 = vsel %vm1264, %v4269, %v4275
    %v4289 = vsel %vm1264, %v4271, %v4277
    %v4290 = vsel %vm1264, %v4261, %v4267
    %v4291 = vsel %vm1264, %v4263, %v4269
    %v4292 = vsel %vm1264, %v4265, %v4271
    %v4293 = vsel %vm1264, %v4279, %v4261
    %v4294 = vsel %vm1264, %v4281, %v4263
    %v4295 = vsel %vm1264, %v4283, %v4265
    %s4296 = scalar_lea.vmem %s12, 32
    %v4297 = vld [vmem:[%s4296] sm:$0xf]
    %v4298 = vpack.c.bf16 %v4291, %v4290
    %v4299 = vpack.c.bf16 %v4288, %v4287
    %v4300 = vpack.c.bf16 %v4285, %v4284
    %v4301 = vpack.c.bf16 %v4294, %v4293
    %v4302 = vpack.c.bf16 %v4292, %v4292
    %v4303 = vpack.c.bf16 %v4289, %v4289
    %v4304 = vpack.c.bf16 %v4286, %v4286
    %v4305 = vpack.c.bf16 %v4295, %v4295
    %v4307 = vsel %vm2987, %v4297, 0
    %v4310 = vsel %vm146, %v4302, 0
    %v4313 = vsel %vm146, %v4303, 0
    %v4316 = vsel %vm146, %v4304, 0
    %v4319 = vsel %vm146, %v4305, 0
    %4321 = vmatprep.subr.bf16.mxu0 %v4299
    %4322 = vmatpush1.bf16.msra.mxu0 %v4298
    %4323 = vmatprep.subr.bf16.mxu0 %v4313
    %4324 = vmatpush1.bf16.msra.mxu0 %v4310
    %4325 = vmatprep.subr.bf16.mxu0 0
    %4326 = vmatpush1.bf16.msra.mxu0 0
    %4327 = vmatprep.subr.bf16.mxu0 0
    %4328 = vmatpush1.bf16.msra.mxu0 0
    %4329 = vmatprep.subr.bf16.mxu0 0
    %4330 = vmatpush1.bf16.msra.mxu0 0
    %4331 = vmatprep.subr.bf16.mxu0 0
    %4332 = vmatpush1.bf16.msra.mxu0 0
    %4333 = vmatprep.subr.bf16.mxu0 0
    %4334 = vmatpush1.bf16.msra.mxu0 0
    %4335 = vmatprep.subr.bf16.mxu0 0
    %4336 = vmatpush1.bf16.msra.mxu0 0
    %4337 = vmatprep.subr.bf16.mxu0 0
    %4338 = vmatpush1.bf16.msra.mxu0 0
    %4339 = vmatprep.subr.bf16.mxu0 0
    %4340 = vmatpush1.bf16.msra.mxu0 0
    %4341 = vmatprep.subr.bf16.mxu0 0
    %4342 = vmatpush1.bf16.msra.mxu0 0
    %4343 = vmatprep.subr.bf16.mxu0 0
    %4344 = vmatpush1.bf16.msra.mxu0 0
    %4345 = vmatprep.subr.bf16.mxu0 0
    %4346 = vmatpush1.bf16.msra.mxu0 0
    %4347 = vmatprep.subr.bf16.mxu0 0
    %4348 = vmatpush1.bf16.msra.mxu0 0
    %4349 = vmatprep.subr.bf16.mxu0 0
    %4350 = vmatpush1.bf16.msra.mxu0 0
    %4351 = vmatprep.subr.bf16.mxu0 0
    %4352 = vmatpush1.bf16.msra.mxu0 0
    %4353 = vmatprep.mubr.bf16.mxu0 0
    %4354 = vmatmul.mubr.bf16.gmra.mrb[0].mxu0 %v4307
    %v4355 = vpop.f32.mrb[0].mxu0
    %v4356 = vadd.f32 0.0, %v4355
    %v4357 = vpop.f32.mrb[0].mxu0
    %v4358 = vadd.f32 0.0, %v4357
    %v4359 = vpop.f32.mrb[0].mxu0
    %v4360 = vpop.f32.mrb[0].mxu0
    %4361 = vdwg.mxu0
    %4362 = vmatprep.subr.bf16.mxu0 %v4301
    %4363 = vmatpush1.bf16.msra.mxu0 %v4300
    %4364 = vmatprep.subr.bf16.mxu0 %v4319
    %4365 = vmatpush1.bf16.msra.mxu0 %v4316
    %4366 = vmatprep.subr.bf16.mxu0 0
    %4367 = vmatpush1.bf16.msra.mxu0 0
    %4368 = vmatprep.subr.bf16.mxu0 0
    %4369 = vmatpush1.bf16.msra.mxu0 0
    %4370 = vmatprep.subr.bf16.mxu0 0
    %4371 = vmatpush1.bf16.msra.mxu0 0
    %4372 = vmatprep.subr.bf16.mxu0 0
    %4373 = vmatpush1.bf16.msra.mxu0 0
    %4374 = vmatprep.subr.bf16.mxu0 0
    %4375 = vmatpush1.bf16.msra.mxu0 0
    %4376 = vmatprep.subr.bf16.mxu0 0
    %4377 = vmatpush1.bf16.msra.mxu0 0
    %4378 = vmatprep.subr.bf16.mxu0 0
    %4379 = vmatpush1.bf16.msra.mxu0 0
    %4380 = vmatprep.subr.bf16.mxu0 0
    %4381 = vmatpush1.bf16.msra.mxu0 0
    %4382 = vmatprep.subr.bf16.mxu0 0
    %4383 = vmatpush1.bf16.msra.mxu0 0
    %4384 = vmatprep.subr.bf16.mxu0 0
    %4385 = vmatpush1.bf16.msra.mxu0 0
    %4386 = vmatprep.subr.bf16.mxu0 0
    %4387 = vmatpush1.bf16.msra.mxu0 0
    %4388 = vmatprep.subr.bf16.mxu0 0
    %4389 = vmatpush1.bf16.msra.mxu0 0
    %4390 = vmatprep.subr.bf16.mxu0 0
    %4391 = vmatpush1.bf16.msra.mxu0 0
    %4392 = vmatprep.subr.bf16.mxu0 0
    %4393 = vmatpush1.bf16.msra.mxu0 0
    %4394 = vmatprep.mubr.bf16.mxu0 0
    %4395 = vmatmul.mubr.bf16.gmra.mrb[0].mxu0 %v4307
    %v4396 = vpop.f32.mrb[0].mxu0
    %v4397 = vadd.f32 0.0, %v4396
    %v4398 = vpop.f32.mrb[0].mxu0
    %v4399 = vadd.f32 0.0, %v4398
    %v4400 = vpop.f32.mrb[0].mxu0
    %v4401 = vpop.f32.mrb[0].mxu0
    %4402 = vdwg.mxu0
    %v4403 = vld [vmem:[%s1372] ss:$8 sm:$0xf]
    %v4405 = vlaneseq
    %v4406 = vshrl.u32 %v4405, 7
    %v4407 = vsub.s32 0, %v4406
    %v4408 = vrot.slane %v4403, %v4407
    %v4409 = vlaneseq
    %v4410 = vshrl.u32 %v4409, 7
    %v4411 = vsub.s32 1, %v4410
    %v4412 = vrot.slane %v4403, %v4411
    %v4413 = vlaneseq
    %v4414 = vshrl.u32 %v4413, 7
    %v4415 = vsub.s32 2, %v4414
    %v4416 = vrot.slane %v4403, %v4415
    %v4417 = vlaneseq
    %v4418 = vshrl.u32 %v4417, 7
    %v4419 = vsub.s32 3, %v4418
    %v4420 = vrot.slane %v4403, %v4419
    %v4425 = vmul.f32 %v4356, %v4408
    %v4426 = vmul.f32 %v4358, %v4412
    %v4427 = vmul.f32 %v4397, %v4416
    %v4428 = vmul.f32 %v4399, %v4420
    %v4429 = vadd.f32 %v4256, %v4425
    %v4430 = vadd.f32 %v4257, %v4426
    %v4431 = vadd.f32 %v4258, %v4427
    %v4432 = vadd.f32 %v4259, %v4428
    %4434 = vset.pattern.permute.xlu0 0
    %4435 = vperm.xlu0 %4434, %v2791
    %v4436 = vpop.permute.xlu0 %4435
    %v4438 = vadd.f32 %v4429, %v4436
    %v4439 = vadd.f32 %v4430, %v4436
    %v4440 = vadd.f32 %v4431, %v4436
    %v4441 = vadd.f32 %v4432, %v4436
    %4442 = vst [vmem:[#allocation3] sm:$0xff] %v4438
    %4443 = vst [vmem:[#allocation3 + $0x8] sm:$0xff] %v4439
    %s4444 = scalar_lea.vmem [#allocation3], 16
    %4445 = vst [vmem:[%s4444] sm:$0xff] %v4440
    %4446 = vst [vmem:[%s4444 + $0x8] sm:$0xff] %v4441
    // Predicated region
    $region58: #{tpu_custom_call.1} parent=1 // pred_check
      _
    $region59: #{tpu_custom_call.1} parent=1 // pred_check_branch
      %4448 = sbr.rel (0) target = $region61
    $region60: #{tpu_custom_call.1} parent=1 // pred_region
      %s4450 = ssub.s32 512, 512
      %4451 = vsyncadd [#allocation4], %s4450
      %s4452 = sshll.u32 [#allocation3], 4
      %s4453 = int_to_ptr.vmem [resolvable:$true] %s4452
      %4458 = dma.vmem_to_hbm [thread:$0]  %s4453, 512, %s14, [#allocation4], 256, 256, 16
    $region61: #{tpu_custom_call.1} parent=1 // pred_fallthru
      _
    // Predicated region
    $region62: #{tpu_custom_call.1} parent=1 // pred_check
      _
    $region63: #{tpu_custom_call.1} parent=1 // pred_check_branch
      %4460 = sbr.rel (0) target = $region65
    $region64: #{tpu_custom_call.1} parent=1 // pred_region
      %4461 = dma.done [#allocation4], 512
    $region65: #{tpu_custom_call.1} parent=1 // pred_fallthru
      _
    %4462 = vsyncpa [#allocation4], 1

</llo_original>
